<compile_context>
chip_gen: v7x
topology: tpu7x:2x2x1
jax: 0.10.0
libtpu: 0.0.40
codegen_flags: <defaults>
</compile_context>

<pallas_src>
import functools

import jax
import jax.numpy as jnp
from jax.experimental import pallas as pl
from jax.experimental.pallas import tpu as pltpu


# -------------------------- packed per-layer vector rows ---------------------
VEC_B_LOC, VEC_B_Q, VEC_B_K, VEC_B_V, VEC_B_O, VEC_B_FF2 = 0, 1, 2, 3, 4, 5
VEC_B_FF1_A, VEC_B_FF1_B = 6, 7
VEC_LN1L_G, VEC_LN1L_B, VEC_LN1A_G, VEC_LN1A_B, VEC_LN2_G, VEC_LN2_B = 8, 9, 10, 11, 12, 13
N_VEC_ROWS = 14


def _layer_norm(x, gamma, beta, eps=1e-5):
    mu = jnp.mean(x, axis=-1, keepdims=True)
    var = jnp.mean((x - mu) ** 2, axis=-1, keepdims=True)
    return (x - mu) * jax.lax.rsqrt(var + eps) * gamma + beta


# ----------------------------------------------------------------------------
# Fused forward kernel: encoder -> L x GPSLayer -> graph head, for one batch tile
# ----------------------------------------------------------------------------
def gps_forward_kernel(x_ref, adj_ref, mask_ref,
                       enc_w_ref, enc_b_ref,
                       wmat_ref, wff2_ref, vec_ref,
                       head_w_ref, head_b_ref,
                       o_ref, *, num_layers, num_heads):
    bt, n, dim_in = x_ref.shape
    d = enc_w_ref.shape[1]
    dh = d // num_heads
    rows = bt * n
    scale = 1.0 / (dh ** 0.5)

    adj = adj_ref[...].astype(jnp.float32)                      # [BT, N, N]
    key_mask = mask_ref[...].astype(jnp.float32)                # [BT, 1, N]
    key_bias = (key_mask - 1.0) * 1e9                           # 0 valid / -1e9 pad

    # ---- FeatureEncoder: linear node encoder (BatchNorm at init is identity) ----
    x = x_ref[...].astype(jnp.float32).reshape(rows, dim_in)
    h = jnp.dot(x, enc_w_ref[...].astype(jnp.float32),
                preferred_element_type=jnp.float32) + enc_b_ref[...].astype(jnp.float32)

    # ---- GPS layers (static unroll; packed weights stay resident in VMEM) ----
    for l in range(num_layers):
        wl = wmat_ref[l].astype(jnp.float32)                    # [D, 7D]
        w_ff2 = wff2_ref[l].astype(jnp.float32)                 # [2D, D]
        vec = vec_ref[l].astype(jnp.float32)                    # [14, D]

        # one fused matmul: h @ [w_loc | w_q | w_k | w_v]  -> [rows, 4D]
        fused = jnp.dot(h, wl[:, :4 * d], preferred_element_type=jnp.float32)
        hw_loc = fused[:, 0 * d:1 * d]
        q = (fused[:, 1 * d:2 * d] + vec[VEC_B_Q:VEC_B_Q + 1]).reshape(bt, n, d)
        k = (fused[:, 2 * d:3 * d] + vec[VEC_B_K:VEC_B_K + 1]).reshape(bt, n, d)
        v = (fused[:, 3 * d:4 * d] + vec[VEC_B_V:VEC_B_V + 1]).reshape(bt, n, d)

        # local branch: GCN conv on normalized dense adjacency, residual + LN
        h_loc = jnp.einsum('bij,bjd->bid', adj, hw_loc.reshape(bt, n, d),
                           preferred_element_type=jnp.float32).reshape(rows, d)
        h_loc = h_loc + vec[VEC_B_LOC:VEC_B_LOC + 1]
        h_loc = _layer_norm(h + h_loc,
                            vec[VEC_LN1L_G:VEC_LN1L_G + 1], vec[VEC_LN1L_B:VEC_LN1L_B + 1])

        # global branch: multi-head self-attention (no explicit transposes),
        # heads concatenated then projected with a single K=D matmul.
        ctx = []
        for hh in range(num_heads):
            sl = slice(hh * dh, (hh + 1) * dh)
            s = jnp.einsum('bqd,bkd->bqk', q[..., sl], k[..., sl],
                           preferred_element_type=jnp.float32) * scale
            s = s + key_bias
            p = jax.nn.softmax(s, axis=-1)
            ctx.append(jnp.einsum('bqk,bkd->bqd', p, v[..., sl],
                                  preferred_element_type=jnp.float32))
        ctx = jnp.concatenate(ctx, axis=-1).reshape(rows, d)
        h_attn = jnp.dot(ctx, wl[:, 4 * d:5 * d],
                         preferred_element_type=jnp.float32) + vec[VEC_B_O:VEC_B_O + 1]
        h_attn = _layer_norm(h + h_attn,
                             vec[VEC_LN1A_G:VEC_LN1A_G + 1], vec[VEC_LN1A_B:VEC_LN1A_B + 1])

        # combine branches + feed-forward block (residual + LN)
        h2 = h_loc + h_attn
        b_ff1 = jnp.concatenate([vec[VEC_B_FF1_A:VEC_B_FF1_A + 1],
                                 vec[VEC_B_FF1_B:VEC_B_FF1_B + 1]], axis=-1)   # [1, 2D]
        ff = jnp.dot(h2, wl[:, 5 * d:7 * d], preferred_element_type=jnp.float32) + b_ff1
        ff = jnp.maximum(ff, 0.0)
        ff = jnp.dot(ff, w_ff2, preferred_element_type=jnp.float32) + vec[VEC_B_FF2:VEC_B_FF2 + 1]
        h = _layer_norm(h2 + ff, vec[VEC_LN2_G:VEC_LN2_G + 1], vec[VEC_LN2_B:VEC_LN2_B + 1])

    # ---- post_mp head: masked mean pool over nodes + linear readout ----
    node_mask = jnp.transpose(key_mask, (0, 2, 1))              # [BT, N, 1]
    h3 = h.reshape(bt, n, d)
    denom = jnp.maximum(jnp.sum(node_mask, axis=1), 1.0)        # [BT, 1]
    pooled = jnp.sum(h3 * node_mask, axis=1) / denom            # [BT, D]
    y = jnp.dot(pooled, head_w_ref[...].astype(jnp.float32),
                preferred_element_type=jnp.float32) + head_b_ref[...].astype(jnp.float32)
    o_ref[...] = y.reshape(bt, 1, -1).astype(o_ref.dtype)


# ----------------------------------------------------------------------------
# Wrapper: pick a batch tile (aim for big matmul slabs, but keep >=2 parallel
# grid blocks when B>=2 so both v7x TensorCores are used), build specs, call.
# ----------------------------------------------------------------------------
def _choose_b_tile(B, N):
    target = max(1, pl.cdiv(128, N))        # aim for >=128 matmul rows per step
    if B >= 2:
        target = min(target, max(1, B // 2))  # keep >=2 grid blocks (v7x dual TC)
    b_tile = max(1, min(B, target))
    while B % b_tile:
        b_tile -= 1
    return b_tile


def gps_model_forward(x, adj, mask, params, num_heads):
    B, N, dim_in = x.shape
    L = params['w_mat'].shape[0]
    dim_out = params['head_w'].shape[1]
    b_tile = _choose_b_tile(B, N)
    grid = (B // b_tile,)

    out = pl.pallas_call(
        functools.partial(gps_forward_kernel, num_layers=L, num_heads=num_heads),
        out_shape=jax.ShapeDtypeStruct((B, 1, dim_out), x.dtype),
        grid=grid,
        in_specs=[
            pl.BlockSpec((b_tile, N, dim_in), lambda b: (b, 0, 0)),   # x
            pl.BlockSpec((b_tile, N, N), lambda b: (b, 0, 0)),        # adj
            pl.BlockSpec((b_tile, 1, N), lambda b: (b, 0, 0)),        # node mask
            pl.BlockSpec(params['enc_w'].shape, lambda b: (0, 0)),
            pl.BlockSpec(params['enc_b'].shape, lambda b: (0, 0)),
            pl.BlockSpec(params['w_mat'].shape, lambda b: (0, 0, 0)),
            pl.BlockSpec(params['w_ff2'].shape, lambda b: (0, 0, 0)),
            pl.BlockSpec(params['vec'].shape, lambda b: (0, 0, 0)),
            pl.BlockSpec(params['head_w'].shape, lambda b: (0, 0)),
            pl.BlockSpec(params['head_b'].shape, lambda b: (0, 0)),
        ],
        out_specs=pl.BlockSpec((b_tile, 1, dim_out), lambda b: (b, 0, 0)),
        compiler_params=pltpu.CompilerParams(dimension_semantics=("parallel",)),
    )(x, adj, mask,
      params['enc_w'], params['enc_b'],
      params['w_mat'], params['w_ff2'], params['vec'],
      params['head_w'], params['head_b'])
    return out.reshape(B, dim_out)


# ----------------------------------------------------------------------------
# Parameter init (deterministic, synthetic), directly in packed layout.
# NOTE: on v6e/v7x, dtype=jnp.bfloat16 halves HBM/VMEM traffic (all dots still
# accumulate in f32); keep f32 on v5e.
# ----------------------------------------------------------------------------
def init_params(key, dim_in, d, dim_out, n_layers, dtype=jnp.float32):
    def dense(k, fin, fout):
        return (jax.random.normal(k, (fin, fout), jnp.float32) / jnp.sqrt(float(fin)))

    keys = jax.random.split(key, 2 + n_layers)
    w_mat, w_ff2, vec = [], [], []
    for i in range(n_layers):
        lk = jax.random.split(keys[2 + i], 7)
        w_loc = dense(lk[0], d, d)
        w_q = dense(lk[1], d, d)
        w_k = dense(lk[2], d, d)
        w_v = dense(lk[3], d, d)
        w_o = dense(lk[4], d, d)
        w_ff1 = dense(lk[5], d, 2 * d)
        w_ff2_l = dense(lk[6], 2 * d, d)
        w_mat.append(jnp.concatenate([w_loc, w_q, w_k, w_v, w_o, w_ff1], axis=1))  # [D, 7D]
        w_ff2.append(w_ff2_l)

        v = jnp.zeros((N_VEC_ROWS, d), jnp.float32)
        # biases are zero at init; LN gammas are ones
        v = v.at[VEC_LN1L_G].set(1.0).at[VEC_LN1A_G].set(1.0).at[VEC_LN2_G].set(1.0)
        vec.append(v)

    params = {
        'enc_w': dense(keys[0], dim_in, d).astype(dtype),
        'enc_b': jnp.zeros((1, d), dtype),
        'w_mat': jnp.stack(w_mat).astype(dtype),     # [L, D, 7D]
        'w_ff2': jnp.stack(w_ff2).astype(dtype),     # [L, 2D, D]
        'vec': jnp.stack(vec).astype(dtype),         # [L, 14, D]
        'head_w': dense(keys[1], d, dim_out).astype(dtype),
        'head_b': jnp.zeros((1, dim_out), dtype),
    }
    return params


if __name__ == "__main__":
    B, N, DIM_IN, D, HEADS, LAYERS, DIM_OUT = 2, 16, 4, 32, 4, 2, 3

    key = jax.random.PRNGKey(0)
    k_x, k_adj, k_p = jax.random.split(key, 3)

    # node features
    x = jax.random.normal(k_x, (B, N, DIM_IN), jnp.float32)

    # random symmetric adjacency with self loops, GCN-normalized (dense)
    a = (jax.random.uniform(k_adj, (B, N, N)) < 0.3).astype(jnp.float32)
    a = jnp.maximum(a, jnp.transpose(a, (0, 2, 1)))
    a = jnp.minimum(a + jnp.eye(N, dtype=jnp.float32)[None], 1.0)
    deg = a.sum(-1)
    dinv = 1.0 / jnp.sqrt(deg)
    adj = a * dinv[:, :, None] * dinv[:, None, :]

    # all nodes valid in this synthetic batch
    mask = jnp.ones((B, 1, N), jnp.float32)

    params = init_params(k_p, DIM_IN, D, DIM_OUT, LAYERS)

    out = gps_model_forward(x, adj, mask, params, num_heads=HEADS)
    out = jax.block_until_ready(out)
    assert out.shape == (B, DIM_OUT)
    assert bool(jnp.all(jnp.isfinite(out)))
    print("KERNEL_OK")
</pallas_src>

<mosaic_0001>
module attributes {stable_mosaic.version = 11 : i64} {
  func.func @gps_forward_kernel(%arg0: i32, %arg1: memref<1x16x4xf32, #tpu.memory_space<vmem>>, %arg2: memref<1x16x16xf32, #tpu.memory_space<vmem>>, %arg3: memref<1x1x16xf32, #tpu.memory_space<vmem>>, %arg4: memref<4x32xf32, #tpu.memory_space<vmem>>, %arg5: memref<1x32xf32, #tpu.memory_space<vmem>>, %arg6: memref<2x32x224xf32, #tpu.memory_space<vmem>>, %arg7: memref<2x64x32xf32, #tpu.memory_space<vmem>>, %arg8: memref<2x14x32xf32, #tpu.memory_space<vmem>>, %arg9: memref<32x3xf32, #tpu.memory_space<vmem>>, %arg10: memref<1x3xf32, #tpu.memory_space<vmem>>, %arg11: memref<1x1x3xf32, #tpu.memory_space<vmem>>) attributes {dimension_semantics = [#tpu.dimension_semantics<parallel>], iteration_bounds = array<i64: 2>, scalar_prefetch = 0 : i64, scratch_operands = 0 : i64, tpu.core_type = #tpu.core_type<tc>, window_params = [{transform_indices = @transform_0, window_bounds = array<i64: 1, 16, 4>}, {transform_indices = @transform_1, window_bounds = array<i64: 1, 16, 16>}, {transform_indices = @transform_2, window_bounds = array<i64: 1, 1, 16>}, {pipeline_mode = #tpu.pipeline_mode<synchronous>, transform_indices = @transform_3, window_bounds = array<i64: 4, 32>}, {pipeline_mode = #tpu.pipeline_mode<synchronous>, transform_indices = @transform_4, window_bounds = array<i64: 1, 32>}, {pipeline_mode = #tpu.pipeline_mode<synchronous>, transform_indices = @transform_5, window_bounds = array<i64: 2, 32, 224>}, {pipeline_mode = #tpu.pipeline_mode<synchronous>, transform_indices = @transform_6, window_bounds = array<i64: 2, 64, 32>}, {pipeline_mode = #tpu.pipeline_mode<synchronous>, transform_indices = @transform_7, window_bounds = array<i64: 2, 14, 32>}, {pipeline_mode = #tpu.pipeline_mode<synchronous>, transform_indices = @transform_8, window_bounds = array<i64: 32, 3>}, {pipeline_mode = #tpu.pipeline_mode<synchronous>, transform_indices = @transform_9, window_bounds = array<i64: 1, 3>}, {transform_indices = @transform_10, window_bounds = array<i64: 1, 1, 3>}]} {
    %c0 = arith.constant 0 : index
    %c0_0 = arith.constant 0 : index
    %c0_1 = arith.constant 0 : index
    %0 = vector.load %arg2[%c0, %c0_0, %c0_1] : memref<1x16x16xf32, #tpu.memory_space<vmem>>, vector<1x16x16xf32>
    %c0_2 = arith.constant 0 : index
    %c0_3 = arith.constant 0 : index
    %c0_4 = arith.constant 0 : index
    %1 = vector.load %arg3[%c0_2, %c0_3, %c0_4] : memref<1x1x16xf32, #tpu.memory_space<vmem>>, vector<1x1x16xf32>
    %cst = arith.constant 1.000000e+00 : f32
    %2 = vector.broadcast %cst : f32 to vector<1x1x16xf32>
    %3 = arith.subf %1, %2 : vector<1x1x16xf32>
    %cst_5 = arith.constant 1.000000e+09 : f32
    %4 = vector.broadcast %cst_5 : f32 to vector<1x1x16xf32>
    %5 = arith.mulf %3, %4 : vector<1x1x16xf32>
    %c0_6 = arith.constant 0 : index
    %c0_7 = arith.constant 0 : index
    %c0_8 = arith.constant 0 : index
    %6 = vector.load %arg1[%c0_6, %c0_7, %c0_8] : memref<1x16x4xf32, #tpu.memory_space<vmem>>, vector<1x16x4xf32>
    %7 = vector.shape_cast %6 : vector<1x16x4xf32> to vector<16x4xf32>
    %c0_9 = arith.constant 0 : index
    %c0_10 = arith.constant 0 : index
    %8 = vector.load %arg4[%c0_9, %c0_10] : memref<4x32xf32, #tpu.memory_space<vmem>>, vector<4x32xf32>
    %cst_11 = arith.constant dense<0.000000e+00> : vector<16x32xf32>
    %9 = tpu.matmul %7, %8, %cst_11 {dimension_numbers = #tpu.dot_dimension_numbers<[1], [0], [0], [1], [0, 0, 1, 1], [], []>} : vector<16x4xf32>, vector<4x32xf32>, vector<16x32xf32> -> vector<16x32xf32>
    %c0_12 = arith.constant 0 : index
    %c0_13 = arith.constant 0 : index
    %10 = vector.load %arg5[%c0_12, %c0_13] : memref<1x32xf32, #tpu.memory_space<vmem>>, vector<1x32xf32>
    %11 = vector.broadcast %10 : vector<1x32xf32> to vector<16x32xf32>
    %12 = arith.addf %9, %11 : vector<16x32xf32>
    %c0_14 = arith.constant 0 : index
    %c0_15 = arith.constant 0 : index
    %c0_16 = arith.constant 0 : index
    %13 = vector.load %arg6[%c0_14, %c0_15, %c0_16] : memref<2x32x224xf32, #tpu.memory_space<vmem>>, vector<1x32x224xf32>
    %14 = vector.shape_cast %13 : vector<1x32x224xf32> to vector<32x224xf32>
    %c0_17 = arith.constant 0 : index
    %c0_18 = arith.constant 0 : index
    %c0_19 = arith.constant 0 : index
    %15 = vector.load %arg7[%c0_17, %c0_18, %c0_19] : memref<2x64x32xf32, #tpu.memory_space<vmem>>, vector<1x64x32xf32>
    %16 = vector.shape_cast %15 : vector<1x64x32xf32> to vector<64x32xf32>
    %c0_20 = arith.constant 0 : index
    %c0_21 = arith.constant 0 : index
    %c0_22 = arith.constant 0 : index
    %17 = vector.load %arg8[%c0_20, %c0_21, %c0_22] : memref<2x14x32xf32, #tpu.memory_space<vmem>>, vector<1x14x32xf32>
    %18 = vector.shape_cast %17 : vector<1x14x32xf32> to vector<14x32xf32>
    %19 = vector.extract_strided_slice %14 {offsets = [0, 0], sizes = [32, 128], strides = [1, 1]} : vector<32x224xf32> to vector<32x128xf32>
    %cst_23 = arith.constant dense<0.000000e+00> : vector<16x128xf32>
    %20 = tpu.matmul %12, %19, %cst_23 {dimension_numbers = #tpu.dot_dimension_numbers<[1], [0], [0], [1], [0, 0, 1, 1], [], []>} : vector<16x32xf32>, vector<32x128xf32>, vector<16x128xf32> -> vector<16x128xf32>
    %21 = vector.extract_strided_slice %20 {offsets = [0, 0], sizes = [16, 32], strides = [1, 1]} : vector<16x128xf32> to vector<16x32xf32>
    %22 = vector.extract_strided_slice %20 {offsets = [0, 32], sizes = [16, 32], strides = [1, 1]} : vector<16x128xf32> to vector<16x32xf32>
    %23 = vector.extract_strided_slice %18 {offsets = [1, 0], sizes = [1, 32], strides = [1, 1]} : vector<14x32xf32> to vector<1x32xf32>
    %24 = vector.broadcast %23 : vector<1x32xf32> to vector<16x32xf32>
    %25 = arith.addf %22, %24 : vector<16x32xf32>
    %26 = vector.shape_cast %25 : vector<16x32xf32> to vector<1x16x32xf32>
    %27 = vector.extract_strided_slice %20 {offsets = [0, 64], sizes = [16, 32], strides = [1, 1]} : vector<16x128xf32> to vector<16x32xf32>
    %28 = vector.extract_strided_slice %18 {offsets = [2, 0], sizes = [1, 32], strides = [1, 1]} : vector<14x32xf32> to vector<1x32xf32>
    %29 = vector.broadcast %28 : vector<1x32xf32> to vector<16x32xf32>
    %30 = arith.addf %27, %29 : vector<16x32xf32>
    %31 = vector.shape_cast %30 : vector<16x32xf32> to vector<1x16x32xf32>
    %32 = vector.extract_strided_slice %20 {offsets = [0, 96], sizes = [16, 32], strides = [1, 1]} : vector<16x128xf32> to vector<16x32xf32>
    %33 = vector.extract_strided_slice %18 {offsets = [3, 0], sizes = [1, 32], strides = [1, 1]} : vector<14x32xf32> to vector<1x32xf32>
    %34 = vector.broadcast %33 : vector<1x32xf32> to vector<16x32xf32>
    %35 = arith.addf %32, %34 : vector<16x32xf32>
    %36 = vector.shape_cast %35 : vector<16x32xf32> to vector<1x16x32xf32>
    %37 = vector.shape_cast %21 : vector<16x32xf32> to vector<1x16x32xf32>
    "tpu.trace_start"() <{level = 10 : i32, message = "bij,bjd->bid"}> : () -> ()
    %cst_24 = arith.constant dense<0.000000e+00> : vector<1x16x32xf32>
    %38 = tpu.matmul %0, %37, %cst_24 {dimension_numbers = #tpu.dot_dimension_numbers<[2], [1], [1], [2], [0, 0, 0, 1, 1, 2], [0], [0]>} : vector<1x16x16xf32>, vector<1x16x32xf32>, vector<1x16x32xf32> -> vector<1x16x32xf32>
    "tpu.trace_stop"() : () -> ()
    %39 = vector.shape_cast %38 : vector<1x16x32xf32> to vector<16x32xf32>
    %40 = vector.extract_strided_slice %18 {offsets = [0, 0], sizes = [1, 32], strides = [1, 1]} : vector<14x32xf32> to vector<1x32xf32>
    %41 = vector.broadcast %40 : vector<1x32xf32> to vector<16x32xf32>
    %42 = arith.addf %39, %41 : vector<16x32xf32>
    %43 = arith.addf %12, %42 : vector<16x32xf32>
    %44 = vector.extract_strided_slice %18 {offsets = [8, 0], sizes = [1, 32], strides = [1, 1]} : vector<14x32xf32> to vector<1x32xf32>
    %45 = vector.extract_strided_slice %18 {offsets = [9, 0], sizes = [1, 32], strides = [1, 1]} : vector<14x32xf32> to vector<1x32xf32>
    %cst_25 = arith.constant dense<0.000000e+00> : vector<16xf32>
    %46 = vector.multi_reduction <add>, %43, %cst_25 [1] : vector<16x32xf32> to vector<16xf32>
    %47 = vector.shape_cast %46 : vector<16xf32> to vector<16x1xf32>
    %cst_26 = arith.constant 3.200000e+01 : f32
    %48 = vector.broadcast %cst_26 : f32 to vector<16x1xf32>
    %49 = arith.divf %47, %48 : vector<16x1xf32>
    %50 = vector.broadcast %49 : vector<16x1xf32> to vector<16x32xf32>
    %51 = arith.subf %43, %50 : vector<16x32xf32>
    %52 = arith.mulf %51, %51 : vector<16x32xf32>
    %cst_27 = arith.constant dense<0.000000e+00> : vector<16xf32>
    %53 = vector.multi_reduction <add>, %52, %cst_27 [1] : vector<16x32xf32> to vector<16xf32>
    %54 = vector.shape_cast %53 : vector<16xf32> to vector<16x1xf32>
    %cst_28 = arith.constant 3.200000e+01 : f32
    %55 = vector.broadcast %cst_28 : f32 to vector<16x1xf32>
    %56 = arith.divf %54, %55 : vector<16x1xf32>
    %57 = vector.broadcast %49 : vector<16x1xf32> to vector<16x32xf32>
    %58 = arith.subf %43, %57 : vector<16x32xf32>
    %cst_29 = arith.constant 9.99999974E-6 : f32
    %59 = vector.broadcast %cst_29 : f32 to vector<16x1xf32>
    %60 = arith.addf %56, %59 : vector<16x1xf32>
    %61 = math.rsqrt %60 : vector<16x1xf32>
    %62 = vector.broadcast %61 : vector<16x1xf32> to vector<16x32xf32>
    %63 = arith.mulf %58, %62 : vector<16x32xf32>
    %64 = vector.broadcast %44 : vector<1x32xf32> to vector<16x32xf32>
    %65 = arith.mulf %63, %64 : vector<16x32xf32>
    %66 = vector.broadcast %45 : vector<1x32xf32> to vector<16x32xf32>
    %67 = arith.addf %65, %66 : vector<16x32xf32>
    %68 = vector.extract_strided_slice %26 {offsets = [0, 0, 0], sizes = [1, 16, 8], strides = [1, 1, 1]} : vector<1x16x32xf32> to vector<1x16x8xf32>
    %69 = vector.extract_strided_slice %31 {offsets = [0, 0, 0], sizes = [1, 16, 8], strides = [1, 1, 1]} : vector<1x16x32xf32> to vector<1x16x8xf32>
    "tpu.trace_start"() <{level = 10 : i32, message = "bqd,bkd->bqk"}> : () -> ()
    %cst_30 = arith.constant dense<0.000000e+00> : vector<1x16x16xf32>
    %70 = tpu.matmul %68, %69, %cst_30 {dimension_numbers = #tpu.dot_dimension_numbers<[2], [2], [1], [1], [0, 0, 0, 1, 1, 1], [0], [0]>} : vector<1x16x8xf32>, vector<1x16x8xf32>, vector<1x16x16xf32> -> vector<1x16x16xf32>
    "tpu.trace_stop"() : () -> ()
    %cst_31 = arith.constant 0.353553385 : f32
    %71 = vector.broadcast %cst_31 : f32 to vector<1x16x16xf32>
    %72 = arith.mulf %70, %71 : vector<1x16x16xf32>
    %73 = vector.broadcast %5 : vector<1x1x16xf32> to vector<1x16x16xf32>
    %74 = arith.addf %72, %73 : vector<1x16x16xf32>
    %cst_32 = arith.constant dense<0xFF800000> : vector<1x16xf32>
    %75 = vector.multi_reduction <maximumf>, %74, %cst_32 [2] : vector<1x16x16xf32> to vector<1x16xf32>
    %cst_33 = arith.constant 0xFF800000 : f32
    %76 = vector.broadcast %cst_33 : f32 to vector<1x16xf32>
    %77 = arith.maximumf %76, %75 : vector<1x16xf32>
    %78 = vector.shape_cast %77 : vector<1x16xf32> to vector<1x16x1xf32>
    %79 = vector.broadcast %78 : vector<1x16x1xf32> to vector<1x16x16xf32>
    %80 = arith.subf %74, %79 : vector<1x16x16xf32>
    %81 = math.exp %80 : vector<1x16x16xf32>
    %cst_34 = arith.constant dense<0.000000e+00> : vector<1x16xf32>
    %82 = vector.multi_reduction <add>, %81, %cst_34 [2] : vector<1x16x16xf32> to vector<1x16xf32>
    %83 = vector.shape_cast %82 : vector<1x16xf32> to vector<1x16x1xf32>
    %84 = vector.broadcast %83 : vector<1x16x1xf32> to vector<1x16x16xf32>
    %85 = arith.divf %81, %84 : vector<1x16x16xf32>
    %86 = vector.extract_strided_slice %36 {offsets = [0, 0, 0], sizes = [1, 16, 8], strides = [1, 1, 1]} : vector<1x16x32xf32> to vector<1x16x8xf32>
    "tpu.trace_start"() <{level = 10 : i32, message = "bqk,bkd->bqd"}> : () -> ()
    %cst_35 = arith.constant dense<0.000000e+00> : vector<1x16x8xf32>
    %87 = tpu.matmul %85, %86, %cst_35 {dimension_numbers = #tpu.dot_dimension_numbers<[2], [1], [1], [2], [0, 0, 0, 1, 1, 2], [0], [0]>} : vector<1x16x16xf32>, vector<1x16x8xf32>, vector<1x16x8xf32> -> vector<1x16x8xf32>
    "tpu.trace_stop"() : () -> ()
    %88 = vector.extract_strided_slice %26 {offsets = [0, 0, 8], sizes = [1, 16, 8], strides = [1, 1, 1]} : vector<1x16x32xf32> to vector<1x16x8xf32>
    %89 = vector.extract_strided_slice %31 {offsets = [0, 0, 8], sizes = [1, 16, 8], strides = [1, 1, 1]} : vector<1x16x32xf32> to vector<1x16x8xf32>
    "tpu.trace_start"() <{level = 10 : i32, message = "bqd,bkd->bqk"}> : () -> ()
    %cst_36 = arith.constant dense<0.000000e+00> : vector<1x16x16xf32>
    %90 = tpu.matmul %88, %89, %cst_36 {dimension_numbers = #tpu.dot_dimension_numbers<[2], [2], [1], [1], [0, 0, 0, 1, 1, 1], [0], [0]>} : vector<1x16x8xf32>, vector<1x16x8xf32>, vector<1x16x16xf32> -> vector<1x16x16xf32>
    "tpu.trace_stop"() : () -> ()
    %cst_37 = arith.constant 0.353553385 : f32
    %91 = vector.broadcast %cst_37 : f32 to vector<1x16x16xf32>
    %92 = arith.mulf %90, %91 : vector<1x16x16xf32>
    %93 = vector.broadcast %5 : vector<1x1x16xf32> to vector<1x16x16xf32>
    %94 = arith.addf %92, %93 : vector<1x16x16xf32>
    %cst_38 = arith.constant dense<0xFF800000> : vector<1x16xf32>
    %95 = vector.multi_reduction <maximumf>, %94, %cst_38 [2] : vector<1x16x16xf32> to vector<1x16xf32>
    %cst_39 = arith.constant 0xFF800000 : f32
    %96 = vector.broadcast %cst_39 : f32 to vector<1x16xf32>
    %97 = arith.maximumf %96, %95 : vector<1x16xf32>
    %98 = vector.shape_cast %97 : vector<1x16xf32> to vector<1x16x1xf32>
    %99 = vector.broadcast %98 : vector<1x16x1xf32> to vector<1x16x16xf32>
    %100 = arith.subf %94, %99 : vector<1x16x16xf32>
    %101 = math.exp %100 : vector<1x16x16xf32>
    %cst_40 = arith.constant dense<0.000000e+00> : vector<1x16xf32>
    %102 = vector.multi_reduction <add>, %101, %cst_40 [2] : vector<1x16x16xf32> to vector<1x16xf32>
    %103 = vector.shape_cast %102 : vector<1x16xf32> to vector<1x16x1xf32>
    %104 = vector.broadcast %103 : vector<1x16x1xf32> to vector<1x16x16xf32>
    %105 = arith.divf %101, %104 : vector<1x16x16xf32>
    %106 = vector.extract_strided_slice %36 {offsets = [0, 0, 8], sizes = [1, 16, 8], strides = [1, 1, 1]} : vector<1x16x32xf32> to vector<1x16x8xf32>
    "tpu.trace_start"() <{level = 10 : i32, message = "bqk,bkd->bqd"}> : () -> ()
    %cst_41 = arith.constant dense<0.000000e+00> : vector<1x16x8xf32>
    %107 = tpu.matmul %105, %106, %cst_41 {dimension_numbers = #tpu.dot_dimension_numbers<[2], [1], [1], [2], [0, 0, 0, 1, 1, 2], [0], [0]>} : vector<1x16x16xf32>, vector<1x16x8xf32>, vector<1x16x8xf32> -> vector<1x16x8xf32>
    "tpu.trace_stop"() : () -> ()
    %108 = vector.extract_strided_slice %26 {offsets = [0, 0, 16], sizes = [1, 16, 8], strides = [1, 1, 1]} : vector<1x16x32xf32> to vector<1x16x8xf32>
    %109 = vector.extract_strided_slice %31 {offsets = [0, 0, 16], sizes = [1, 16, 8], strides = [1, 1, 1]} : vector<1x16x32xf32> to vector<1x16x8xf32>
    "tpu.trace_start"() <{level = 10 : i32, message = "bqd,bkd->bqk"}> : () -> ()
    %cst_42 = arith.constant dense<0.000000e+00> : vector<1x16x16xf32>
    %110 = tpu.matmul %108, %109, %cst_42 {dimension_numbers = #tpu.dot_dimension_numbers<[2], [2], [1], [1], [0, 0, 0, 1, 1, 1], [0], [0]>} : vector<1x16x8xf32>, vector<1x16x8xf32>, vector<1x16x16xf32> -> vector<1x16x16xf32>
    "tpu.trace_stop"() : () -> ()
    %cst_43 = arith.constant 0.353553385 : f32
    %111 = vector.broadcast %cst_43 : f32 to vector<1x16x16xf32>
    %112 = arith.mulf %110, %111 : vector<1x16x16xf32>
    %113 = vector.broadcast %5 : vector<1x1x16xf32> to vector<1x16x16xf32>
    %114 = arith.addf %112, %113 : vector<1x16x16xf32>
    %cst_44 = arith.constant dense<0xFF800000> : vector<1x16xf32>
    %115 = vector.multi_reduction <maximumf>, %114, %cst_44 [2] : vector<1x16x16xf32> to vector<1x16xf32>
    %cst_45 = arith.constant 0xFF800000 : f32
    %116 = vector.broadcast %cst_45 : f32 to vector<1x16xf32>
    %117 = arith.maximumf %116, %115 : vector<1x16xf32>
    %118 = vector.shape_cast %117 : vector<1x16xf32> to vector<1x16x1xf32>
    %119 = vector.broadcast %118 : vector<1x16x1xf32> to vector<1x16x16xf32>
    %120 = arith.subf %114, %119 : vector<1x16x16xf32>
    %121 = math.exp %120 : vector<1x16x16xf32>
    %cst_46 = arith.constant dense<0.000000e+00> : vector<1x16xf32>
    %122 = vector.multi_reduction <add>, %121, %cst_46 [2] : vector<1x16x16xf32> to vector<1x16xf32>
    %123 = vector.shape_cast %122 : vector<1x16xf32> to vector<1x16x1xf32>
    %124 = vector.broadcast %123 : vector<1x16x1xf32> to vector<1x16x16xf32>
    %125 = arith.divf %121, %124 : vector<1x16x16xf32>
    %126 = vector.extract_strided_slice %36 {offsets = [0, 0, 16], sizes = [1, 16, 8], strides = [1, 1, 1]} : vector<1x16x32xf32> to vector<1x16x8xf32>
    "tpu.trace_start"() <{level = 10 : i32, message = "bqk,bkd->bqd"}> : () -> ()
    %cst_47 = arith.constant dense<0.000000e+00> : vector<1x16x8xf32>
    %127 = tpu.matmul %125, %126, %cst_47 {dimension_numbers = #tpu.dot_dimension_numbers<[2], [1], [1], [2], [0, 0, 0, 1, 1, 2], [0], [0]>} : vector<1x16x16xf32>, vector<1x16x8xf32>, vector<1x16x8xf32> -> vector<1x16x8xf32>
    "tpu.trace_stop"() : () -> ()
    %128 = vector.extract_strided_slice %26 {offsets = [0, 0, 24], sizes = [1, 16, 8], strides = [1, 1, 1]} : vector<1x16x32xf32> to vector<1x16x8xf32>
    %129 = vector.extract_strided_slice %31 {offsets = [0, 0, 24], sizes = [1, 16, 8], strides = [1, 1, 1]} : vector<1x16x32xf32> to vector<1x16x8xf32>
    "tpu.trace_start"() <{level = 10 : i32, message = "bqd,bkd->bqk"}> : () -> ()
    %cst_48 = arith.constant dense<0.000000e+00> : vector<1x16x16xf32>
    %130 = tpu.matmul %128, %129, %cst_48 {dimension_numbers = #tpu.dot_dimension_numbers<[2], [2], [1], [1], [0, 0, 0, 1, 1, 1], [0], [0]>} : vector<1x16x8xf32>, vector<1x16x8xf32>, vector<1x16x16xf32> -> vector<1x16x16xf32>
    "tpu.trace_stop"() : () -> ()
    %cst_49 = arith.constant 0.353553385 : f32
    %131 = vector.broadcast %cst_49 : f32 to vector<1x16x16xf32>
    %132 = arith.mulf %130, %131 : vector<1x16x16xf32>
    %133 = vector.broadcast %5 : vector<1x1x16xf32> to vector<1x16x16xf32>
    %134 = arith.addf %132, %133 : vector<1x16x16xf32>
    %cst_50 = arith.constant dense<0xFF800000> : vector<1x16xf32>
    %135 = vector.multi_reduction <maximumf>, %134, %cst_50 [2] : vector<1x16x16xf32> to vector<1x16xf32>
    %cst_51 = arith.constant 0xFF800000 : f32
    %136 = vector.broadcast %cst_51 : f32 to vector<1x16xf32>
    %137 = arith.maximumf %136, %135 : vector<1x16xf32>
    %138 = vector.shape_cast %137 : vector<1x16xf32> to vector<1x16x1xf32>
    %139 = vector.broadcast %138 : vector<1x16x1xf32> to vector<1x16x16xf32>
    %140 = arith.subf %134, %139 : vector<1x16x16xf32>
    %141 = math.exp %140 : vector<1x16x16xf32>
    %cst_52 = arith.constant dense<0.000000e+00> : vector<1x16xf32>
    %142 = vector.multi_reduction <add>, %141, %cst_52 [2] : vector<1x16x16xf32> to vector<1x16xf32>
    %143 = vector.shape_cast %142 : vector<1x16xf32> to vector<1x16x1xf32>
    %144 = vector.broadcast %143 : vector<1x16x1xf32> to vector<1x16x16xf32>
    %145 = arith.divf %141, %144 : vector<1x16x16xf32>
    %146 = vector.extract_strided_slice %36 {offsets = [0, 0, 24], sizes = [1, 16, 8], strides = [1, 1, 1]} : vector<1x16x32xf32> to vector<1x16x8xf32>
    "tpu.trace_start"() <{level = 10 : i32, message = "bqk,bkd->bqd"}> : () -> ()
    %cst_53 = arith.constant dense<0.000000e+00> : vector<1x16x8xf32>
    %147 = tpu.matmul %145, %146, %cst_53 {dimension_numbers = #tpu.dot_dimension_numbers<[2], [1], [1], [2], [0, 0, 0, 1, 1, 2], [0], [0]>} : vector<1x16x16xf32>, vector<1x16x8xf32>, vector<1x16x8xf32> -> vector<1x16x8xf32>
    "tpu.trace_stop"() : () -> ()
    %148 = tpu.concatenate %87, %107, %127, %147 in 2 : vector<1x16x8xf32>, vector<1x16x8xf32>, vector<1x16x8xf32>, vector<1x16x8xf32> -> vector<1x16x32xf32>
    %149 = vector.shape_cast %148 : vector<1x16x32xf32> to vector<16x32xf32>
    %150 = vector.extract_strided_slice %14 {offsets = [0, 128], sizes = [32, 32], strides = [1, 1]} : vector<32x224xf32> to vector<32x32xf32>
    %cst_54 = arith.constant dense<0.000000e+00> : vector<16x32xf32>
    %151 = tpu.matmul %149, %150, %cst_54 {dimension_numbers = #tpu.dot_dimension_numbers<[1], [0], [0], [1], [0, 0, 1, 1], [], []>} : vector<16x32xf32>, vector<32x32xf32>, vector<16x32xf32> -> vector<16x32xf32>
    %152 = vector.extract_strided_slice %18 {offsets = [4, 0], sizes = [1, 32], strides = [1, 1]} : vector<14x32xf32> to vector<1x32xf32>
    %153 = vector.broadcast %152 : vector<1x32xf32> to vector<16x32xf32>
    %154 = arith.addf %151, %153 : vector<16x32xf32>
    %155 = arith.addf %12, %154 : vector<16x32xf32>
    %156 = vector.extract_strided_slice %18 {offsets = [10, 0], sizes = [1, 32], strides = [1, 1]} : vector<14x32xf32> to vector<1x32xf32>
    %157 = vector.extract_strided_slice %18 {offsets = [11, 0], sizes = [1, 32], strides = [1, 1]} : vector<14x32xf32> to vector<1x32xf32>
    %cst_55 = arith.constant dense<0.000000e+00> : vector<16xf32>
    %158 = vector.multi_reduction <add>, %155, %cst_55 [1] : vector<16x32xf32> to vector<16xf32>
    %159 = vector.shape_cast %158 : vector<16xf32> to vector<16x1xf32>
    %cst_56 = arith.constant 3.200000e+01 : f32
    %160 = vector.broadcast %cst_56 : f32 to vector<16x1xf32>
    %161 = arith.divf %159, %160 : vector<16x1xf32>
    %162 = vector.broadcast %161 : vector<16x1xf32> to vector<16x32xf32>
    %163 = arith.subf %155, %162 : vector<16x32xf32>
    %164 = arith.mulf %163, %163 : vector<16x32xf32>
    %cst_57 = arith.constant dense<0.000000e+00> : vector<16xf32>
    %165 = vector.multi_reduction <add>, %164, %cst_57 [1] : vector<16x32xf32> to vector<16xf32>
    %166 = vector.shape_cast %165 : vector<16xf32> to vector<16x1xf32>
    %cst_58 = arith.constant 3.200000e+01 : f32
    %167 = vector.broadcast %cst_58 : f32 to vector<16x1xf32>
    %168 = arith.divf %166, %167 : vector<16x1xf32>
    %169 = vector.broadcast %161 : vector<16x1xf32> to vector<16x32xf32>
    %170 = arith.subf %155, %169 : vector<16x32xf32>
    %cst_59 = arith.constant 9.99999974E-6 : f32
    %171 = vector.broadcast %cst_59 : f32 to vector<16x1xf32>
    %172 = arith.addf %168, %171 : vector<16x1xf32>
    %173 = math.rsqrt %172 : vector<16x1xf32>
    %174 = vector.broadcast %173 : vector<16x1xf32> to vector<16x32xf32>
    %175 = arith.mulf %170, %174 : vector<16x32xf32>
    %176 = vector.broadcast %156 : vector<1x32xf32> to vector<16x32xf32>
    %177 = arith.mulf %175, %176 : vector<16x32xf32>
    %178 = vector.broadcast %157 : vector<1x32xf32> to vector<16x32xf32>
    %179 = arith.addf %177, %178 : vector<16x32xf32>
    %180 = arith.addf %67, %179 : vector<16x32xf32>
    %181 = vector.extract_strided_slice %18 {offsets = [6, 0], sizes = [1, 32], strides = [1, 1]} : vector<14x32xf32> to vector<1x32xf32>
    %182 = vector.extract_strided_slice %18 {offsets = [7, 0], sizes = [1, 32], strides = [1, 1]} : vector<14x32xf32> to vector<1x32xf32>
    %183 = tpu.concatenate %181, %182 in 1 : vector<1x32xf32>, vector<1x32xf32> -> vector<1x64xf32>
    %184 = vector.extract_strided_slice %14 {offsets = [0, 160], sizes = [32, 64], strides = [1, 1]} : vector<32x224xf32> to vector<32x64xf32>
    %cst_60 = arith.constant dense<0.000000e+00> : vector<16x64xf32>
    %185 = tpu.matmul %180, %184, %cst_60 {dimension_numbers = #tpu.dot_dimension_numbers<[1], [0], [0], [1], [0, 0, 1, 1], [], []>} : vector<16x32xf32>, vector<32x64xf32>, vector<16x64xf32> -> vector<16x64xf32>
    %186 = vector.broadcast %183 : vector<1x64xf32> to vector<16x64xf32>
    %187 = arith.addf %185, %186 : vector<16x64xf32>
    %cst_61 = arith.constant 0.000000e+00 : f32
    %188 = vector.broadcast %cst_61 : f32 to vector<16x64xf32>
    %189 = arith.maximumf %187, %188 : vector<16x64xf32>
    %cst_62 = arith.constant dense<0.000000e+00> : vector<16x32xf32>
    %190 = tpu.matmul %189, %16, %cst_62 {dimension_numbers = #tpu.dot_dimension_numbers<[1], [0], [0], [1], [0, 0, 1, 1], [], []>} : vector<16x64xf32>, vector<64x32xf32>, vector<16x32xf32> -> vector<16x32xf32>
    %191 = vector.extract_strided_slice %18 {offsets = [5, 0], sizes = [1, 32], strides = [1, 1]} : vector<14x32xf32> to vector<1x32xf32>
    %192 = vector.broadcast %191 : vector<1x32xf32> to vector<16x32xf32>
    %193 = arith.addf %190, %192 : vector<16x32xf32>
    %194 = arith.addf %180, %193 : vector<16x32xf32>
    %195 = vector.extract_strided_slice %18 {offsets = [12, 0], sizes = [1, 32], strides = [1, 1]} : vector<14x32xf32> to vector<1x32xf32>
    %196 = vector.extract_strided_slice %18 {offsets = [13, 0], sizes = [1, 32], strides = [1, 1]} : vector<14x32xf32> to vector<1x32xf32>
    %cst_63 = arith.constant dense<0.000000e+00> : vector<16xf32>
    %197 = vector.multi_reduction <add>, %194, %cst_63 [1] : vector<16x32xf32> to vector<16xf32>
    %198 = vector.shape_cast %197 : vector<16xf32> to vector<16x1xf32>
    %cst_64 = arith.constant 3.200000e+01 : f32
    %199 = vector.broadcast %cst_64 : f32 to vector<16x1xf32>
    %200 = arith.divf %198, %199 : vector<16x1xf32>
    %201 = vector.broadcast %200 : vector<16x1xf32> to vector<16x32xf32>
    %202 = arith.subf %194, %201 : vector<16x32xf32>
    %203 = arith.mulf %202, %202 : vector<16x32xf32>
    %cst_65 = arith.constant dense<0.000000e+00> : vector<16xf32>
    %204 = vector.multi_reduction <add>, %203, %cst_65 [1] : vector<16x32xf32> to vector<16xf32>
    %205 = vector.shape_cast %204 : vector<16xf32> to vector<16x1xf32>
    %cst_66 = arith.constant 3.200000e+01 : f32
    %206 = vector.broadcast %cst_66 : f32 to vector<16x1xf32>
    %207 = arith.divf %205, %206 : vector<16x1xf32>
    %208 = vector.broadcast %200 : vector<16x1xf32> to vector<16x32xf32>
    %209 = arith.subf %194, %208 : vector<16x32xf32>
    %cst_67 = arith.constant 9.99999974E-6 : f32
    %210 = vector.broadcast %cst_67 : f32 to vector<16x1xf32>
    %211 = arith.addf %207, %210 : vector<16x1xf32>
    %212 = math.rsqrt %211 : vector<16x1xf32>
    %213 = vector.broadcast %212 : vector<16x1xf32> to vector<16x32xf32>
    %214 = arith.mulf %209, %213 : vector<16x32xf32>
    %215 = vector.broadcast %195 : vector<1x32xf32> to vector<16x32xf32>
    %216 = arith.mulf %214, %215 : vector<16x32xf32>
    %217 = vector.broadcast %196 : vector<1x32xf32> to vector<16x32xf32>
    %218 = arith.addf %216, %217 : vector<16x32xf32>
    %c1 = arith.constant 1 : index
    %c0_68 = arith.constant 0 : index
    %c0_69 = arith.constant 0 : index
    %219 = vector.load %arg6[%c1, %c0_68, %c0_69] : memref<2x32x224xf32, #tpu.memory_space<vmem>>, vector<1x32x224xf32>
    %220 = vector.shape_cast %219 : vector<1x32x224xf32> to vector<32x224xf32>
    %c1_70 = arith.constant 1 : index
    %c0_71 = arith.constant 0 : index
    %c0_72 = arith.constant 0 : index
    %221 = vector.load %arg7[%c1_70, %c0_71, %c0_72] : memref<2x64x32xf32, #tpu.memory_space<vmem>>, vector<1x64x32xf32>
    %222 = vector.shape_cast %221 : vector<1x64x32xf32> to vector<64x32xf32>
    %c1_73 = arith.constant 1 : index
    %c0_74 = arith.constant 0 : index
    %c0_75 = arith.constant 0 : index
    %223 = vector.load %arg8[%c1_73, %c0_74, %c0_75] : memref<2x14x32xf32, #tpu.memory_space<vmem>>, vector<1x14x32xf32>
    %224 = vector.shape_cast %223 : vector<1x14x32xf32> to vector<14x32xf32>
    %225 = vector.extract_strided_slice %220 {offsets = [0, 0], sizes = [32, 128], strides = [1, 1]} : vector<32x224xf32> to vector<32x128xf32>
    %cst_76 = arith.constant dense<0.000000e+00> : vector<16x128xf32>
    %226 = tpu.matmul %218, %225, %cst_76 {dimension_numbers = #tpu.dot_dimension_numbers<[1], [0], [0], [1], [0, 0, 1, 1], [], []>} : vector<16x32xf32>, vector<32x128xf32>, vector<16x128xf32> -> vector<16x128xf32>
    %227 = vector.extract_strided_slice %226 {offsets = [0, 0], sizes = [16, 32], strides = [1, 1]} : vector<16x128xf32> to vector<16x32xf32>
    %228 = vector.extract_strided_slice %226 {offsets = [0, 32], sizes = [16, 32], strides = [1, 1]} : vector<16x128xf32> to vector<16x32xf32>
    %229 = vector.extract_strided_slice %224 {offsets = [1, 0], sizes = [1, 32], strides = [1, 1]} : vector<14x32xf32> to vector<1x32xf32>
    %230 = vector.broadcast %229 : vector<1x32xf32> to vector<16x32xf32>
    %231 = arith.addf %228, %230 : vector<16x32xf32>
    %232 = vector.shape_cast %231 : vector<16x32xf32> to vector<1x16x32xf32>
    %233 = vector.extract_strided_slice %226 {offsets = [0, 64], sizes = [16, 32], strides = [1, 1]} : vector<16x128xf32> to vector<16x32xf32>
    %234 = vector.extract_strided_slice %224 {offsets = [2, 0], sizes = [1, 32], strides = [1, 1]} : vector<14x32xf32> to vector<1x32xf32>
    %235 = vector.broadcast %234 : vector<1x32xf32> to vector<16x32xf32>
    %236 = arith.addf %233, %235 : vector<16x32xf32>
    %237 = vector.shape_cast %236 : vector<16x32xf32> to vector<1x16x32xf32>
    %238 = vector.extract_strided_slice %226 {offsets = [0, 96], sizes = [16, 32], strides = [1, 1]} : vector<16x128xf32> to vector<16x32xf32>
    %239 = vector.extract_strided_slice %224 {offsets = [3, 0], sizes = [1, 32], strides = [1, 1]} : vector<14x32xf32> to vector<1x32xf32>
    %240 = vector.broadcast %239 : vector<1x32xf32> to vector<16x32xf32>
    %241 = arith.addf %238, %240 : vector<16x32xf32>
    %242 = vector.shape_cast %241 : vector<16x32xf32> to vector<1x16x32xf32>
    %243 = vector.shape_cast %227 : vector<16x32xf32> to vector<1x16x32xf32>
    "tpu.trace_start"() <{level = 10 : i32, message = "bij,bjd->bid"}> : () -> ()
    %cst_77 = arith.constant dense<0.000000e+00> : vector<1x16x32xf32>
    %244 = tpu.matmul %0, %243, %cst_77 {dimension_numbers = #tpu.dot_dimension_numbers<[2], [1], [1], [2], [0, 0, 0, 1, 1, 2], [0], [0]>} : vector<1x16x16xf32>, vector<1x16x32xf32>, vector<1x16x32xf32> -> vector<1x16x32xf32>
    "tpu.trace_stop"() : () -> ()
    %245 = vector.shape_cast %244 : vector<1x16x32xf32> to vector<16x32xf32>
    %246 = vector.extract_strided_slice %224 {offsets = [0, 0], sizes = [1, 32], strides = [1, 1]} : vector<14x32xf32> to vector<1x32xf32>
    %247 = vector.broadcast %246 : vector<1x32xf32> to vector<16x32xf32>
    %248 = arith.addf %245, %247 : vector<16x32xf32>
    %249 = arith.addf %218, %248 : vector<16x32xf32>
    %250 = vector.extract_strided_slice %224 {offsets = [8, 0], sizes = [1, 32], strides = [1, 1]} : vector<14x32xf32> to vector<1x32xf32>
    %251 = vector.extract_strided_slice %224 {offsets = [9, 0], sizes = [1, 32], strides = [1, 1]} : vector<14x32xf32> to vector<1x32xf32>
    %cst_78 = arith.constant dense<0.000000e+00> : vector<16xf32>
    %252 = vector.multi_reduction <add>, %249, %cst_78 [1] : vector<16x32xf32> to vector<16xf32>
    %253 = vector.shape_cast %252 : vector<16xf32> to vector<16x1xf32>
    %cst_79 = arith.constant 3.200000e+01 : f32
    %254 = vector.broadcast %cst_79 : f32 to vector<16x1xf32>
    %255 = arith.divf %253, %254 : vector<16x1xf32>
    %256 = vector.broadcast %255 : vector<16x1xf32> to vector<16x32xf32>
    %257 = arith.subf %249, %256 : vector<16x32xf32>
    %258 = arith.mulf %257, %257 : vector<16x32xf32>
    %cst_80 = arith.constant dense<0.000000e+00> : vector<16xf32>
    %259 = vector.multi_reduction <add>, %258, %cst_80 [1] : vector<16x32xf32> to vector<16xf32>
    %260 = vector.shape_cast %259 : vector<16xf32> to vector<16x1xf32>
    %cst_81 = arith.constant 3.200000e+01 : f32
    %261 = vector.broadcast %cst_81 : f32 to vector<16x1xf32>
    %262 = arith.divf %260, %261 : vector<16x1xf32>
    %263 = vector.broadcast %255 : vector<16x1xf32> to vector<16x32xf32>
    %264 = arith.subf %249, %263 : vector<16x32xf32>
    %cst_82 = arith.constant 9.99999974E-6 : f32
    %265 = vector.broadcast %cst_82 : f32 to vector<16x1xf32>
    %266 = arith.addf %262, %265 : vector<16x1xf32>
    %267 = math.rsqrt %266 : vector<16x1xf32>
    %268 = vector.broadcast %267 : vector<16x1xf32> to vector<16x32xf32>
    %269 = arith.mulf %264, %268 : vector<16x32xf32>
    %270 = vector.broadcast %250 : vector<1x32xf32> to vector<16x32xf32>
    %271 = arith.mulf %269, %270 : vector<16x32xf32>
    %272 = vector.broadcast %251 : vector<1x32xf32> to vector<16x32xf32>
    %273 = arith.addf %271, %272 : vector<16x32xf32>
    %274 = vector.extract_strided_slice %232 {offsets = [0, 0, 0], sizes = [1, 16, 8], strides = [1, 1, 1]} : vector<1x16x32xf32> to vector<1x16x8xf32>
    %275 = vector.extract_strided_slice %237 {offsets = [0, 0, 0], sizes = [1, 16, 8], strides = [1, 1, 1]} : vector<1x16x32xf32> to vector<1x16x8xf32>
    "tpu.trace_start"() <{level = 10 : i32, message = "bqd,bkd->bqk"}> : () -> ()
    %cst_83 = arith.constant dense<0.000000e+00> : vector<1x16x16xf32>
    %276 = tpu.matmul %274, %275, %cst_83 {dimension_numbers = #tpu.dot_dimension_numbers<[2], [2], [1], [1], [0, 0, 0, 1, 1, 1], [0], [0]>} : vector<1x16x8xf32>, vector<1x16x8xf32>, vector<1x16x16xf32> -> vector<1x16x16xf32>
    "tpu.trace_stop"() : () -> ()
    %cst_84 = arith.constant 0.353553385 : f32
    %277 = vector.broadcast %cst_84 : f32 to vector<1x16x16xf32>
    %278 = arith.mulf %276, %277 : vector<1x16x16xf32>
    %279 = vector.broadcast %5 : vector<1x1x16xf32> to vector<1x16x16xf32>
    %280 = arith.addf %278, %279 : vector<1x16x16xf32>
    %cst_85 = arith.constant dense<0xFF800000> : vector<1x16xf32>
    %281 = vector.multi_reduction <maximumf>, %280, %cst_85 [2] : vector<1x16x16xf32> to vector<1x16xf32>
    %cst_86 = arith.constant 0xFF800000 : f32
    %282 = vector.broadcast %cst_86 : f32 to vector<1x16xf32>
    %283 = arith.maximumf %282, %281 : vector<1x16xf32>
    %284 = vector.shape_cast %283 : vector<1x16xf32> to vector<1x16x1xf32>
    %285 = vector.broadcast %284 : vector<1x16x1xf32> to vector<1x16x16xf32>
    %286 = arith.subf %280, %285 : vector<1x16x16xf32>
    %287 = math.exp %286 : vector<1x16x16xf32>
    %cst_87 = arith.constant dense<0.000000e+00> : vector<1x16xf32>
    %288 = vector.multi_reduction <add>, %287, %cst_87 [2] : vector<1x16x16xf32> to vector<1x16xf32>
    %289 = vector.shape_cast %288 : vector<1x16xf32> to vector<1x16x1xf32>
    %290 = vector.broadcast %289 : vector<1x16x1xf32> to vector<1x16x16xf32>
    %291 = arith.divf %287, %290 : vector<1x16x16xf32>
    %292 = vector.extract_strided_slice %242 {offsets = [0, 0, 0], sizes = [1, 16, 8], strides = [1, 1, 1]} : vector<1x16x32xf32> to vector<1x16x8xf32>
    "tpu.trace_start"() <{level = 10 : i32, message = "bqk,bkd->bqd"}> : () -> ()
    %cst_88 = arith.constant dense<0.000000e+00> : vector<1x16x8xf32>
    %293 = tpu.matmul %291, %292, %cst_88 {dimension_numbers = #tpu.dot_dimension_numbers<[2], [1], [1], [2], [0, 0, 0, 1, 1, 2], [0], [0]>} : vector<1x16x16xf32>, vector<1x16x8xf32>, vector<1x16x8xf32> -> vector<1x16x8xf32>
    "tpu.trace_stop"() : () -> ()
    %294 = vector.extract_strided_slice %232 {offsets = [0, 0, 8], sizes = [1, 16, 8], strides = [1, 1, 1]} : vector<1x16x32xf32> to vector<1x16x8xf32>
    %295 = vector.extract_strided_slice %237 {offsets = [0, 0, 8], sizes = [1, 16, 8], strides = [1, 1, 1]} : vector<1x16x32xf32> to vector<1x16x8xf32>
    "tpu.trace_start"() <{level = 10 : i32, message = "bqd,bkd->bqk"}> : () -> ()
    %cst_89 = arith.constant dense<0.000000e+00> : vector<1x16x16xf32>
    %296 = tpu.matmul %294, %295, %cst_89 {dimension_numbers = #tpu.dot_dimension_numbers<[2], [2], [1], [1], [0, 0, 0, 1, 1, 1], [0], [0]>} : vector<1x16x8xf32>, vector<1x16x8xf32>, vector<1x16x16xf32> -> vector<1x16x16xf32>
    "tpu.trace_stop"() : () -> ()
    %cst_90 = arith.constant 0.353553385 : f32
    %297 = vector.broadcast %cst_90 : f32 to vector<1x16x16xf32>
    %298 = arith.mulf %296, %297 : vector<1x16x16xf32>
    %299 = vector.broadcast %5 : vector<1x1x16xf32> to vector<1x16x16xf32>
    %300 = arith.addf %298, %299 : vector<1x16x16xf32>
    %cst_91 = arith.constant dense<0xFF800000> : vector<1x16xf32>
    %301 = vector.multi_reduction <maximumf>, %300, %cst_91 [2] : vector<1x16x16xf32> to vector<1x16xf32>
    %cst_92 = arith.constant 0xFF800000 : f32
    %302 = vector.broadcast %cst_92 : f32 to vector<1x16xf32>
    %303 = arith.maximumf %302, %301 : vector<1x16xf32>
    %304 = vector.shape_cast %303 : vector<1x16xf32> to vector<1x16x1xf32>
    %305 = vector.broadcast %304 : vector<1x16x1xf32> to vector<1x16x16xf32>
    %306 = arith.subf %300, %305 : vector<1x16x16xf32>
    %307 = math.exp %306 : vector<1x16x16xf32>
    %cst_93 = arith.constant dense<0.000000e+00> : vector<1x16xf32>
    %308 = vector.multi_reduction <add>, %307, %cst_93 [2] : vector<1x16x16xf32> to vector<1x16xf32>
    %309 = vector.shape_cast %308 : vector<1x16xf32> to vector<1x16x1xf32>
    %310 = vector.broadcast %309 : vector<1x16x1xf32> to vector<1x16x16xf32>
    %311 = arith.divf %307, %310 : vector<1x16x16xf32>
    %312 = vector.extract_strided_slice %242 {offsets = [0, 0, 8], sizes = [1, 16, 8], strides = [1, 1, 1]} : vector<1x16x32xf32> to vector<1x16x8xf32>
    "tpu.trace_start"() <{level = 10 : i32, message = "bqk,bkd->bqd"}> : () -> ()
    %cst_94 = arith.constant dense<0.000000e+00> : vector<1x16x8xf32>
    %313 = tpu.matmul %311, %312, %cst_94 {dimension_numbers = #tpu.dot_dimension_numbers<[2], [1], [1], [2], [0, 0, 0, 1, 1, 2], [0], [0]>} : vector<1x16x16xf32>, vector<1x16x8xf32>, vector<1x16x8xf32> -> vector<1x16x8xf32>
    "tpu.trace_stop"() : () -> ()
    %314 = vector.extract_strided_slice %232 {offsets = [0, 0, 16], sizes = [1, 16, 8], strides = [1, 1, 1]} : vector<1x16x32xf32> to vector<1x16x8xf32>
    %315 = vector.extract_strided_slice %237 {offsets = [0, 0, 16], sizes = [1, 16, 8], strides = [1, 1, 1]} : vector<1x16x32xf32> to vector<1x16x8xf32>
    "tpu.trace_start"() <{level = 10 : i32, message = "bqd,bkd->bqk"}> : () -> ()
    %cst_95 = arith.constant dense<0.000000e+00> : vector<1x16x16xf32>
    %316 = tpu.matmul %314, %315, %cst_95 {dimension_numbers = #tpu.dot_dimension_numbers<[2], [2], [1], [1], [0, 0, 0, 1, 1, 1], [0], [0]>} : vector<1x16x8xf32>, vector<1x16x8xf32>, vector<1x16x16xf32> -> vector<1x16x16xf32>
    "tpu.trace_stop"() : () -> ()
    %cst_96 = arith.constant 0.353553385 : f32
    %317 = vector.broadcast %cst_96 : f32 to vector<1x16x16xf32>
    %318 = arith.mulf %316, %317 : vector<1x16x16xf32>
    %319 = vector.broadcast %5 : vector<1x1x16xf32> to vector<1x16x16xf32>
    %320 = arith.addf %318, %319 : vector<1x16x16xf32>
    %cst_97 = arith.constant dense<0xFF800000> : vector<1x16xf32>
    %321 = vector.multi_reduction <maximumf>, %320, %cst_97 [2] : vector<1x16x16xf32> to vector<1x16xf32>
    %cst_98 = arith.constant 0xFF800000 : f32
    %322 = vector.broadcast %cst_98 : f32 to vector<1x16xf32>
    %323 = arith.maximumf %322, %321 : vector<1x16xf32>
    %324 = vector.shape_cast %323 : vector<1x16xf32> to vector<1x16x1xf32>
    %325 = vector.broadcast %324 : vector<1x16x1xf32> to vector<1x16x16xf32>
    %326 = arith.subf %320, %325 : vector<1x16x16xf32>
    %327 = math.exp %326 : vector<1x16x16xf32>
    %cst_99 = arith.constant dense<0.000000e+00> : vector<1x16xf32>
    %328 = vector.multi_reduction <add>, %327, %cst_99 [2] : vector<1x16x16xf32> to vector<1x16xf32>
    %329 = vector.shape_cast %328 : vector<1x16xf32> to vector<1x16x1xf32>
    %330 = vector.broadcast %329 : vector<1x16x1xf32> to vector<1x16x16xf32>
    %331 = arith.divf %327, %330 : vector<1x16x16xf32>
    %332 = vector.extract_strided_slice %242 {offsets = [0, 0, 16], sizes = [1, 16, 8], strides = [1, 1, 1]} : vector<1x16x32xf32> to vector<1x16x8xf32>
    "tpu.trace_start"() <{level = 10 : i32, message = "bqk,bkd->bqd"}> : () -> ()
    %cst_100 = arith.constant dense<0.000000e+00> : vector<1x16x8xf32>
    %333 = tpu.matmul %331, %332, %cst_100 {dimension_numbers = #tpu.dot_dimension_numbers<[2], [1], [1], [2], [0, 0, 0, 1, 1, 2], [0], [0]>} : vector<1x16x16xf32>, vector<1x16x8xf32>, vector<1x16x8xf32> -> vector<1x16x8xf32>
    "tpu.trace_stop"() : () -> ()
    %334 = vector.extract_strided_slice %232 {offsets = [0, 0, 24], sizes = [1, 16, 8], strides = [1, 1, 1]} : vector<1x16x32xf32> to vector<1x16x8xf32>
    %335 = vector.extract_strided_slice %237 {offsets = [0, 0, 24], sizes = [1, 16, 8], strides = [1, 1, 1]} : vector<1x16x32xf32> to vector<1x16x8xf32>
    "tpu.trace_start"() <{level = 10 : i32, message = "bqd,bkd->bqk"}> : () -> ()
    %cst_101 = arith.constant dense<0.000000e+00> : vector<1x16x16xf32>
    %336 = tpu.matmul %334, %335, %cst_101 {dimension_numbers = #tpu.dot_dimension_numbers<[2], [2], [1], [1], [0, 0, 0, 1, 1, 1], [0], [0]>} : vector<1x16x8xf32>, vector<1x16x8xf32>, vector<1x16x16xf32> -> vector<1x16x16xf32>
    "tpu.trace_stop"() : () -> ()
    %cst_102 = arith.constant 0.353553385 : f32
    %337 = vector.broadcast %cst_102 : f32 to vector<1x16x16xf32>
    %338 = arith.mulf %336, %337 : vector<1x16x16xf32>
    %339 = vector.broadcast %5 : vector<1x1x16xf32> to vector<1x16x16xf32>
    %340 = arith.addf %338, %339 : vector<1x16x16xf32>
    %cst_103 = arith.constant dense<0xFF800000> : vector<1x16xf32>
    %341 = vector.multi_reduction <maximumf>, %340, %cst_103 [2] : vector<1x16x16xf32> to vector<1x16xf32>
    %cst_104 = arith.constant 0xFF800000 : f32
    %342 = vector.broadcast %cst_104 : f32 to vector<1x16xf32>
    %343 = arith.maximumf %342, %341 : vector<1x16xf32>
    %344 = vector.shape_cast %343 : vector<1x16xf32> to vector<1x16x1xf32>
    %345 = vector.broadcast %344 : vector<1x16x1xf32> to vector<1x16x16xf32>
    %346 = arith.subf %340, %345 : vector<1x16x16xf32>
    %347 = math.exp %346 : vector<1x16x16xf32>
    %cst_105 = arith.constant dense<0.000000e+00> : vector<1x16xf32>
    %348 = vector.multi_reduction <add>, %347, %cst_105 [2] : vector<1x16x16xf32> to vector<1x16xf32>
    %349 = vector.shape_cast %348 : vector<1x16xf32> to vector<1x16x1xf32>
    %350 = vector.broadcast %349 : vector<1x16x1xf32> to vector<1x16x16xf32>
    %351 = arith.divf %347, %350 : vector<1x16x16xf32>
    %352 = vector.extract_strided_slice %242 {offsets = [0, 0, 24], sizes = [1, 16, 8], strides = [1, 1, 1]} : vector<1x16x32xf32> to vector<1x16x8xf32>
    "tpu.trace_start"() <{level = 10 : i32, message = "bqk,bkd->bqd"}> : () -> ()
    %cst_106 = arith.constant dense<0.000000e+00> : vector<1x16x8xf32>
    %353 = tpu.matmul %351, %352, %cst_106 {dimension_numbers = #tpu.dot_dimension_numbers<[2], [1], [1], [2], [0, 0, 0, 1, 1, 2], [0], [0]>} : vector<1x16x16xf32>, vector<1x16x8xf32>, vector<1x16x8xf32> -> vector<1x16x8xf32>
    "tpu.trace_stop"() : () -> ()
    %354 = tpu.concatenate %293, %313, %333, %353 in 2 : vector<1x16x8xf32>, vector<1x16x8xf32>, vector<1x16x8xf32>, vector<1x16x8xf32> -> vector<1x16x32xf32>
    %355 = vector.shape_cast %354 : vector<1x16x32xf32> to vector<16x32xf32>
    %356 = vector.extract_strided_slice %220 {offsets = [0, 128], sizes = [32, 32], strides = [1, 1]} : vector<32x224xf32> to vector<32x32xf32>
    %cst_107 = arith.constant dense<0.000000e+00> : vector<16x32xf32>
    %357 = tpu.matmul %355, %356, %cst_107 {dimension_numbers = #tpu.dot_dimension_numbers<[1], [0], [0], [1], [0, 0, 1, 1], [], []>} : vector<16x32xf32>, vector<32x32xf32>, vector<16x32xf32> -> vector<16x32xf32>
    %358 = vector.extract_strided_slice %224 {offsets = [4, 0], sizes = [1, 32], strides = [1, 1]} : vector<14x32xf32> to vector<1x32xf32>
    %359 = vector.broadcast %358 : vector<1x32xf32> to vector<16x32xf32>
    %360 = arith.addf %357, %359 : vector<16x32xf32>
    %361 = arith.addf %218, %360 : vector<16x32xf32>
    %362 = vector.extract_strided_slice %224 {offsets = [10, 0], sizes = [1, 32], strides = [1, 1]} : vector<14x32xf32> to vector<1x32xf32>
    %363 = vector.extract_strided_slice %224 {offsets = [11, 0], sizes = [1, 32], strides = [1, 1]} : vector<14x32xf32> to vector<1x32xf32>
    %cst_108 = arith.constant dense<0.000000e+00> : vector<16xf32>
    %364 = vector.multi_reduction <add>, %361, %cst_108 [1] : vector<16x32xf32> to vector<16xf32>
    %365 = vector.shape_cast %364 : vector<16xf32> to vector<16x1xf32>
    %cst_109 = arith.constant 3.200000e+01 : f32
    %366 = vector.broadcast %cst_109 : f32 to vector<16x1xf32>
    %367 = arith.divf %365, %366 : vector<16x1xf32>
    %368 = vector.broadcast %367 : vector<16x1xf32> to vector<16x32xf32>
    %369 = arith.subf %361, %368 : vector<16x32xf32>
    %370 = arith.mulf %369, %369 : vector<16x32xf32>
    %cst_110 = arith.constant dense<0.000000e+00> : vector<16xf32>
    %371 = vector.multi_reduction <add>, %370, %cst_110 [1] : vector<16x32xf32> to vector<16xf32>
    %372 = vector.shape_cast %371 : vector<16xf32> to vector<16x1xf32>
    %cst_111 = arith.constant 3.200000e+01 : f32
    %373 = vector.broadcast %cst_111 : f32 to vector<16x1xf32>
    %374 = arith.divf %372, %373 : vector<16x1xf32>
    %375 = vector.broadcast %367 : vector<16x1xf32> to vector<16x32xf32>
    %376 = arith.subf %361, %375 : vector<16x32xf32>
    %cst_112 = arith.constant 9.99999974E-6 : f32
    %377 = vector.broadcast %cst_112 : f32 to vector<16x1xf32>
    %378 = arith.addf %374, %377 : vector<16x1xf32>
    %379 = math.rsqrt %378 : vector<16x1xf32>
    %380 = vector.broadcast %379 : vector<16x1xf32> to vector<16x32xf32>
    %381 = arith.mulf %376, %380 : vector<16x32xf32>
    %382 = vector.broadcast %362 : vector<1x32xf32> to vector<16x32xf32>
    %383 = arith.mulf %381, %382 : vector<16x32xf32>
    %384 = vector.broadcast %363 : vector<1x32xf32> to vector<16x32xf32>
    %385 = arith.addf %383, %384 : vector<16x32xf32>
    %386 = arith.addf %273, %385 : vector<16x32xf32>
    %387 = vector.extract_strided_slice %224 {offsets = [6, 0], sizes = [1, 32], strides = [1, 1]} : vector<14x32xf32> to vector<1x32xf32>
    %388 = vector.extract_strided_slice %224 {offsets = [7, 0], sizes = [1, 32], strides = [1, 1]} : vector<14x32xf32> to vector<1x32xf32>
    %389 = tpu.concatenate %387, %388 in 1 : vector<1x32xf32>, vector<1x32xf32> -> vector<1x64xf32>
    %390 = vector.extract_strided_slice %220 {offsets = [0, 160], sizes = [32, 64], strides = [1, 1]} : vector<32x224xf32> to vector<32x64xf32>
    %cst_113 = arith.constant dense<0.000000e+00> : vector<16x64xf32>
    %391 = tpu.matmul %386, %390, %cst_113 {dimension_numbers = #tpu.dot_dimension_numbers<[1], [0], [0], [1], [0, 0, 1, 1], [], []>} : vector<16x32xf32>, vector<32x64xf32>, vector<16x64xf32> -> vector<16x64xf32>
    %392 = vector.broadcast %389 : vector<1x64xf32> to vector<16x64xf32>
    %393 = arith.addf %391, %392 : vector<16x64xf32>
    %cst_114 = arith.constant 0.000000e+00 : f32
    %394 = vector.broadcast %cst_114 : f32 to vector<16x64xf32>
    %395 = arith.maximumf %393, %394 : vector<16x64xf32>
    %cst_115 = arith.constant dense<0.000000e+00> : vector<16x32xf32>
    %396 = tpu.matmul %395, %222, %cst_115 {dimension_numbers = #tpu.dot_dimension_numbers<[1], [0], [0], [1], [0, 0, 1, 1], [], []>} : vector<16x64xf32>, vector<64x32xf32>, vector<16x32xf32> -> vector<16x32xf32>
    %397 = vector.extract_strided_slice %224 {offsets = [5, 0], sizes = [1, 32], strides = [1, 1]} : vector<14x32xf32> to vector<1x32xf32>
    %398 = vector.broadcast %397 : vector<1x32xf32> to vector<16x32xf32>
    %399 = arith.addf %396, %398 : vector<16x32xf32>
    %400 = arith.addf %386, %399 : vector<16x32xf32>
    %401 = vector.extract_strided_slice %224 {offsets = [12, 0], sizes = [1, 32], strides = [1, 1]} : vector<14x32xf32> to vector<1x32xf32>
    %402 = vector.extract_strided_slice %224 {offsets = [13, 0], sizes = [1, 32], strides = [1, 1]} : vector<14x32xf32> to vector<1x32xf32>
    %cst_116 = arith.constant dense<0.000000e+00> : vector<16xf32>
    %403 = vector.multi_reduction <add>, %400, %cst_116 [1] : vector<16x32xf32> to vector<16xf32>
    %404 = vector.shape_cast %403 : vector<16xf32> to vector<16x1xf32>
    %cst_117 = arith.constant 3.200000e+01 : f32
    %405 = vector.broadcast %cst_117 : f32 to vector<16x1xf32>
    %406 = arith.divf %404, %405 : vector<16x1xf32>
    %407 = vector.broadcast %406 : vector<16x1xf32> to vector<16x32xf32>
    %408 = arith.subf %400, %407 : vector<16x32xf32>
    %409 = arith.mulf %408, %408 : vector<16x32xf32>
    %cst_118 = arith.constant dense<0.000000e+00> : vector<16xf32>
    %410 = vector.multi_reduction <add>, %409, %cst_118 [1] : vector<16x32xf32> to vector<16xf32>
    %411 = vector.shape_cast %410 : vector<16xf32> to vector<16x1xf32>
    %cst_119 = arith.constant 3.200000e+01 : f32
    %412 = vector.broadcast %cst_119 : f32 to vector<16x1xf32>
    %413 = arith.divf %411, %412 : vector<16x1xf32>
    %414 = vector.broadcast %406 : vector<16x1xf32> to vector<16x32xf32>
    %415 = arith.subf %400, %414 : vector<16x32xf32>
    %cst_120 = arith.constant 9.99999974E-6 : f32
    %416 = vector.broadcast %cst_120 : f32 to vector<16x1xf32>
    %417 = arith.addf %413, %416 : vector<16x1xf32>
    %418 = math.rsqrt %417 : vector<16x1xf32>
    %419 = vector.broadcast %418 : vector<16x1xf32> to vector<16x32xf32>
    %420 = arith.mulf %415, %419 : vector<16x32xf32>
    %421 = vector.broadcast %401 : vector<1x32xf32> to vector<16x32xf32>
    %422 = arith.mulf %420, %421 : vector<16x32xf32>
    %423 = vector.broadcast %402 : vector<1x32xf32> to vector<16x32xf32>
    %424 = arith.addf %422, %423 : vector<16x32xf32>
    %425 = tpu.transpose %1, [0, 2, 1] : vector<1x1x16xf32> -> vector<1x16x1xf32>
    %426 = vector.shape_cast %424 : vector<16x32xf32> to vector<1x16x32xf32>
    %cst_121 = arith.constant dense<0.000000e+00> : vector<1x1xf32>
    %427 = vector.multi_reduction <add>, %425, %cst_121 [1] : vector<1x16x1xf32> to vector<1x1xf32>
    %cst_122 = arith.constant 1.000000e+00 : f32
    %428 = vector.broadcast %cst_122 : f32 to vector<1x1xf32>
    %429 = arith.maximumf %427, %428 : vector<1x1xf32>
    %430 = vector.broadcast %425 : vector<1x16x1xf32> to vector<1x16x32xf32>
    %431 = arith.mulf %426, %430 : vector<1x16x32xf32>
    %cst_123 = arith.constant dense<0.000000e+00> : vector<1x32xf32>
    %432 = vector.multi_reduction <add>, %431, %cst_123 [1] : vector<1x16x32xf32> to vector<1x32xf32>
    %433 = vector.broadcast %429 : vector<1x1xf32> to vector<1x32xf32>
    %434 = arith.divf %432, %433 : vector<1x32xf32>
    %c0_124 = arith.constant 0 : index
    %c0_125 = arith.constant 0 : index
    %435 = vector.load %arg9[%c0_124, %c0_125] : memref<32x3xf32, #tpu.memory_space<vmem>>, vector<32x3xf32>
    %cst_126 = arith.constant dense<0.000000e+00> : vector<1x3xf32>
    %436 = tpu.matmul %434, %435, %cst_126 {dimension_numbers = #tpu.dot_dimension_numbers<[1], [0], [0], [1], [0, 0, 1, 1], [], []>} : vector<1x32xf32>, vector<32x3xf32>, vector<1x3xf32> -> vector<1x3xf32>
    %c0_127 = arith.constant 0 : index
    %c0_128 = arith.constant 0 : index
    %437 = vector.load %arg10[%c0_127, %c0_128] : memref<1x3xf32, #tpu.memory_space<vmem>>, vector<1x3xf32>
    %438 = arith.addf %436, %437 : vector<1x3xf32>
    %439 = vector.shape_cast %438 : vector<1x3xf32> to vector<1x1x3xf32>
    %c0_129 = arith.constant 0 : index
    %c0_130 = arith.constant 0 : index
    %c0_131 = arith.constant 0 : index
    %440 = vector.load %arg11[%c0_129, %c0_130, %c0_131] : memref<1x1x3xf32, #tpu.memory_space<vmem>>, vector<1x1x3xf32>
    tpu.vector_store %arg11[%c0_129, %c0_130, %c0_131], %439 {strides = array<i32>} : memref<1x1x3xf32, #tpu.memory_space<vmem>>, vector<1x1x3xf32>,
    return
  }
  func.func @transform_0(%arg0: i32) -> (i32, i32, i32) {
    %c0_i32 = arith.constant 0 : i32
    %c0_i32_0 = arith.constant 0 : i32
    %c0_i32_1 = arith.constant 0 : i32
    return %arg0, %c0_i32, %c0_i32_0 : i32, i32, i32
  }
  func.func @transform_1(%arg0: i32) -> (i32, i32, i32) {
    %c0_i32 = arith.constant 0 : i32
    %c0_i32_0 = arith.constant 0 : i32
    %c0_i32_1 = arith.constant 0 : i32
    return %arg0, %c0_i32, %c0_i32_0 : i32, i32, i32
  }
  func.func @transform_2(%arg0: i32) -> (i32, i32, i32) {
    %c0_i32 = arith.constant 0 : i32
    %c0_i32_0 = arith.constant 0 : i32
    %c0_i32_1 = arith.constant 0 : i32
    return %arg0, %c0_i32, %c0_i32_0 : i32, i32, i32
  }
  func.func @transform_3(%arg0: i32) -> (i32, i32) {
    %c0_i32 = arith.constant 0 : i32
    %c0_i32_0 = arith.constant 0 : i32
    %c0_i32_1 = arith.constant 0 : i32
    return %c0_i32, %c0_i32_0 : i32, i32
  }
  func.func @transform_4(%arg0: i32) -> (i32, i32) {
    %c0_i32 = arith.constant 0 : i32
    %c0_i32_0 = arith.constant 0 : i32
    %c0_i32_1 = arith.constant 0 : i32
    return %c0_i32, %c0_i32_0 : i32, i32
  }
  func.func @transform_5(%arg0: i32) -> (i32, i32, i32) {
    %c0_i32 = arith.constant 0 : i32
    %c0_i32_0 = arith.constant 0 : i32
    %c0_i32_1 = arith.constant 0 : i32
    %c0_i32_2 = arith.constant 0 : i32
    return %c0_i32, %c0_i32_0, %c0_i32_1 : i32, i32, i32
  }
  func.func @transform_6(%arg0: i32) -> (i32, i32, i32) {
    %c0_i32 = arith.constant 0 : i32
    %c0_i32_0 = arith.constant 0 : i32
    %c0_i32_1 = arith.constant 0 : i32
    %c0_i32_2 = arith.constant 0 : i32
    return %c0_i32, %c0_i32_0, %c0_i32_1 : i32, i32, i32
  }
  func.func @transform_7(%arg0: i32) -> (i32, i32, i32) {
    %c0_i32 = arith.constant 0 : i32
    %c0_i32_0 = arith.constant 0 : i32
    %c0_i32_1 = arith.constant 0 : i32
    %c0_i32_2 = arith.constant 0 : i32
    return %c0_i32, %c0_i32_0, %c0_i32_1 : i32, i32, i32
  }
  func.func @transform_8(%arg0: i32) -> (i32, i32) {
    %c0_i32 = arith.constant 0 : i32
    %c0_i32_0 = arith.constant 0 : i32
    %c0_i32_1 = arith.constant 0 : i32
    return %c0_i32, %c0_i32_0 : i32, i32
  }
  func.func @transform_9(%arg0: i32) -> (i32, i32) {
    %c0_i32 = arith.constant 0 : i32
    %c0_i32_0 = arith.constant 0 : i32
    %c0_i32_1 = arith.constant 0 : i32
    return %c0_i32, %c0_i32_0 : i32, i32
  }
  func.func @transform_10(%arg0: i32) -> (i32, i32, i32) {
    %c0_i32 = arith.constant 0 : i32
    %c0_i32_0 = arith.constant 0 : i32
    %c0_i32_1 = arith.constant 0 : i32
    return %arg0, %c0_i32, %c0_i32_0 : i32, i32, i32
  }
}

</mosaic_0001>

<llo_original>
// kernel: tpu_custom_call.1
$region0: #{tpu_custom_call.1}
  #allocation0 [shape = 'u32[]', space=smem, size = 0x4, offset = 0x4, fixed_abs, tag = 'smem constant byte address 0x4 - core index']
  #allocation1 [shape = 'u32[144,128]{1,0:T(1,128)}', space=vmem, size = 0x12000, scoped, tag = 'internal scratch']
  %s0 = inlined_call_operand.vmem [shape: f32[2,16,4], index: 0, kind: input, shape index: {}]
  %s1 = inlined_call_operand.vmem [shape: f32[2,16,16], index: 1, kind: input, shape index: {}]
  %s2 = inlined_call_operand.vmem [shape: f32[2,1,16], index: 2, kind: input, shape index: {}]
  %s3 = inlined_call_operand.vmem [shape: f32[4,32], index: 3, kind: input, shape index: {}]
  %s4 = inlined_call_operand.vmem [shape: f32[1,32], index: 4, kind: input, shape index: {}]
  %s5 = inlined_call_operand.vmem [shape: f32[2,32,224], index: 5, kind: input, shape index: {}]
  %s6 = inlined_call_operand.vmem [shape: f32[2,64,32], index: 6, kind: input, shape index: {}]
  %s7 = inlined_call_operand.vmem [shape: f32[2,14,32], index: 7, kind: input, shape index: {}]
  %s8 = inlined_call_operand.vmem [shape: f32[32,3], index: 8, kind: input, shape index: {}]
  %s9 = inlined_call_operand.vmem [shape: f32[1,3], index: 9, kind: input, shape index: {}]
  %s10 = inlined_call_operand.hbm [shape: f32[2,1,3], index: 10, kind: output, shape index: {}]
  %s11 = sld [smem:[#allocation0]]
  $region73: #{tpu_custom_call.1} parent=0
    _
  %s13 = ssub.s32 1, %s11
  %s14 = scalar_select 0, %s13, %s11
  $region1: #{tpu_custom_call.1} parent=0
    #allocation2 [shape = 'u8[1024]{0}', space=vmem, size = 0x400, scoped, tag = 'output window, operand 0']
    #allocation3 [shape = 's32[2]{0}', space=sflag, size = 0x8, scoped, tag = 'scoped memory for tpu_custom_call.1']
    %15 = vsyncpa [#allocation3], 0
    %s16 = scalar_lea.sflag [#allocation3], 1
    %17 = vsyncpa %s16, 0
    loop: start=0, step=1, limit=4
    $region2: #{tpu_custom_call.1} parent=1 // loop_pre_header
      _
    $region3: #{tpu_custom_call.1} parent=1 // loop_header
      %s19 = sphi 0, %s23
      %p20 = scmp.ge.s32.totalorder %s19, 4
      %s29 = sphi 0, %s31
      %s32 = sphi 0, %s29
      %s33 = sphi 0, %s32
      %s49 = sphi 0, %s33
      %s55 = sphi 0, %s57
      %s58 = sphi 0, %s55
      %s59 = sphi 0, %s58
      %s75 = sphi 0, %s59
      %s81 = sphi 0, %s83
      %s84 = sphi 0, %s81
      %s85 = sphi 0, %s84
      %s101 = sphi 0, %s85
      %s105 = sphi 0, %s105
      %s107 = sphi 0, %s105
      %s108 = sphi 0, %s107
      %s122 = sphi 0, %s108
      %s126 = sphi 0, %s126
      %s128 = sphi 0, %s126
      %s129 = sphi 0, %s128
      %s143 = sphi 0, %s129
      %s147 = sphi 0, %s147
      %s149 = sphi 0, %s147
      %s150 = sphi 0, %s149
      %s164 = sphi 0, %s150
      %s168 = sphi 0, %s168
      %s170 = sphi 0, %s168
      %s171 = sphi 0, %s170
      %s185 = sphi 0, %s171
      %s189 = sphi 0, %s189
      %s191 = sphi 0, %s189
      %s192 = sphi 0, %s191
      %s206 = sphi 0, %s192
      %s210 = sphi 0, %s210
      %s212 = sphi 0, %s210
      %s213 = sphi 0, %s212
      %s227 = sphi 0, %s213
      %s231 = sphi 0, %s231
      %s233 = sphi 0, %s231
      %s234 = sphi 0, %s233
      %s248 = sphi 0, %s234
      %s254 = sphi 0, %s256
      %s257 = sphi 0, %s254
      %s258 = sphi 0, %s257
      %s274 = sphi 0, %s258
    $region4: #{tpu_custom_call.1} parent=1 // loop_header_branch
      %22 = sbr.rel (%p20) target = $region8
    $region5: #{tpu_custom_call.1} parent=1 // loop_body
      %s24 = ssub.s32 %s19, 1
      %s25 = ssub.s32 %s19, 2
      %s26 = sadd.s32 %s19, 1
      %s27 = ssub.s32 %s19, %s26
      %p28 = scmp.eq.s32.totalorder %s27, 0
      %s30 = sadd.s32 %s29, 1
      %s31 = scalar_select %p28, %s29, %s30
      %p34 = pneg %p28
      %p35 = scmp.eq.s32.totalorder %s19, 1
      %p36 = por %p34, %p35
      %p37 = scmp.ne.s32.totalorder %s29, %s32
      %p38 = scmp.eq.s32.totalorder %s19, 0
      %p39 = por %p37, %p38
      %p40 = scmp.ne.s32.totalorder %s29, %s32
      %p41 = scmp.eq.s32.totalorder %s24, 1
      %p42 = por %p40, %p41
      %p43 = scmp.ne.s32.totalorder %s32, %s33
      %p44 = scmp.eq.s32.totalorder %s24, 0
      %p45 = por %p43, %p44
      %p46 = scmp.ne.s32.totalorder %s32, %s33
      %p47 = scmp.eq.s32.totalorder %s25, 1
      %p48 = por %p46, %p47
      %p50 = scmp.ne.s32.totalorder %s33, %s49
      %p51 = scmp.eq.s32.totalorder %s25, 0
      %p52 = por %p50, %p51
      %s53 = ssub.s32 %s19, %s26
      %p54 = scmp.eq.s32.totalorder %s53, 0
      %s56 = sadd.s32 %s55, 1
      %s57 = scalar_select %p54, %s55, %s56
      %p60 = pneg %p54
      %p61 = scmp.eq.s32.totalorder %s19, 1
      %p62 = por %p60, %p61
      %p63 = scmp.ne.s32.totalorder %s55, %s58
      %p64 = scmp.eq.s32.totalorder %s19, 0
      %p65 = por %p63, %p64
      %p66 = scmp.ne.s32.totalorder %s55, %s58
      %p67 = scmp.eq.s32.totalorder %s24, 1
      %p68 = por %p66, %p67
      %p69 = scmp.ne.s32.totalorder %s58, %s59
      %p70 = scmp.eq.s32.totalorder %s24, 0
      %p71 = por %p69, %p70
      %p72 = scmp.ne.s32.totalorder %s58, %s59
      %p73 = scmp.eq.s32.totalorder %s25, 1
      %p74 = por %p72, %p73
      %p76 = scmp.ne.s32.totalorder %s59, %s75
      %p77 = scmp.eq.s32.totalorder %s25, 0
      %p78 = por %p76, %p77
      %s79 = ssub.s32 %s19, %s26
      %p80 = scmp.eq.s32.totalorder %s79, 0
      %s82 = sadd.s32 %s81, 1
      %s83 = scalar_select %p80, %s81, %s82
      %p86 = pneg %p80
      %p87 = scmp.eq.s32.totalorder %s19, 1
      %p88 = por %p86, %p87
      %p89 = scmp.ne.s32.totalorder %s81, %s84
      %p90 = scmp.eq.s32.totalorder %s19, 0
      %p91 = por %p89, %p90
      %p92 = scmp.ne.s32.totalorder %s81, %s84
      %p93 = scmp.eq.s32.totalorder %s24, 1
      %p94 = por %p92, %p93
      %p95 = scmp.ne.s32.totalorder %s84, %s85
      %p96 = scmp.eq.s32.totalorder %s24, 0
      %p97 = por %p95, %p96
      %p98 = scmp.ne.s32.totalorder %s84, %s85
      %p99 = scmp.eq.s32.totalorder %s25, 1
      %p100 = por %p98, %p99
      %p102 = scmp.ne.s32.totalorder %s85, %s101
      %p103 = scmp.eq.s32.totalorder %s25, 0
      %p104 = por %p102, %p103
      %s106 = sadd.s32 %s105, 1
      %p109 = scmp.eq.s32.totalorder %s19, 1
      %p110 = scmp.ne.s32.totalorder %s105, %s107
      %p111 = scmp.eq.s32.totalorder %s19, 0
      %p112 = por %p110, %p111
      %p113 = scmp.ne.s32.totalorder %s105, %s107
      %p114 = scmp.eq.s32.totalorder %s24, 1
      %p115 = por %p113, %p114
      %p116 = scmp.ne.s32.totalorder %s107, %s108
      %p117 = scmp.eq.s32.totalorder %s24, 0
      %p118 = por %p116, %p117
      %p119 = scmp.ne.s32.totalorder %s107, %s108
      %p120 = scmp.eq.s32.totalorder %s25, 1
      %p121 = por %p119, %p120
      %p123 = scmp.ne.s32.totalorder %s108, %s122
      %p124 = scmp.eq.s32.totalorder %s25, 0
      %p125 = por %p123, %p124
      %s127 = sadd.s32 %s126, 1
      %p130 = scmp.eq.s32.totalorder %s19, 1
      %p131 = scmp.ne.s32.totalorder %s126, %s128
      %p132 = scmp.eq.s32.totalorder %s19, 0
      %p133 = por %p131, %p132
      %p134 = scmp.ne.s32.totalorder %s126, %s128
      %p135 = scmp.eq.s32.totalorder %s24, 1
      %p136 = por %p134, %p135
      %p137 = scmp.ne.s32.totalorder %s128, %s129
      %p138 = scmp.eq.s32.totalorder %s24, 0
      %p139 = por %p137, %p138
      %p140 = scmp.ne.s32.totalorder %s128, %s129
      %p141 = scmp.eq.s32.totalorder %s25, 1
      %p142 = por %p140, %p141
      %p144 = scmp.ne.s32.totalorder %s129, %s143
      %p145 = scmp.eq.s32.totalorder %s25, 0
      %p146 = por %p144, %p145
      %s148 = sadd.s32 %s147, 1
      %p151 = scmp.eq.s32.totalorder %s19, 1
      %p152 = scmp.ne.s32.totalorder %s147, %s149
      %p153 = scmp.eq.s32.totalorder %s19, 0
      %p154 = por %p152, %p153
      %p155 = scmp.ne.s32.totalorder %s147, %s149
      %p156 = scmp.eq.s32.totalorder %s24, 1
      %p157 = por %p155, %p156
      %p158 = scmp.ne.s32.totalorder %s149, %s150
      %p159 = scmp.eq.s32.totalorder %s24, 0
      %p160 = por %p158, %p159
      %p161 = scmp.ne.s32.totalorder %s149, %s150
      %p162 = scmp.eq.s32.totalorder %s25, 1
      %p163 = por %p161, %p162
      %p165 = scmp.ne.s32.totalorder %s150, %s164
      %p166 = scmp.eq.s32.totalorder %s25, 0
      %p167 = por %p165, %p166
      %s169 = sadd.s32 %s168, 1
      %p172 = scmp.eq.s32.totalorder %s19, 1
      %p173 = scmp.ne.s32.totalorder %s168, %s170
      %p174 = scmp.eq.s32.totalorder %s19, 0
      %p175 = por %p173, %p174
      %p176 = scmp.ne.s32.totalorder %s168, %s170
      %p177 = scmp.eq.s32.totalorder %s24, 1
      %p178 = por %p176, %p177
      %p179 = scmp.ne.s32.totalorder %s170, %s171
      %p180 = scmp.eq.s32.totalorder %s24, 0
      %p181 = por %p179, %p180
      %p182 = scmp.ne.s32.totalorder %s170, %s171
      %p183 = scmp.eq.s32.totalorder %s25, 1
      %p184 = por %p182, %p183
      %p186 = scmp.ne.s32.totalorder %s171, %s185
      %p187 = scmp.eq.s32.totalorder %s25, 0
      %p188 = por %p186, %p187
      %s190 = sadd.s32 %s189, 1
      %p193 = scmp.eq.s32.totalorder %s19, 1
      %p194 = scmp.ne.s32.totalorder %s189, %s191
      %p195 = scmp.eq.s32.totalorder %s19, 0
      %p196 = por %p194, %p195
      %p197 = scmp.ne.s32.totalorder %s189, %s191
      %p198 = scmp.eq.s32.totalorder %s24, 1
      %p199 = por %p197, %p198
      %p200 = scmp.ne.s32.totalorder %s191, %s192
      %p201 = scmp.eq.s32.totalorder %s24, 0
      %p202 = por %p200, %p201
      %p203 = scmp.ne.s32.totalorder %s191, %s192
      %p204 = scmp.eq.s32.totalorder %s25, 1
      %p205 = por %p203, %p204
      %p207 = scmp.ne.s32.totalorder %s192, %s206
      %p208 = scmp.eq.s32.totalorder %s25, 0
      %p209 = por %p207, %p208
      %s211 = sadd.s32 %s210, 1
      %p214 = scmp.eq.s32.totalorder %s19, 1
      %p215 = scmp.ne.s32.totalorder %s210, %s212
      %p216 = scmp.eq.s32.totalorder %s19, 0
      %p217 = por %p215, %p216
      %p218 = scmp.ne.s32.totalorder %s210, %s212
      %p219 = scmp.eq.s32.totalorder %s24, 1
      %p220 = por %p218, %p219
      %p221 = scmp.ne.s32.totalorder %s212, %s213
      %p222 = scmp.eq.s32.totalorder %s24, 0
      %p223 = por %p221, %p222
      %p224 = scmp.ne.s32.totalorder %s212, %s213
      %p225 = scmp.eq.s32.totalorder %s25, 1
      %p226 = por %p224, %p225
      %p228 = scmp.ne.s32.totalorder %s213, %s227
      %p229 = scmp.eq.s32.totalorder %s25, 0
      %p230 = por %p228, %p229
      %s232 = sadd.s32 %s231, 1
      %p235 = scmp.eq.s32.totalorder %s19, 1
      %p236 = scmp.ne.s32.totalorder %s231, %s233
      %p237 = scmp.eq.s32.totalorder %s19, 0
      %p238 = por %p236, %p237
      %p239 = scmp.ne.s32.totalorder %s231, %s233
      %p240 = scmp.eq.s32.totalorder %s24, 1
      %p241 = por %p239, %p240
      %p242 = scmp.ne.s32.totalorder %s233, %s234
      %p243 = scmp.eq.s32.totalorder %s24, 0
      %p244 = por %p242, %p243
      %p245 = scmp.ne.s32.totalorder %s233, %s234
      %p246 = scmp.eq.s32.totalorder %s25, 1
      %p247 = por %p245, %p246
      %p249 = scmp.ne.s32.totalorder %s234, %s248
      %p250 = scmp.eq.s32.totalorder %s25, 0
      %p251 = por %p249, %p250
      %s252 = ssub.s32 %s19, %s26
      %p253 = scmp.eq.s32.totalorder %s252, 0
      %s255 = sadd.s32 %s254, 1
      %s256 = scalar_select %p253, %s254, %s255
      %p259 = pneg %p253
      %p260 = scmp.eq.s32.totalorder %s19, 1
      %p261 = por %p259, %p260
      %p262 = scmp.ne.s32.totalorder %s254, %s257
      %p263 = scmp.eq.s32.totalorder %s19, 0
      %p264 = por %p262, %p263
      %p265 = scmp.ne.s32.totalorder %s254, %s257
      %p266 = scmp.eq.s32.totalorder %s24, 1
      %p267 = por %p265, %p266
      %p268 = scmp.ne.s32.totalorder %s257, %s258
      %p269 = scmp.eq.s32.totalorder %s24, 0
      %p270 = por %p268, %p269
      %p271 = scmp.ne.s32.totalorder %s257, %s258
      %p272 = scmp.eq.s32.totalorder %s25, 1
      %p273 = por %p271, %p272
      %p275 = scmp.ne.s32.totalorder %s258, %s274
      %p276 = scmp.eq.s32.totalorder %s25, 0
      %p277 = por %p275, %p276
      %p278 = scmp.le.s32.totalorder 1, %s19
      %p279 = scmp.lt.s32.totalorder %s19, 3
      %p280 = pnand %p278, %p279
      %p281 = pneg %p280
      // Predicated region
      $region9: #{tpu_custom_call.1} parent=5 // pred_check
        _
      $region10: #{tpu_custom_call.1} parent=5 // pred_check_branch
        %283 = sbr.rel (%p280) target = $region12
      $region11: #{tpu_custom_call.1} parent=5 // pred_region
        %s284 = ssub.s32 %s19, 1
        // Predicated region
        $region13: #{tpu_custom_call.1} parent=11 // pred_check
          %p285 = pneg %p118
        $region14: #{tpu_custom_call.1} parent=11 // pred_check_branch
          %287 = sbr.rel (%p285) target = $region16
        $region15: #{tpu_custom_call.1} parent=11 // pred_region
          _
        $region16: #{tpu_custom_call.1} parent=11 // pred_fallthru
          _
        // Predicated region
        $region17: #{tpu_custom_call.1} parent=11 // pred_check
          %p288 = pneg %p139
        $region18: #{tpu_custom_call.1} parent=11 // pred_check_branch
          %290 = sbr.rel (%p288) target = $region20
        $region19: #{tpu_custom_call.1} parent=11 // pred_region
          _
        $region20: #{tpu_custom_call.1} parent=11 // pred_fallthru
          _
        // Predicated region
        $region21: #{tpu_custom_call.1} parent=11 // pred_check
          %p291 = pneg %p160
        $region22: #{tpu_custom_call.1} parent=11 // pred_check_branch
          %293 = sbr.rel (%p291) target = $region24
        $region23: #{tpu_custom_call.1} parent=11 // pred_region
          _
        $region24: #{tpu_custom_call.1} parent=11 // pred_fallthru
          _
        // Predicated region
        $region25: #{tpu_custom_call.1} parent=11 // pred_check
          %p294 = pneg %p181
        $region26: #{tpu_custom_call.1} parent=11 // pred_check_branch
          %296 = sbr.rel (%p294) target = $region28
        $region27: #{tpu_custom_call.1} parent=11 // pred_region
          _
        $region28: #{tpu_custom_call.1} parent=11 // pred_fallthru
          _
        // Predicated region
        $region29: #{tpu_custom_call.1} parent=11 // pred_check
          %p297 = pneg %p202
        $region30: #{tpu_custom_call.1} parent=11 // pred_check_branch
          %299 = sbr.rel (%p297) target = $region32
        $region31: #{tpu_custom_call.1} parent=11 // pred_region
          _
        $region32: #{tpu_custom_call.1} parent=11 // pred_fallthru
          _
        // Predicated region
        $region33: #{tpu_custom_call.1} parent=11 // pred_check
          %p300 = pneg %p223
        $region34: #{tpu_custom_call.1} parent=11 // pred_check_branch
          %302 = sbr.rel (%p300) target = $region36
        $region35: #{tpu_custom_call.1} parent=11 // pred_region
          _
        $region36: #{tpu_custom_call.1} parent=11 // pred_fallthru
          _
        // Predicated region
        $region37: #{tpu_custom_call.1} parent=11 // pred_check
          %p303 = pneg %p244
        $region38: #{tpu_custom_call.1} parent=11 // pred_check_branch
          %305 = sbr.rel (%p303) target = $region40
        $region39: #{tpu_custom_call.1} parent=11 // pred_region
          _
        $region40: #{tpu_custom_call.1} parent=11 // pred_fallthru
          _
      $region12: #{tpu_custom_call.1} parent=5 // pred_fallthru
        _
      %p306 = scmp.lt.s32.totalorder %s19, 2
      // Predicated region
      $region41: #{tpu_custom_call.1} parent=5 // pred_check
        %p307 = pneg %p306
      $region42: #{tpu_custom_call.1} parent=5 // pred_check_branch
        %309 = sbr.rel (%p307) target = $region44
      $region43: #{tpu_custom_call.1} parent=5 // pred_region
        // Predicated region
        $region45: #{tpu_custom_call.1} parent=43 // pred_check
          %p310 = pneg %p39
        $region46: #{tpu_custom_call.1} parent=43 // pred_check_branch
          %312 = sbr.rel (%p310) target = $region48
        $region47: #{tpu_custom_call.1} parent=43 // pred_region
          %p313 = scmp.lt.s32.totalorder %s19, 1
          %s314 = scalar_select %p313, %s19, 1
          %s315 = smul.addr %s314, 2
          %s316 = smul.addr %s315, 8
          %s317 = scalar_lea.vmem %s0, %s316
        $region48: #{tpu_custom_call.1} parent=43 // pred_fallthru
          _
        // Predicated region
        $region49: #{tpu_custom_call.1} parent=43 // pred_check
          %p318 = pneg %p65
        $region50: #{tpu_custom_call.1} parent=43 // pred_check_branch
          %320 = sbr.rel (%p318) target = $region52
        $region51: #{tpu_custom_call.1} parent=43 // pred_region
          %p321 = scmp.lt.s32.totalorder %s19, 1
          %s322 = scalar_select %p321, %s19, 1
          %s323 = smul.addr %s322, 2
          %s324 = smul.addr %s323, 8
          %s325 = scalar_lea.vmem %s1, %s324
        $region52: #{tpu_custom_call.1} parent=43 // pred_fallthru
          _
        // Predicated region
        $region53: #{tpu_custom_call.1} parent=43 // pred_check
          %p326 = pneg %p91
        $region54: #{tpu_custom_call.1} parent=43 // pred_check_branch
          %328 = sbr.rel (%p326) target = $region56
        $region55: #{tpu_custom_call.1} parent=43 // pred_region
          %p329 = scmp.lt.s32.totalorder %s19, 1
          %s330 = scalar_select %p329, %s19, 1
          %s331 = scalar_lea.vmem %s2, %s330
        $region56: #{tpu_custom_call.1} parent=43 // pred_fallthru
          _
      $region44: #{tpu_custom_call.1} parent=5 // pred_fallthru
        _
      %p332 = scmp.le.s32.totalorder 1, %s19
      %p333 = scmp.lt.s32.totalorder %s19, 3
      %p334 = pnand %p332, %p333
      %p335 = pneg %p334
      // Predicated region
      $region57: #{tpu_custom_call.1} parent=5 // pred_check
        _
      $region58: #{tpu_custom_call.1} parent=5 // pred_check_branch
        %337 = sbr.rel (%p334) target = $region60
      $region59: #{tpu_custom_call.1} parent=5 // pred_region
        %s338 = ssub.s32 %s19, 1
        %p339 = scmp.lt.s32.totalorder %s24, 1
        %s340 = scalar_select %p339, %s24, 1
        %s341 = smul.addr %s340, 2
        %s342 = smul.addr %s341, 8
        %s343 = scalar_lea.vmem %s0, %s342
        %p344 = pneg %p45
        %p345 = pneg %p42
        %p346 = scmp.lt.s32.totalorder %s24, 1
        %s347 = scalar_select %p346, %s24, 1
        %s348 = smul.addr %s347, 2
        %s349 = smul.addr %s348, 8
        %s350 = scalar_lea.vmem %s1, %s349
        %p351 = pneg %p71
        %p352 = pneg %p68
        %p353 = scmp.lt.s32.totalorder %s24, 1
        %s354 = scalar_select %p353, %s24, 1
        %s355 = scalar_lea.vmem %s2, %s354
        %p356 = pneg %p97
        %p357 = pneg %p94
        %p358 = pneg %p118
        %p359 = pneg %p115
        %p360 = pneg %p139
        %p361 = pneg %p136
        %p362 = pneg %p160
        %p363 = pneg %p157
        %p364 = pneg %p181
        %p365 = pneg %p178
        %p366 = pneg %p202
        %p367 = pneg %p199
        %p368 = pneg %p223
        %p369 = pneg %p220
        %p370 = pneg %p244
        %p371 = pneg %p241
        %p372 = pneg %p270
        %p373 = pneg %p267
        %s374 = sand.u32 %s257, 1
        %s375 = scalar_lea.sflag [#allocation3], %s374
        %s376 = sand.u32 %s257, 1
        %s377 = scalar_lea.vmem [#allocation2], %s376
        %p378 = scmp.lt.s32.totalorder %s24, 1
        %s379 = scalar_select %p378, %s24, 1
        %s380 = smul.addr %s379, 2
        %s381 = smul.addr %s380, 8
        %s382 = scalar_lea.vmem %s0, %s381
        %p383 = scmp.lt.s32.totalorder %s24, 1
        %s384 = scalar_select %p383, %s24, 1
        %s385 = smul.addr %s384, 2
        %s386 = smul.addr %s385, 8
        %s387 = scalar_lea.vmem %s1, %s386
        %p388 = scmp.lt.s32.totalorder %s24, 1
        %s389 = scalar_select %p388, %s24, 1
        %s390 = scalar_lea.vmem %s2, %s389
        %v391 = vld [vmem:[%s387] sm:$0xff]
        %v392 = vld [vmem:[%s387 + $0x8] sm:$0xff]
        %v393 = vld [vmem:[%s390] sm:$0x1]
        %v394 = vsub.f32 %v393, 1.0
        %v395 = vmul.f32 %v394, 1e+09
        %v396 = vld [vmem:[%s382] sm:$0xff]
        %v397 = vld [vmem:[%s382 + $0x8] sm:$0xff]
        %v398 = vld [vmem:[%s3] sm:$0xf]
        %v399 = vld [vmem:[%s4] sm:$0x1]
        %v401 = vlaneseq
        %v402 = vshrl.u32 %v401, 7
        %v403 = vsub.s32 0, %v402
        %v404 = vrot.slane %v399, %v403
        %vm406 = vcmask 31744
        %v408 = vsel %vm406, %v396, 0
        %v411 = vsel %vm406, %v397, 0
        %vm413 = vcmask 1043456
        %v415 = vsel %vm413, %v398, 0
        %417 = vmatprep.subr.mxu0 0.0
        %418 = vmatpush1.msra.mxu0 %v415
        %419 = vmatprep.subr.mxu0 0.0
        %420 = vmatpush1.msra.mxu0 0.0
        %421 = vmatprep.subr.mxu0 0.0
        %422 = vmatpush1.msra.mxu0 0.0
        %423 = vmatprep.subr.mxu0 0.0
        %424 = vmatpush1.msra.mxu0 0.0
        %425 = vmatprep.subr.mxu0 0.0
        %426 = vmatpush1.msra.mxu0 0.0
        %427 = vmatprep.subr.mxu0 0.0
        %428 = vmatpush1.msra.mxu0 0.0
        %429 = vmatprep.subr.mxu0 0.0
        %430 = vmatpush1.msra.mxu0 0.0
        %431 = vmatprep.subr.mxu0 0.0
        %432 = vmatpush1.msra.mxu0 0.0
        %433 = vmatprep.subr.mxu0 0.0
        %434 = vmatpush1.msra.mxu0 0.0
        %435 = vmatprep.subr.mxu0 0.0
        %436 = vmatpush1.msra.mxu0 0.0
        %437 = vmatprep.subr.mxu0 0.0
        %438 = vmatpush1.msra.mxu0 0.0
        %439 = vmatprep.subr.mxu0 0.0
        %440 = vmatpush1.msra.mxu0 0.0
        %441 = vmatprep.subr.mxu0 0.0
        %442 = vmatpush1.msra.mxu0 0.0
        %443 = vmatprep.subr.mxu0 0.0
        %444 = vmatpush1.msra.mxu0 0.0
        %445 = vmatprep.subr.mxu0 0.0
        %446 = vmatpush1.msra.mxu0 0.0
        %447 = vmatprep.subr.mxu0 0.0
        %448 = vmatpush1.msra.mxu0 0.0
        %449 = vmatprep.subr.mxu0 0.0
        %450 = vmatpush1.msra.mxu0 0.0
        %451 = vmatprep.subr.mxu0 0.0
        %452 = vmatpush1.msra.mxu0 0.0
        %453 = vmatprep.subr.mxu0 0.0
        %454 = vmatpush1.msra.mxu0 0.0
        %455 = vmatprep.subr.mxu0 0.0
        %456 = vmatpush1.msra.mxu0 0.0
        %457 = vmatprep.subr.mxu0 0.0
        %458 = vmatpush1.msra.mxu0 0.0
        %459 = vmatprep.subr.mxu0 0.0
        %460 = vmatpush1.msra.mxu0 0.0
        %461 = vmatprep.subr.mxu0 0.0
        %462 = vmatpush1.msra.mxu0 0.0
        %463 = vmatprep.subr.mxu0 0.0
        %464 = vmatpush1.msra.mxu0 0.0
        %465 = vmatprep.subr.mxu0 0.0
        %466 = vmatpush1.msra.mxu0 0.0
        %467 = vmatprep.subr.mxu0 0.0
        %468 = vmatpush1.msra.mxu0 0.0
        %469 = vmatprep.subr.mxu0 0.0
        %470 = vmatpush1.msra.mxu0 0.0
        %471 = vmatprep.subr.mxu0 0.0
        %472 = vmatpush1.msra.mxu0 0.0
        %473 = vmatprep.subr.mxu0 0.0
        %474 = vmatpush1.msra.mxu0 0.0
        %475 = vmatprep.subr.mxu0 0.0
        %476 = vmatpush1.msra.mxu0 0.0
        %477 = vmatprep.subr.mxu0 0.0
        %478 = vmatpush1.msra.mxu0 0.0
        %479 = vmatprep.subr.mxu0 0.0
        %480 = vmatpush1.msra.mxu0 0.0
        %481 = vmatprep.mubr.f32.mxu0 0.0
        %482 = vmatmul.mubr.f32.gmra.mrb[0].mxu0 %v408
        %v483 = vpop.f32.mrb[0].mxu0
        %v484 = vadd.f32 %v404, %v483
        %v485 = vpop.f32.mrb[0].mxu0
        %486 = vmatprep.mubr.f32.mxu0 0.0
        %487 = vmatmul.mubr.f32.gmra.mrb[0].mxu0 %v411
        %v488 = vpop.f32.mrb[0].mxu0
        %v489 = vadd.f32 %v404, %v488
        %v490 = vpop.f32.mrb[0].mxu0
        %491 = vdwg.mxu0
        %v492 = vld [vmem:[%s5] sm:$0xff]
        %v493 = vld [vmem:[%s5 + $0x8] sm:$0xff]
        %v494 = vld [vmem:[%s5 + $0x10] sm:$0xff]
        %v495 = vld [vmem:[%s5 + $0x18] sm:$0xff]
        %v496 = vld [vmem:[%s5 + $0x20] sm:$0xff]
        %v497 = vld [vmem:[%s5 + $0x28] sm:$0xff]
        %v498 = vld [vmem:[%s5 + $0x30] sm:$0xff]
        %v499 = vld [vmem:[%s5 + $0x38] sm:$0xff]
        %v500 = vld [vmem:[%s6] sm:$0xff]
        %v501 = vld [vmem:[%s6 + $0x8] sm:$0xff]
        %v502 = vld [vmem:[%s6 + $0x10] sm:$0xff]
        %v503 = vld [vmem:[%s6 + $0x18] sm:$0xff]
        %v504 = vld [vmem:[%s6 + $0x20] sm:$0xff]
        %v505 = vld [vmem:[%s6 + $0x28] sm:$0xff]
        %v506 = vld [vmem:[%s6 + $0x30] sm:$0xff]
        %v507 = vld [vmem:[%s6 + $0x38] sm:$0xff]
        %v508 = vld [vmem:[%s7] sm:$0xff]
        %v509 = vld [vmem:[%s7 + $0x8] sm:$0x3f]
        %vm510 = vcmask 261120
        %v512 = vsel %vm510, %v484, 0
        %v515 = vsel %vm510, %v489, 0
        %517 = vmatprep.subr.mxu0 0.0
        %518 = vmatpush1.msra.mxu0 %v492
        %519 = vmatprep.subr.mxu0 0.0
        %520 = vmatpush1.msra.mxu0 %v494
        %521 = vmatprep.subr.mxu0 0.0
        %522 = vmatpush1.msra.mxu0 %v496
        %523 = vmatprep.subr.mxu0 0.0
        %524 = vmatpush1.msra.mxu0 %v498
        %525 = vmatprep.subr.mxu0 0.0
        %526 = vmatpush1.msra.mxu0 0.0
        %527 = vmatprep.subr.mxu0 0.0
        %528 = vmatpush1.msra.mxu0 0.0
        %529 = vmatprep.subr.mxu0 0.0
        %530 = vmatpush1.msra.mxu0 0.0
        %531 = vmatprep.subr.mxu0 0.0
        %532 = vmatpush1.msra.mxu0 0.0
        %533 = vmatprep.subr.mxu0 0.0
        %534 = vmatpush1.msra.mxu0 0.0
        %535 = vmatprep.subr.mxu0 0.0
        %536 = vmatpush1.msra.mxu0 0.0
        %537 = vmatprep.subr.mxu0 0.0
        %538 = vmatpush1.msra.mxu0 0.0
        %539 = vmatprep.subr.mxu0 0.0
        %540 = vmatpush1.msra.mxu0 0.0
        %541 = vmatprep.subr.mxu0 0.0
        %542 = vmatpush1.msra.mxu0 0.0
        %543 = vmatprep.subr.mxu0 0.0
        %544 = vmatpush1.msra.mxu0 0.0
        %545 = vmatprep.subr.mxu0 0.0
        %546 = vmatpush1.msra.mxu0 0.0
        %547 = vmatprep.subr.mxu0 0.0
        %548 = vmatpush1.msra.mxu0 0.0
        %549 = vmatprep.subr.mxu0 0.0
        %550 = vmatpush1.msra.mxu0 0.0
        %551 = vmatprep.subr.mxu0 0.0
        %552 = vmatpush1.msra.mxu0 0.0
        %553 = vmatprep.subr.mxu0 0.0
        %554 = vmatpush1.msra.mxu0 0.0
        %555 = vmatprep.subr.mxu0 0.0
        %556 = vmatpush1.msra.mxu0 0.0
        %557 = vmatprep.subr.mxu0 0.0
        %558 = vmatpush1.msra.mxu0 0.0
        %559 = vmatprep.subr.mxu0 0.0
        %560 = vmatpush1.msra.mxu0 0.0
        %561 = vmatprep.subr.mxu0 0.0
        %562 = vmatpush1.msra.mxu0 0.0
        %563 = vmatprep.subr.mxu0 0.0
        %564 = vmatpush1.msra.mxu0 0.0
        %565 = vmatprep.subr.mxu0 0.0
        %566 = vmatpush1.msra.mxu0 0.0
        %567 = vmatprep.subr.mxu0 0.0
        %568 = vmatpush1.msra.mxu0 0.0
        %569 = vmatprep.subr.mxu0 0.0
        %570 = vmatpush1.msra.mxu0 0.0
        %571 = vmatprep.subr.mxu0 0.0
        %572 = vmatpush1.msra.mxu0 0.0
        %573 = vmatprep.subr.mxu0 0.0
        %574 = vmatpush1.msra.mxu0 0.0
        %575 = vmatprep.subr.mxu0 0.0
        %576 = vmatpush1.msra.mxu0 0.0
        %577 = vmatprep.subr.mxu0 0.0
        %578 = vmatpush1.msra.mxu0 0.0
        %579 = vmatprep.subr.mxu0 0.0
        %580 = vmatpush1.msra.mxu0 0.0
        %581 = vmatprep.mubr.f32.mxu0 0.0
        %582 = vmatmul.mubr.f32.gmra.mrb[0].mxu0 %v512
        %v583 = vpop.f32.mrb[0].mxu0
        %v584 = vadd.f32 0.0, %v583
        %v585 = vpop.f32.mrb[0].mxu0
        %586 = vmatprep.mubr.f32.mxu0 0.0
        %587 = vmatmul.mubr.f32.gmra.mrb[0].mxu0 %v515
        %v588 = vpop.f32.mrb[0].mxu0
        %v589 = vadd.f32 0.0, %v588
        %v590 = vpop.f32.mrb[0].mxu0
        %591 = vdwg.mxu0
        %v592 = vlaneseq
        %v593 = vshrl.u32 %v592, 7
        %v594 = vsub.s32 1, %v593
        %v595 = vrot.slane %v508, %v594
        %597 = vrot.lane.b32.xlu0 %v595, 32
        %v598 = vpop.permute.xlu0 %597
        %v600 = vadd.f32 %v584, %v598
        %v601 = vadd.f32 %v589, %v598
        %v602 = vlaneseq
        %v603 = vshrl.u32 %v602, 7
        %v604 = vsub.s32 2, %v603
        %v605 = vrot.slane %v508, %v604
        %607 = vrot.lane.b32.xlu0 %v605, 64
        %v608 = vpop.permute.xlu0 %607
        %v610 = vadd.f32 %v584, %v608
        %v611 = vadd.f32 %v589, %v608
        %v612 = vlaneseq
        %v613 = vshrl.u32 %v612, 7
        %v614 = vsub.s32 3, %v613
        %v615 = vrot.slane %v508, %v614
        %617 = vrot.lane.b32.xlu0 %v615, 96
        %v618 = vpop.permute.xlu0 %617
        %v620 = vadd.f32 %v584, %v618
        %v621 = vadd.f32 %v589, %v618
        %v622 = vlaneseq
        %v623 = vshrl.u32 %v622, 7
        %v624 = vsub.s32 0, %v623
        %v625 = vrot.slane %v508, %v624
        %vm626 = vcmask 130048
        %v628 = vsel %vm626, %v391, 0
        %v631 = vsel %vm626, %v392, 0
        %633 = vmatprep.subr.mxu0 0.0
        %634 = vmatpush1.msra.mxu0 %v584
        %635 = vmatprep.subr.mxu0 0.0
        %636 = vmatpush1.msra.mxu0 %v589
        %637 = vmatprep.subr.mxu0 0.0
        %638 = vmatpush1.msra.mxu0 0.0
        %639 = vmatprep.subr.mxu0 0.0
        %640 = vmatpush1.msra.mxu0 0.0
        %641 = vmatprep.subr.mxu0 0.0
        %642 = vmatpush1.msra.mxu0 0.0
        %643 = vmatprep.subr.mxu0 0.0
        %644 = vmatpush1.msra.mxu0 0.0
        %645 = vmatprep.subr.mxu0 0.0
        %646 = vmatpush1.msra.mxu0 0.0
        %647 = vmatprep.subr.mxu0 0.0
        %648 = vmatpush1.msra.mxu0 0.0
        %649 = vmatprep.subr.mxu0 0.0
        %650 = vmatpush1.msra.mxu0 0.0
        %651 = vmatprep.subr.mxu0 0.0
        %652 = vmatpush1.msra.mxu0 0.0
        %653 = vmatprep.subr.mxu0 0.0
        %654 = vmatpush1.msra.mxu0 0.0
        %655 = vmatprep.subr.mxu0 0.0
        %656 = vmatpush1.msra.mxu0 0.0
        %657 = vmatprep.subr.mxu0 0.0
        %658 = vmatpush1.msra.mxu0 0.0
        %659 = vmatprep.subr.mxu0 0.0
        %660 = vmatpush1.msra.mxu0 0.0
        %661 = vmatprep.subr.mxu0 0.0
        %662 = vmatpush1.msra.mxu0 0.0
        %663 = vmatprep.subr.mxu0 0.0
        %664 = vmatpush1.msra.mxu0 0.0
        %665 = vmatprep.subr.mxu0 0.0
        %666 = vmatpush1.msra.mxu0 0.0
        %667 = vmatprep.subr.mxu0 0.0
        %668 = vmatpush1.msra.mxu0 0.0
        %669 = vmatprep.subr.mxu0 0.0
        %670 = vmatpush1.msra.mxu0 0.0
        %671 = vmatprep.subr.mxu0 0.0
        %672 = vmatpush1.msra.mxu0 0.0
        %673 = vmatprep.subr.mxu0 0.0
        %674 = vmatpush1.msra.mxu0 0.0
        %675 = vmatprep.subr.mxu0 0.0
        %676 = vmatpush1.msra.mxu0 0.0
        %677 = vmatprep.subr.mxu0 0.0
        %678 = vmatpush1.msra.mxu0 0.0
        %679 = vmatprep.subr.mxu0 0.0
        %680 = vmatpush1.msra.mxu0 0.0
        %681 = vmatprep.subr.mxu0 0.0
        %682 = vmatpush1.msra.mxu0 0.0
        %683 = vmatprep.subr.mxu0 0.0
        %684 = vmatpush1.msra.mxu0 0.0
        %685 = vmatprep.subr.mxu0 0.0
        %686 = vmatpush1.msra.mxu0 0.0
        %687 = vmatprep.subr.mxu0 0.0
        %688 = vmatpush1.msra.mxu0 0.0
        %689 = vmatprep.subr.mxu0 0.0
        %690 = vmatpush1.msra.mxu0 0.0
        %691 = vmatprep.subr.mxu0 0.0
        %692 = vmatpush1.msra.mxu0 0.0
        %693 = vmatprep.subr.mxu0 0.0
        %694 = vmatpush1.msra.mxu0 0.0
        %695 = vmatprep.subr.mxu0 0.0
        %696 = vmatpush1.msra.mxu0 0.0
        %697 = vmatprep.mubr.f32.mxu0 0.0
        %698 = vmatmul.mubr.f32.gmra.mrb[0].mxu0 %v628
        %v699 = vpop.f32.mrb[0].mxu0
        %v700 = vadd.f32 %v625, %v699
        %v701 = vpop.f32.mrb[0].mxu0
        %702 = vmatprep.mubr.f32.mxu0 0.0
        %703 = vmatmul.mubr.f32.gmra.mrb[0].mxu0 %v631
        %v704 = vpop.f32.mrb[0].mxu0
        %v705 = vadd.f32 %v625, %v704
        %v706 = vpop.f32.mrb[0].mxu0
        %707 = vdwg.mxu0
        %v708 = vadd.f32 %v484, %v700
        %v709 = vadd.f32 %v489, %v705
        %v710 = vsel %vm510, %v708, 0.0
        %711 = vadd.xlane.f32.xlu0 %v710
        %v712 = vpop.xlane.xlu0 %711
        %v713 = vsel %vm510, %v709, 0.0
        %714 = vadd.xlane.f32.xlu0 %v713
        %v715 = vpop.xlane.xlu0 %714
        %v716 = vrcp.pop 32.0
        %v717 = vmul.f32 %v712, %v716
        %v718 = vmul.f32 %v715, %v716
        %v719 = vsub.f32 %v708, %v717
        %v720 = vsub.f32 %v709, %v718
        %v721 = vmul.f32 %v719, %v719
        %v722 = vmul.f32 %v720, %v720
        %v723 = vsel %vm510, %v721, 0.0
        %724 = vadd.xlane.f32.xlu0 %v723
        %v725 = vpop.xlane.xlu0 %724
        %v726 = vsel %vm510, %v722, 0.0
        %727 = vadd.xlane.f32.xlu0 %v726
        %v728 = vpop.xlane.xlu0 %727
        %v729 = vmul.f32 %v725, %v716
        %v730 = vmul.f32 %v728, %v716
        %v731 = vadd.f32 %v729, 1e-05
        %v732 = vadd.f32 %v730, 1e-05
        %v733 = vrsqrt.pop %v731
        %v734 = vrsqrt.pop %v732
        %v735 = vmul.f32 %v719, %v733
        %v736 = vmul.f32 %v720, %v734
        %v737 = vlaneseq
        %v738 = vshrl.u32 %v737, 7
        %v739 = vsub.s32 0, %v738
        %v740 = vrot.slane %v509, %v739
        %v741 = vmul.f32 %v735, %v740
        %v742 = vmul.f32 %v736, %v740
        %v743 = vlaneseq
        %v744 = vshrl.u32 %v743, 7
        %v745 = vsub.s32 1, %v744
        %v746 = vrot.slane %v509, %v745
        %v747 = vadd.f32 %v741, %v746
        %v748 = vadd.f32 %v742, %v746
        %751 = vrot.lane.b32.xlu0 %v600, 96
        %v752 = vpop.permute.xlu0 %751
        %753 = vrot.lane.b32.xlu0 %v601, 96
        %v754 = vpop.permute.xlu0 %753
        %757 = vrot.lane.b32.xlu0 %v610, 64
        %v758 = vpop.permute.xlu0 %757
        %759 = vrot.lane.b32.xlu0 %v611, 64
        %v760 = vpop.permute.xlu0 %759
        %vm761 = vcmask 64512
        %v762 = vsel %vm761, %v752, 0
        %v764 = vsel %vm761, %v754, 0
        %v766 = vsel %vm761, %v758, 0
        %v768 = vsel %vm761, %v760, 0
        %770 = vmatprep.subr.mxu0 0.0
        %771 = vmatpush1.xpose.msra.mxu0 %v766
        %772 = vmatprep.subr.mxu0 0.0
        %773 = vmatpush1.xpose.msra.mxu0 %v768
        %774 = vmatprep.subr.mxu0 0.0
        %775 = vmatpush1.xpose.msra.mxu0 0.0
        %776 = vmatprep.subr.mxu0 0.0
        %777 = vmatpush1.xpose.msra.mxu0 0.0
        %778 = vmatprep.subr.mxu0 0.0
        %779 = vmatpush1.xpose.msra.mxu0 0.0
        %780 = vmatprep.subr.mxu0 0.0
        %781 = vmatpush1.xpose.msra.mxu0 0.0
        %782 = vmatprep.subr.mxu0 0.0
        %783 = vmatpush1.xpose.msra.mxu0 0.0
        %784 = vmatprep.subr.mxu0 0.0
        %785 = vmatpush1.xpose.msra.mxu0 0.0
        %786 = vmatprep.subr.mxu0 0.0
        %787 = vmatpush1.xpose.msra.mxu0 0.0
        %788 = vmatprep.subr.mxu0 0.0
        %789 = vmatpush1.xpose.msra.mxu0 0.0
        %790 = vmatprep.subr.mxu0 0.0
        %791 = vmatpush1.xpose.msra.mxu0 0.0
        %792 = vmatprep.subr.mxu0 0.0
        %793 = vmatpush1.xpose.msra.mxu0 0.0
        %794 = vmatprep.subr.mxu0 0.0
        %795 = vmatpush1.xpose.msra.mxu0 0.0
        %796 = vmatprep.subr.mxu0 0.0
        %797 = vmatpush1.xpose.msra.mxu0 0.0
        %798 = vmatprep.subr.mxu0 0.0
        %799 = vmatpush1.xpose.msra.mxu0 0.0
        %800 = vmatprep.subr.mxu0 0.0
        %801 = vmatpush1.xpose.msra.mxu0 0.0
        %802 = vmatprep.subr.mxu0 0.0
        %803 = vmatpush1.xpose.msra.mxu0 0.0
        %804 = vmatprep.subr.mxu0 0.0
        %805 = vmatpush1.xpose.msra.mxu0 0.0
        %806 = vmatprep.subr.mxu0 0.0
        %807 = vmatpush1.xpose.msra.mxu0 0.0
        %808 = vmatprep.subr.mxu0 0.0
        %809 = vmatpush1.xpose.msra.mxu0 0.0
        %810 = vmatprep.subr.mxu0 0.0
        %811 = vmatpush1.xpose.msra.mxu0 0.0
        %812 = vmatprep.subr.mxu0 0.0
        %813 = vmatpush1.xpose.msra.mxu0 0.0
        %814 = vmatprep.subr.mxu0 0.0
        %815 = vmatpush1.xpose.msra.mxu0 0.0
        %816 = vmatprep.subr.mxu0 0.0
        %817 = vmatpush1.xpose.msra.mxu0 0.0
        %818 = vmatprep.subr.mxu0 0.0
        %819 = vmatpush1.xpose.msra.mxu0 0.0
        %820 = vmatprep.subr.mxu0 0.0
        %821 = vmatpush1.xpose.msra.mxu0 0.0
        %822 = vmatprep.subr.mxu0 0.0
        %823 = vmatpush1.xpose.msra.mxu0 0.0
        %824 = vmatprep.subr.mxu0 0.0
        %825 = vmatpush1.xpose.msra.mxu0 0.0
        %826 = vmatprep.subr.mxu0 0.0
        %827 = vmatpush1.xpose.msra.mxu0 0.0
        %828 = vmatprep.subr.mxu0 0.0
        %829 = vmatpush1.xpose.msra.mxu0 0.0
        %830 = vmatprep.subr.mxu0 0.0
        %831 = vmatpush1.xpose.msra.mxu0 0.0
        %832 = vmatprep.subr.mxu0 0.0
        %833 = vmatpush1.xpose.msra.mxu0 0.0
        %834 = vmatprep.mubr.f32.mxu0 0.0
        %835 = vmatmul.mubr.f32.gmra.mrb[0].mxu0 %v762
        %v836 = vpop.f32.mrb[0].mxu0
        %v837 = vadd.f32 0.0, %v836
        %v838 = vpop.f32.mrb[0].mxu0
        %839 = vmatprep.mubr.f32.mxu0 0.0
        %840 = vmatmul.mubr.f32.gmra.mrb[0].mxu0 %v764
        %v841 = vpop.f32.mrb[0].mxu0
        %v842 = vadd.f32 0.0, %v841
        %v843 = vpop.f32.mrb[0].mxu0
        %844 = vdwg.mxu0
        %v845 = vmul.f32 %v837, 0.35355338
        %v846 = vmul.f32 %v842, 0.35355338
        %v848 = vlaneseq
        %v849 = vshrl.u32 %v848, 7
        %v850 = vsub.s32 0, %v849
        %v851 = vrot.slane %v395, %v850
        %v853 = vadd.f32 %v845, %v851
        %v854 = vadd.f32 %v846, %v851
        %v855 = vsel %vm626, %v853, -inf
        %856 = vmax.xlane.f32.xlu0 %v855
        %v857 = vpop.xlane.xlu0 %856
        %v858 = vsel %vm626, %v854, -inf
        %859 = vmax.xlane.f32.xlu0 %v858
        %v860 = vpop.xlane.xlu0 %859
        %v861 = vsub.f32 %v853, %v857
        %v862 = vsub.f32 %v854, %v860
        %v863 = vmul.f32 %v861, 1.442695
        %v864 = vpow.pop %v863
        %v865 = vmul.f32 %v862, 1.442695
        %v866 = vpow.pop %v865
        %v867 = vsel %vm626, %v864, 0.0
        %868 = vadd.xlane.f32.xlu0 %v867
        %v869 = vpop.xlane.xlu0 %868
        %v870 = vsel %vm626, %v866, 0.0
        %871 = vadd.xlane.f32.xlu0 %v870
        %v872 = vpop.xlane.xlu0 %871
        %v873 = vrcp.pop %v869
        %v874 = vmul.f32 %v864, %v873
        %v875 = vrcp.pop %v872
        %v876 = vmul.f32 %v866, %v875
        %879 = vrot.lane.b32.xlu0 %v620, 32
        %v880 = vpop.permute.xlu0 %879
        %881 = vrot.lane.b32.xlu0 %v621, 32
        %v882 = vpop.permute.xlu0 %881
        %v886 = vsel %vm626, %v874, 0
        %v889 = vsel %vm626, %v876, 0
        %891 = vmatprep.subr.mxu0 0.0
        %892 = vmatpush1.msra.mxu0 %v880
        %893 = vmatprep.subr.mxu0 0.0
        %894 = vmatpush1.msra.mxu0 %v882
        %895 = vmatprep.subr.mxu0 0.0
        %896 = vmatpush1.msra.mxu0 0.0
        %897 = vmatprep.subr.mxu0 0.0
        %898 = vmatpush1.msra.mxu0 0.0
        %899 = vmatprep.subr.mxu0 0.0
        %900 = vmatpush1.msra.mxu0 0.0
        %901 = vmatprep.subr.mxu0 0.0
        %902 = vmatpush1.msra.mxu0 0.0
        %903 = vmatprep.subr.mxu0 0.0
        %904 = vmatpush1.msra.mxu0 0.0
        %905 = vmatprep.subr.mxu0 0.0
        %906 = vmatpush1.msra.mxu0 0.0
        %907 = vmatprep.subr.mxu0 0.0
        %908 = vmatpush1.msra.mxu0 0.0
        %909 = vmatprep.subr.mxu0 0.0
        %910 = vmatpush1.msra.mxu0 0.0
        %911 = vmatprep.subr.mxu0 0.0
        %912 = vmatpush1.msra.mxu0 0.0
        %913 = vmatprep.subr.mxu0 0.0
        %914 = vmatpush1.msra.mxu0 0.0
        %915 = vmatprep.subr.mxu0 0.0
        %916 = vmatpush1.msra.mxu0 0.0
        %917 = vmatprep.subr.mxu0 0.0
        %918 = vmatpush1.msra.mxu0 0.0
        %919 = vmatprep.subr.mxu0 0.0
        %920 = vmatpush1.msra.mxu0 0.0
        %921 = vmatprep.subr.mxu0 0.0
        %922 = vmatpush1.msra.mxu0 0.0
        %923 = vmatprep.subr.mxu0 0.0
        %924 = vmatpush1.msra.mxu0 0.0
        %925 = vmatprep.subr.mxu0 0.0
        %926 = vmatpush1.msra.mxu0 0.0
        %927 = vmatprep.subr.mxu0 0.0
        %928 = vmatpush1.msra.mxu0 0.0
        %929 = vmatprep.subr.mxu0 0.0
        %930 = vmatpush1.msra.mxu0 0.0
        %931 = vmatprep.subr.mxu0 0.0
        %932 = vmatpush1.msra.mxu0 0.0
        %933 = vmatprep.subr.mxu0 0.0
        %934 = vmatpush1.msra.mxu0 0.0
        %935 = vmatprep.subr.mxu0 0.0
        %936 = vmatpush1.msra.mxu0 0.0
        %937 = vmatprep.subr.mxu0 0.0
        %938 = vmatpush1.msra.mxu0 0.0
        %939 = vmatprep.subr.mxu0 0.0
        %940 = vmatpush1.msra.mxu0 0.0
        %941 = vmatprep.subr.mxu0 0.0
        %942 = vmatpush1.msra.mxu0 0.0
        %943 = vmatprep.subr.mxu0 0.0
        %944 = vmatpush1.msra.mxu0 0.0
        %945 = vmatprep.subr.mxu0 0.0
        %946 = vmatpush1.msra.mxu0 0.0
        %947 = vmatprep.subr.mxu0 0.0
        %948 = vmatpush1.msra.mxu0 0.0
        %949 = vmatprep.subr.mxu0 0.0
        %950 = vmatpush1.msra.mxu0 0.0
        %951 = vmatprep.subr.mxu0 0.0
        %952 = vmatpush1.msra.mxu0 0.0
        %953 = vmatprep.subr.mxu0 0.0
        %954 = vmatpush1.msra.mxu0 0.0
        %955 = vmatprep.mubr.f32.mxu0 0.0
        %956 = vmatmul.mubr.f32.gmra.mrb[0].mxu0 %v886
        %v957 = vpop.f32.mrb[0].mxu0
        %v958 = vadd.f32 0.0, %v957
        %v959 = vpop.f32.mrb[0].mxu0
        %960 = vmatprep.mubr.f32.mxu0 0.0
        %961 = vmatmul.mubr.f32.gmra.mrb[0].mxu0 %v889
        %v962 = vpop.f32.mrb[0].mxu0
        %v963 = vadd.f32 0.0, %v962
        %v964 = vpop.f32.mrb[0].mxu0
        %965 = vdwg.mxu0
        %966 = vrot.lane.b32.xlu0 %v600, 88
        %v967 = vpop.permute.xlu0 %966
        %968 = vrot.lane.b32.xlu0 %v601, 88
        %v969 = vpop.permute.xlu0 %968
        %970 = vrot.lane.b32.xlu0 %v610, 56
        %v971 = vpop.permute.xlu0 %970
        %972 = vrot.lane.b32.xlu0 %v611, 56
        %v973 = vpop.permute.xlu0 %972
        %v974 = vsel %vm761, %v967, 0
        %v976 = vsel %vm761, %v969, 0
        %v978 = vsel %vm761, %v971, 0
        %v980 = vsel %vm761, %v973, 0
        %982 = vmatprep.subr.mxu0 0.0
        %983 = vmatpush1.xpose.msra.mxu0 %v978
        %984 = vmatprep.subr.mxu0 0.0
        %985 = vmatpush1.xpose.msra.mxu0 %v980
        %986 = vmatprep.subr.mxu0 0.0
        %987 = vmatpush1.xpose.msra.mxu0 0.0
        %988 = vmatprep.subr.mxu0 0.0
        %989 = vmatpush1.xpose.msra.mxu0 0.0
        %990 = vmatprep.subr.mxu0 0.0
        %991 = vmatpush1.xpose.msra.mxu0 0.0
        %992 = vmatprep.subr.mxu0 0.0
        %993 = vmatpush1.xpose.msra.mxu0 0.0
        %994 = vmatprep.subr.mxu0 0.0
        %995 = vmatpush1.xpose.msra.mxu0 0.0
        %996 = vmatprep.subr.mxu0 0.0
        %997 = vmatpush1.xpose.msra.mxu0 0.0
        %998 = vmatprep.subr.mxu0 0.0
        %999 = vmatpush1.xpose.msra.mxu0 0.0
        %1000 = vmatprep.subr.mxu0 0.0
        %1001 = vmatpush1.xpose.msra.mxu0 0.0
        %1002 = vmatprep.subr.mxu0 0.0
        %1003 = vmatpush1.xpose.msra.mxu0 0.0
        %1004 = vmatprep.subr.mxu0 0.0
        %1005 = vmatpush1.xpose.msra.mxu0 0.0
        %1006 = vmatprep.subr.mxu0 0.0
        %1007 = vmatpush1.xpose.msra.mxu0 0.0
        %1008 = vmatprep.subr.mxu0 0.0
        %1009 = vmatpush1.xpose.msra.mxu0 0.0
        %1010 = vmatprep.subr.mxu0 0.0
        %1011 = vmatpush1.xpose.msra.mxu0 0.0
        %1012 = vmatprep.subr.mxu0 0.0
        %1013 = vmatpush1.xpose.msra.mxu0 0.0
        %1014 = vmatprep.subr.mxu0 0.0
        %1015 = vmatpush1.xpose.msra.mxu0 0.0
        %1016 = vmatprep.subr.mxu0 0.0
        %1017 = vmatpush1.xpose.msra.mxu0 0.0
        %1018 = vmatprep.subr.mxu0 0.0
        %1019 = vmatpush1.xpose.msra.mxu0 0.0
        %1020 = vmatprep.subr.mxu0 0.0
        %1021 = vmatpush1.xpose.msra.mxu0 0.0
        %1022 = vmatprep.subr.mxu0 0.0
        %1023 = vmatpush1.xpose.msra.mxu0 0.0
        %1024 = vmatprep.subr.mxu0 0.0
        %1025 = vmatpush1.xpose.msra.mxu0 0.0
        %1026 = vmatprep.subr.mxu0 0.0
        %1027 = vmatpush1.xpose.msra.mxu0 0.0
        %1028 = vmatprep.subr.mxu0 0.0
        %1029 = vmatpush1.xpose.msra.mxu0 0.0
        %1030 = vmatprep.subr.mxu0 0.0
        %1031 = vmatpush1.xpose.msra.mxu0 0.0
        %1032 = vmatprep.subr.mxu0 0.0
        %1033 = vmatpush1.xpose.msra.mxu0 0.0
        %1034 = vmatprep.subr.mxu0 0.0
        %1035 = vmatpush1.xpose.msra.mxu0 0.0
        %1036 = vmatprep.subr.mxu0 0.0
        %1037 = vmatpush1.xpose.msra.mxu0 0.0
        %1038 = vmatprep.subr.mxu0 0.0
        %1039 = vmatpush1.xpose.msra.mxu0 0.0
        %1040 = vmatprep.subr.mxu0 0.0
        %1041 = vmatpush1.xpose.msra.mxu0 0.0
        %1042 = vmatprep.subr.mxu0 0.0
        %1043 = vmatpush1.xpose.msra.mxu0 0.0
        %1044 = vmatprep.subr.mxu0 0.0
        %1045 = vmatpush1.xpose.msra.mxu0 0.0
        %1046 = vmatprep.mubr.f32.mxu0 0.0
        %1047 = vmatmul.mubr.f32.gmra.mrb[0].mxu0 %v974
        %v1048 = vpop.f32.mrb[0].mxu0
        %v1049 = vadd.f32 0.0, %v1048
        %v1050 = vpop.f32.mrb[0].mxu0
        %1051 = vmatprep.mubr.f32.mxu0 0.0
        %1052 = vmatmul.mubr.f32.gmra.mrb[0].mxu0 %v976
        %v1053 = vpop.f32.mrb[0].mxu0
        %v1054 = vadd.f32 0.0, %v1053
        %v1055 = vpop.f32.mrb[0].mxu0
        %1056 = vdwg.mxu0
        %v1057 = vmul.f32 %v1049, 0.35355338
        %v1058 = vmul.f32 %v1054, 0.35355338
        %v1059 = vadd.f32 %v1057, %v851
        %v1060 = vadd.f32 %v1058, %v851
        %v1061 = vsel %vm626, %v1059, -inf
        %1062 = vmax.xlane.f32.xlu0 %v1061
        %v1063 = vpop.xlane.xlu0 %1062
        %v1064 = vsel %vm626, %v1060, -inf
        %1065 = vmax.xlane.f32.xlu0 %v1064
        %v1066 = vpop.xlane.xlu0 %1065
        %v1067 = vsub.f32 %v1059, %v1063
        %v1068 = vsub.f32 %v1060, %v1066
        %v1069 = vmul.f32 %v1067, 1.442695
        %v1070 = vpow.pop %v1069
        %v1071 = vmul.f32 %v1068, 1.442695
        %v1072 = vpow.pop %v1071
        %v1073 = vsel %vm626, %v1070, 0.0
        %1074 = vadd.xlane.f32.xlu0 %v1073
        %v1075 = vpop.xlane.xlu0 %1074
        %v1076 = vsel %vm626, %v1072, 0.0
        %1077 = vadd.xlane.f32.xlu0 %v1076
        %v1078 = vpop.xlane.xlu0 %1077
        %v1079 = vrcp.pop %v1075
        %v1080 = vmul.f32 %v1070, %v1079
        %v1081 = vrcp.pop %v1078
        %v1082 = vmul.f32 %v1072, %v1081
        %1083 = vrot.lane.b32.xlu0 %v620, 24
        %v1084 = vpop.permute.xlu0 %1083
        %1085 = vrot.lane.b32.xlu0 %v621, 24
        %v1086 = vpop.permute.xlu0 %1085
        %v1090 = vsel %vm626, %v1080, 0
        %v1093 = vsel %vm626, %v1082, 0
        %1095 = vmatprep.subr.mxu0 0.0
        %1096 = vmatpush1.msra.mxu0 %v1084
        %1097 = vmatprep.subr.mxu0 0.0
        %1098 = vmatpush1.msra.mxu0 %v1086
        %1099 = vmatprep.subr.mxu0 0.0
        %1100 = vmatpush1.msra.mxu0 0.0
        %1101 = vmatprep.subr.mxu0 0.0
        %1102 = vmatpush1.msra.mxu0 0.0
        %1103 = vmatprep.subr.mxu0 0.0
        %1104 = vmatpush1.msra.mxu0 0.0
        %1105 = vmatprep.subr.mxu0 0.0
        %1106 = vmatpush1.msra.mxu0 0.0
        %1107 = vmatprep.subr.mxu0 0.0
        %1108 = vmatpush1.msra.mxu0 0.0
        %1109 = vmatprep.subr.mxu0 0.0
        %1110 = vmatpush1.msra.mxu0 0.0
        %1111 = vmatprep.subr.mxu0 0.0
        %1112 = vmatpush1.msra.mxu0 0.0
        %1113 = vmatprep.subr.mxu0 0.0
        %1114 = vmatpush1.msra.mxu0 0.0
        %1115 = vmatprep.subr.mxu0 0.0
        %1116 = vmatpush1.msra.mxu0 0.0
        %1117 = vmatprep.subr.mxu0 0.0
        %1118 = vmatpush1.msra.mxu0 0.0
        %1119 = vmatprep.subr.mxu0 0.0
        %1120 = vmatpush1.msra.mxu0 0.0
        %1121 = vmatprep.subr.mxu0 0.0
        %1122 = vmatpush1.msra.mxu0 0.0
        %1123 = vmatprep.subr.mxu0 0.0
        %1124 = vmatpush1.msra.mxu0 0.0
        %1125 = vmatprep.subr.mxu0 0.0
        %1126 = vmatpush1.msra.mxu0 0.0
        %1127 = vmatprep.subr.mxu0 0.0
        %1128 = vmatpush1.msra.mxu0 0.0
        %1129 = vmatprep.subr.mxu0 0.0
        %1130 = vmatpush1.msra.mxu0 0.0
        %1131 = vmatprep.subr.mxu0 0.0
        %1132 = vmatpush1.msra.mxu0 0.0
        %1133 = vmatprep.subr.mxu0 0.0
        %1134 = vmatpush1.msra.mxu0 0.0
        %1135 = vmatprep.subr.mxu0 0.0
        %1136 = vmatpush1.msra.mxu0 0.0
        %1137 = vmatprep.subr.mxu0 0.0
        %1138 = vmatpush1.msra.mxu0 0.0
        %1139 = vmatprep.subr.mxu0 0.0
        %1140 = vmatpush1.msra.mxu0 0.0
        %1141 = vmatprep.subr.mxu0 0.0
        %1142 = vmatpush1.msra.mxu0 0.0
        %1143 = vmatprep.subr.mxu0 0.0
        %1144 = vmatpush1.msra.mxu0 0.0
        %1145 = vmatprep.subr.mxu0 0.0
        %1146 = vmatpush1.msra.mxu0 0.0
        %1147 = vmatprep.subr.mxu0 0.0
        %1148 = vmatpush1.msra.mxu0 0.0
        %1149 = vmatprep.subr.mxu0 0.0
        %1150 = vmatpush1.msra.mxu0 0.0
        %1151 = vmatprep.subr.mxu0 0.0
        %1152 = vmatpush1.msra.mxu0 0.0
        %1153 = vmatprep.subr.mxu0 0.0
        %1154 = vmatpush1.msra.mxu0 0.0
        %1155 = vmatprep.subr.mxu0 0.0
        %1156 = vmatpush1.msra.mxu0 0.0
        %1157 = vmatprep.subr.mxu0 0.0
        %1158 = vmatpush1.msra.mxu0 0.0
        %1159 = vmatprep.mubr.f32.mxu0 0.0
        %1160 = vmatmul.mubr.f32.gmra.mrb[0].mxu0 %v1090
        %v1161 = vpop.f32.mrb[0].mxu0
        %v1162 = vadd.f32 0.0, %v1161
        %v1163 = vpop.f32.mrb[0].mxu0
        %1164 = vmatprep.mubr.f32.mxu0 0.0
        %1165 = vmatmul.mubr.f32.gmra.mrb[0].mxu0 %v1093
        %v1166 = vpop.f32.mrb[0].mxu0
        %v1167 = vadd.f32 0.0, %v1166
        %v1168 = vpop.f32.mrb[0].mxu0
        %1169 = vdwg.mxu0
        %1170 = vrot.lane.b32.xlu0 %v600, 80
        %v1171 = vpop.permute.xlu0 %1170
        %1172 = vrot.lane.b32.xlu0 %v601, 80
        %v1173 = vpop.permute.xlu0 %1172
        %1174 = vrot.lane.b32.xlu0 %v610, 48
        %v1175 = vpop.permute.xlu0 %1174
        %1176 = vrot.lane.b32.xlu0 %v611, 48
        %v1177 = vpop.permute.xlu0 %1176
        %v1178 = vsel %vm761, %v1171, 0
        %v1180 = vsel %vm761, %v1173, 0
        %v1182 = vsel %vm761, %v1175, 0
        %v1184 = vsel %vm761, %v1177, 0
        %1186 = vmatprep.subr.mxu0 0.0
        %1187 = vmatpush1.xpose.msra.mxu0 %v1182
        %1188 = vmatprep.subr.mxu0 0.0
        %1189 = vmatpush1.xpose.msra.mxu0 %v1184
        %1190 = vmatprep.subr.mxu0 0.0
        %1191 = vmatpush1.xpose.msra.mxu0 0.0
        %1192 = vmatprep.subr.mxu0 0.0
        %1193 = vmatpush1.xpose.msra.mxu0 0.0
        %1194 = vmatprep.subr.mxu0 0.0
        %1195 = vmatpush1.xpose.msra.mxu0 0.0
        %1196 = vmatprep.subr.mxu0 0.0
        %1197 = vmatpush1.xpose.msra.mxu0 0.0
        %1198 = vmatprep.subr.mxu0 0.0
        %1199 = vmatpush1.xpose.msra.mxu0 0.0
        %1200 = vmatprep.subr.mxu0 0.0
        %1201 = vmatpush1.xpose.msra.mxu0 0.0
        %1202 = vmatprep.subr.mxu0 0.0
        %1203 = vmatpush1.xpose.msra.mxu0 0.0
        %1204 = vmatprep.subr.mxu0 0.0
        %1205 = vmatpush1.xpose.msra.mxu0 0.0
        %1206 = vmatprep.subr.mxu0 0.0
        %1207 = vmatpush1.xpose.msra.mxu0 0.0
        %1208 = vmatprep.subr.mxu0 0.0
        %1209 = vmatpush1.xpose.msra.mxu0 0.0
        %1210 = vmatprep.subr.mxu0 0.0
        %1211 = vmatpush1.xpose.msra.mxu0 0.0
        %1212 = vmatprep.subr.mxu0 0.0
        %1213 = vmatpush1.xpose.msra.mxu0 0.0
        %1214 = vmatprep.subr.mxu0 0.0
        %1215 = vmatpush1.xpose.msra.mxu0 0.0
        %1216 = vmatprep.subr.mxu0 0.0
        %1217 = vmatpush1.xpose.msra.mxu0 0.0
        %1218 = vmatprep.subr.mxu0 0.0
        %1219 = vmatpush1.xpose.msra.mxu0 0.0
        %1220 = vmatprep.subr.mxu0 0.0
        %1221 = vmatpush1.xpose.msra.mxu0 0.0
        %1222 = vmatprep.subr.mxu0 0.0
        %1223 = vmatpush1.xpose.msra.mxu0 0.0
        %1224 = vmatprep.subr.mxu0 0.0
        %1225 = vmatpush1.xpose.msra.mxu0 0.0
        %1226 = vmatprep.subr.mxu0 0.0
        %1227 = vmatpush1.xpose.msra.mxu0 0.0
        %1228 = vmatprep.subr.mxu0 0.0
        %1229 = vmatpush1.xpose.msra.mxu0 0.0
        %1230 = vmatprep.subr.mxu0 0.0
        %1231 = vmatpush1.xpose.msra.mxu0 0.0
        %1232 = vmatprep.subr.mxu0 0.0
        %1233 = vmatpush1.xpose.msra.mxu0 0.0
        %1234 = vmatprep.subr.mxu0 0.0
        %1235 = vmatpush1.xpose.msra.mxu0 0.0
        %1236 = vmatprep.subr.mxu0 0.0
        %1237 = vmatpush1.xpose.msra.mxu0 0.0
        %1238 = vmatprep.subr.mxu0 0.0
        %1239 = vmatpush1.xpose.msra.mxu0 0.0
        %1240 = vmatprep.subr.mxu0 0.0
        %1241 = vmatpush1.xpose.msra.mxu0 0.0
        %1242 = vmatprep.subr.mxu0 0.0
        %1243 = vmatpush1.xpose.msra.mxu0 0.0
        %1244 = vmatprep.subr.mxu0 0.0
        %1245 = vmatpush1.xpose.msra.mxu0 0.0
        %1246 = vmatprep.subr.mxu0 0.0
        %1247 = vmatpush1.xpose.msra.mxu0 0.0
        %1248 = vmatprep.subr.mxu0 0.0
        %1249 = vmatpush1.xpose.msra.mxu0 0.0
        %1250 = vmatprep.mubr.f32.mxu0 0.0
        %1251 = vmatmul.mubr.f32.gmra.mrb[0].mxu0 %v1178
        %v1252 = vpop.f32.mrb[0].mxu0
        %v1253 = vadd.f32 0.0, %v1252
        %v1254 = vpop.f32.mrb[0].mxu0
        %1255 = vmatprep.mubr.f32.mxu0 0.0
        %1256 = vmatmul.mubr.f32.gmra.mrb[0].mxu0 %v1180
        %v1257 = vpop.f32.mrb[0].mxu0
        %v1258 = vadd.f32 0.0, %v1257
        %v1259 = vpop.f32.mrb[0].mxu0
        %1260 = vdwg.mxu0
        %v1261 = vmul.f32 %v1253, 0.35355338
        %v1262 = vmul.f32 %v1258, 0.35355338
        %v1263 = vadd.f32 %v1261, %v851
        %v1264 = vadd.f32 %v1262, %v851
        %v1265 = vsel %vm626, %v1263, -inf
        %1266 = vmax.xlane.f32.xlu0 %v1265
        %v1267 = vpop.xlane.xlu0 %1266
        %v1268 = vsel %vm626, %v1264, -inf
        %1269 = vmax.xlane.f32.xlu0 %v1268
        %v1270 = vpop.xlane.xlu0 %1269
        %v1271 = vsub.f32 %v1263, %v1267
        %v1272 = vsub.f32 %v1264, %v1270
        %v1273 = vmul.f32 %v1271, 1.442695
        %v1274 = vpow.pop %v1273
        %v1275 = vmul.f32 %v1272, 1.442695
        %v1276 = vpow.pop %v1275
        %v1277 = vsel %vm626, %v1274, 0.0
        %1278 = vadd.xlane.f32.xlu0 %v1277
        %v1279 = vpop.xlane.xlu0 %1278
        %v1280 = vsel %vm626, %v1276, 0.0
        %1281 = vadd.xlane.f32.xlu0 %v1280
        %v1282 = vpop.xlane.xlu0 %1281
        %v1283 = vrcp.pop %v1279
        %v1284 = vmul.f32 %v1274, %v1283
        %v1285 = vrcp.pop %v1282
        %v1286 = vmul.f32 %v1276, %v1285
        %1287 = vrot.lane.b32.xlu0 %v620, 16
        %v1288 = vpop.permute.xlu0 %1287
        %1289 = vrot.lane.b32.xlu0 %v621, 16
        %v1290 = vpop.permute.xlu0 %1289
        %v1294 = vsel %vm626, %v1284, 0
        %v1297 = vsel %vm626, %v1286, 0
        %1299 = vmatprep.subr.mxu0 0.0
        %1300 = vmatpush1.msra.mxu0 %v1288
        %1301 = vmatprep.subr.mxu0 0.0
        %1302 = vmatpush1.msra.mxu0 %v1290
        %1303 = vmatprep.subr.mxu0 0.0
        %1304 = vmatpush1.msra.mxu0 0.0
        %1305 = vmatprep.subr.mxu0 0.0
        %1306 = vmatpush1.msra.mxu0 0.0
        %1307 = vmatprep.subr.mxu0 0.0
        %1308 = vmatpush1.msra.mxu0 0.0
        %1309 = vmatprep.subr.mxu0 0.0
        %1310 = vmatpush1.msra.mxu0 0.0
        %1311 = vmatprep.subr.mxu0 0.0
        %1312 = vmatpush1.msra.mxu0 0.0
        %1313 = vmatprep.subr.mxu0 0.0
        %1314 = vmatpush1.msra.mxu0 0.0
        %1315 = vmatprep.subr.mxu0 0.0
        %1316 = vmatpush1.msra.mxu0 0.0
        %1317 = vmatprep.subr.mxu0 0.0
        %1318 = vmatpush1.msra.mxu0 0.0
        %1319 = vmatprep.subr.mxu0 0.0
        %1320 = vmatpush1.msra.mxu0 0.0
        %1321 = vmatprep.subr.mxu0 0.0
        %1322 = vmatpush1.msra.mxu0 0.0
        %1323 = vmatprep.subr.mxu0 0.0
        %1324 = vmatpush1.msra.mxu0 0.0
        %1325 = vmatprep.subr.mxu0 0.0
        %1326 = vmatpush1.msra.mxu0 0.0
        %1327 = vmatprep.subr.mxu0 0.0
        %1328 = vmatpush1.msra.mxu0 0.0
        %1329 = vmatprep.subr.mxu0 0.0
        %1330 = vmatpush1.msra.mxu0 0.0
        %1331 = vmatprep.subr.mxu0 0.0
        %1332 = vmatpush1.msra.mxu0 0.0
        %1333 = vmatprep.subr.mxu0 0.0
        %1334 = vmatpush1.msra.mxu0 0.0
        %1335 = vmatprep.subr.mxu0 0.0
        %1336 = vmatpush1.msra.mxu0 0.0
        %1337 = vmatprep.subr.mxu0 0.0
        %1338 = vmatpush1.msra.mxu0 0.0
        %1339 = vmatprep.subr.mxu0 0.0
        %1340 = vmatpush1.msra.mxu0 0.0
        %1341 = vmatprep.subr.mxu0 0.0
        %1342 = vmatpush1.msra.mxu0 0.0
        %1343 = vmatprep.subr.mxu0 0.0
        %1344 = vmatpush1.msra.mxu0 0.0
        %1345 = vmatprep.subr.mxu0 0.0
        %1346 = vmatpush1.msra.mxu0 0.0
        %1347 = vmatprep.subr.mxu0 0.0
        %1348 = vmatpush1.msra.mxu0 0.0
        %1349 = vmatprep.subr.mxu0 0.0
        %1350 = vmatpush1.msra.mxu0 0.0
        %1351 = vmatprep.subr.mxu0 0.0
        %1352 = vmatpush1.msra.mxu0 0.0
        %1353 = vmatprep.subr.mxu0 0.0
        %1354 = vmatpush1.msra.mxu0 0.0
        %1355 = vmatprep.subr.mxu0 0.0
        %1356 = vmatpush1.msra.mxu0 0.0
        %1357 = vmatprep.subr.mxu0 0.0
        %1358 = vmatpush1.msra.mxu0 0.0
        %1359 = vmatprep.subr.mxu0 0.0
        %1360 = vmatpush1.msra.mxu0 0.0
        %1361 = vmatprep.subr.mxu0 0.0
        %1362 = vmatpush1.msra.mxu0 0.0
        %1363 = vmatprep.mubr.f32.mxu0 0.0
        %1364 = vmatmul.mubr.f32.gmra.mrb[0].mxu0 %v1294
        %v1365 = vpop.f32.mrb[0].mxu0
        %v1366 = vadd.f32 0.0, %v1365
        %v1367 = vpop.f32.mrb[0].mxu0
        %1368 = vmatprep.mubr.f32.mxu0 0.0
        %1369 = vmatmul.mubr.f32.gmra.mrb[0].mxu0 %v1297
        %v1370 = vpop.f32.mrb[0].mxu0
        %v1371 = vadd.f32 0.0, %v1370
        %v1372 = vpop.f32.mrb[0].mxu0
        %1373 = vdwg.mxu0
        %1374 = vrot.lane.b32.xlu0 %v600, 72
        %v1375 = vpop.permute.xlu0 %1374
        %1376 = vrot.lane.b32.xlu0 %v601, 72
        %v1377 = vpop.permute.xlu0 %1376
        %1378 = vrot.lane.b32.xlu0 %v610, 40
        %v1379 = vpop.permute.xlu0 %1378
        %1380 = vrot.lane.b32.xlu0 %v611, 40
        %v1381 = vpop.permute.xlu0 %1380
        %v1382 = vsel %vm761, %v1375, 0
        %v1384 = vsel %vm761, %v1377, 0
        %v1386 = vsel %vm761, %v1379, 0
        %v1388 = vsel %vm761, %v1381, 0
        %1390 = vmatprep.subr.mxu0 0.0
        %1391 = vmatpush1.xpose.msra.mxu0 %v1386
        %1392 = vmatprep.subr.mxu0 0.0
        %1393 = vmatpush1.xpose.msra.mxu0 %v1388
        %1394 = vmatprep.subr.mxu0 0.0
        %1395 = vmatpush1.xpose.msra.mxu0 0.0
        %1396 = vmatprep.subr.mxu0 0.0
        %1397 = vmatpush1.xpose.msra.mxu0 0.0
        %1398 = vmatprep.subr.mxu0 0.0
        %1399 = vmatpush1.xpose.msra.mxu0 0.0
        %1400 = vmatprep.subr.mxu0 0.0
        %1401 = vmatpush1.xpose.msra.mxu0 0.0
        %1402 = vmatprep.subr.mxu0 0.0
        %1403 = vmatpush1.xpose.msra.mxu0 0.0
        %1404 = vmatprep.subr.mxu0 0.0
        %1405 = vmatpush1.xpose.msra.mxu0 0.0
        %1406 = vmatprep.subr.mxu0 0.0
        %1407 = vmatpush1.xpose.msra.mxu0 0.0
        %1408 = vmatprep.subr.mxu0 0.0
        %1409 = vmatpush1.xpose.msra.mxu0 0.0
        %1410 = vmatprep.subr.mxu0 0.0
        %1411 = vmatpush1.xpose.msra.mxu0 0.0
        %1412 = vmatprep.subr.mxu0 0.0
        %1413 = vmatpush1.xpose.msra.mxu0 0.0
        %1414 = vmatprep.subr.mxu0 0.0
        %1415 = vmatpush1.xpose.msra.mxu0 0.0
        %1416 = vmatprep.subr.mxu0 0.0
        %1417 = vmatpush1.xpose.msra.mxu0 0.0
        %1418 = vmatprep.subr.mxu0 0.0
        %1419 = vmatpush1.xpose.msra.mxu0 0.0
        %1420 = vmatprep.subr.mxu0 0.0
        %1421 = vmatpush1.xpose.msra.mxu0 0.0
        %1422 = vmatprep.subr.mxu0 0.0
        %1423 = vmatpush1.xpose.msra.mxu0 0.0
        %1424 = vmatprep.subr.mxu0 0.0
        %1425 = vmatpush1.xpose.msra.mxu0 0.0
        %1426 = vmatprep.subr.mxu0 0.0
        %1427 = vmatpush1.xpose.msra.mxu0 0.0
        %1428 = vmatprep.subr.mxu0 0.0
        %1429 = vmatpush1.xpose.msra.mxu0 0.0
        %1430 = vmatprep.subr.mxu0 0.0
        %1431 = vmatpush1.xpose.msra.mxu0 0.0
        %1432 = vmatprep.subr.mxu0 0.0
        %1433 = vmatpush1.xpose.msra.mxu0 0.0
        %1434 = vmatprep.subr.mxu0 0.0
        %1435 = vmatpush1.xpose.msra.mxu0 0.0
        %1436 = vmatprep.subr.mxu0 0.0
        %1437 = vmatpush1.xpose.msra.mxu0 0.0
        %1438 = vmatprep.subr.mxu0 0.0
        %1439 = vmatpush1.xpose.msra.mxu0 0.0
        %1440 = vmatprep.subr.mxu0 0.0
        %1441 = vmatpush1.xpose.msra.mxu0 0.0
        %1442 = vmatprep.subr.mxu0 0.0
        %1443 = vmatpush1.xpose.msra.mxu0 0.0
        %1444 = vmatprep.subr.mxu0 0.0
        %1445 = vmatpush1.xpose.msra.mxu0 0.0
        %1446 = vmatprep.subr.mxu0 0.0
        %1447 = vmatpush1.xpose.msra.mxu0 0.0
        %1448 = vmatprep.subr.mxu0 0.0
        %1449 = vmatpush1.xpose.msra.mxu0 0.0
        %1450 = vmatprep.subr.mxu0 0.0
        %1451 = vmatpush1.xpose.msra.mxu0 0.0
        %1452 = vmatprep.subr.mxu0 0.0
        %1453 = vmatpush1.xpose.msra.mxu0 0.0
        %1454 = vmatprep.mubr.f32.mxu0 0.0
        %1455 = vmatmul.mubr.f32.gmra.mrb[0].mxu0 %v1382
        %v1456 = vpop.f32.mrb[0].mxu0
        %v1457 = vadd.f32 0.0, %v1456
        %v1458 = vpop.f32.mrb[0].mxu0
        %1459 = vmatprep.mubr.f32.mxu0 0.0
        %1460 = vmatmul.mubr.f32.gmra.mrb[0].mxu0 %v1384
        %v1461 = vpop.f32.mrb[0].mxu0
        %v1462 = vadd.f32 0.0, %v1461
        %v1463 = vpop.f32.mrb[0].mxu0
        %1464 = vdwg.mxu0
        %v1465 = vmul.f32 %v1457, 0.35355338
        %v1466 = vmul.f32 %v1462, 0.35355338
        %v1467 = vadd.f32 %v1465, %v851
        %v1468 = vadd.f32 %v1466, %v851
        %v1469 = vsel %vm626, %v1467, -inf
        %1470 = vmax.xlane.f32.xlu0 %v1469
        %v1471 = vpop.xlane.xlu0 %1470
        %v1472 = vsel %vm626, %v1468, -inf
        %1473 = vmax.xlane.f32.xlu0 %v1472
        %v1474 = vpop.xlane.xlu0 %1473
        %v1475 = vsub.f32 %v1467, %v1471
        %v1476 = vsub.f32 %v1468, %v1474
        %v1477 = vmul.f32 %v1475, 1.442695
        %v1478 = vpow.pop %v1477
        %v1479 = vmul.f32 %v1476, 1.442695
        %v1480 = vpow.pop %v1479
        %v1481 = vsel %vm626, %v1478, 0.0
        %1482 = vadd.xlane.f32.xlu0 %v1481
        %v1483 = vpop.xlane.xlu0 %1482
        %v1484 = vsel %vm626, %v1480, 0.0
        %1485 = vadd.xlane.f32.xlu0 %v1484
        %v1486 = vpop.xlane.xlu0 %1485
        %v1487 = vrcp.pop %v1483
        %v1488 = vmul.f32 %v1478, %v1487
        %v1489 = vrcp.pop %v1486
        %v1490 = vmul.f32 %v1480, %v1489
        %1491 = vrot.lane.b32.xlu0 %v620, 8
        %v1492 = vpop.permute.xlu0 %1491
        %1493 = vrot.lane.b32.xlu0 %v621, 8
        %v1494 = vpop.permute.xlu0 %1493
        %v1498 = vsel %vm626, %v1488, 0
        %v1501 = vsel %vm626, %v1490, 0
        %1503 = vmatprep.subr.mxu0 0.0
        %1504 = vmatpush1.msra.mxu0 %v1492
        %1505 = vmatprep.subr.mxu0 0.0
        %1506 = vmatpush1.msra.mxu0 %v1494
        %1507 = vmatprep.subr.mxu0 0.0
        %1508 = vmatpush1.msra.mxu0 0.0
        %1509 = vmatprep.subr.mxu0 0.0
        %1510 = vmatpush1.msra.mxu0 0.0
        %1511 = vmatprep.subr.mxu0 0.0
        %1512 = vmatpush1.msra.mxu0 0.0
        %1513 = vmatprep.subr.mxu0 0.0
        %1514 = vmatpush1.msra.mxu0 0.0
        %1515 = vmatprep.subr.mxu0 0.0
        %1516 = vmatpush1.msra.mxu0 0.0
        %1517 = vmatprep.subr.mxu0 0.0
        %1518 = vmatpush1.msra.mxu0 0.0
        %1519 = vmatprep.subr.mxu0 0.0
        %1520 = vmatpush1.msra.mxu0 0.0
        %1521 = vmatprep.subr.mxu0 0.0
        %1522 = vmatpush1.msra.mxu0 0.0
        %1523 = vmatprep.subr.mxu0 0.0
        %1524 = vmatpush1.msra.mxu0 0.0
        %1525 = vmatprep.subr.mxu0 0.0
        %1526 = vmatpush1.msra.mxu0 0.0
        %1527 = vmatprep.subr.mxu0 0.0
        %1528 = vmatpush1.msra.mxu0 0.0
        %1529 = vmatprep.subr.mxu0 0.0
        %1530 = vmatpush1.msra.mxu0 0.0
        %1531 = vmatprep.subr.mxu0 0.0
        %1532 = vmatpush1.msra.mxu0 0.0
        %1533 = vmatprep.subr.mxu0 0.0
        %1534 = vmatpush1.msra.mxu0 0.0
        %1535 = vmatprep.subr.mxu0 0.0
        %1536 = vmatpush1.msra.mxu0 0.0
        %1537 = vmatprep.subr.mxu0 0.0
        %1538 = vmatpush1.msra.mxu0 0.0
        %1539 = vmatprep.subr.mxu0 0.0
        %1540 = vmatpush1.msra.mxu0 0.0
        %1541 = vmatprep.subr.mxu0 0.0
        %1542 = vmatpush1.msra.mxu0 0.0
        %1543 = vmatprep.subr.mxu0 0.0
        %1544 = vmatpush1.msra.mxu0 0.0
        %1545 = vmatprep.subr.mxu0 0.0
        %1546 = vmatpush1.msra.mxu0 0.0
        %1547 = vmatprep.subr.mxu0 0.0
        %1548 = vmatpush1.msra.mxu0 0.0
        %1549 = vmatprep.subr.mxu0 0.0
        %1550 = vmatpush1.msra.mxu0 0.0
        %1551 = vmatprep.subr.mxu0 0.0
        %1552 = vmatpush1.msra.mxu0 0.0
        %1553 = vmatprep.subr.mxu0 0.0
        %1554 = vmatpush1.msra.mxu0 0.0
        %1555 = vmatprep.subr.mxu0 0.0
        %1556 = vmatpush1.msra.mxu0 0.0
        %1557 = vmatprep.subr.mxu0 0.0
        %1558 = vmatpush1.msra.mxu0 0.0
        %1559 = vmatprep.subr.mxu0 0.0
        %1560 = vmatpush1.msra.mxu0 0.0
        %1561 = vmatprep.subr.mxu0 0.0
        %1562 = vmatpush1.msra.mxu0 0.0
        %1563 = vmatprep.subr.mxu0 0.0
        %1564 = vmatpush1.msra.mxu0 0.0
        %1565 = vmatprep.subr.mxu0 0.0
        %1566 = vmatpush1.msra.mxu0 0.0
        %1567 = vmatprep.mubr.f32.mxu0 0.0
        %1568 = vmatmul.mubr.f32.gmra.mrb[0].mxu0 %v1498
        %v1569 = vpop.f32.mrb[0].mxu0
        %v1570 = vadd.f32 0.0, %v1569
        %v1571 = vpop.f32.mrb[0].mxu0
        %1572 = vmatprep.mubr.f32.mxu0 0.0
        %1573 = vmatmul.mubr.f32.gmra.mrb[0].mxu0 %v1501
        %v1574 = vpop.f32.mrb[0].mxu0
        %v1575 = vadd.f32 0.0, %v1574
        %v1576 = vpop.f32.mrb[0].mxu0
        %1577 = vdwg.mxu0
        %1580 = vrot.lane.b32.xlu0 %v1162, 8
        %v1581 = vpop.permute.xlu0 %1580
        %1582 = vrot.lane.b32.xlu0 %v1167, 8
        %v1583 = vpop.permute.xlu0 %1582
        %1588 = vrot.lane.b32.xlu0 %v1366, 16
        %v1589 = vpop.permute.xlu0 %1588
        %1590 = vrot.lane.b32.xlu0 %v1371, 16
        %v1591 = vpop.permute.xlu0 %1590
        %1596 = vrot.lane.b32.xlu0 %v1570, 24
        %v1597 = vpop.permute.xlu0 %1596
        %1598 = vrot.lane.b32.xlu0 %v1575, 24
        %v1599 = vpop.permute.xlu0 %1598
        %v1602 = vsel %vm761, %v958, %v1581
        %v1603 = vsel %vm761, %v963, %v1583
        %v1604 = vsel %vm626, %v1602, %v1589
        %v1605 = vsel %vm626, %v1603, %v1591
        %vm1606 = vcmask 195584
        %v1607 = vsel %vm1606, %v1604, %v1597
        %v1608 = vsel %vm1606, %v1605, %v1599
        %v1609 = vlaneseq
        %v1610 = vshrl.u32 %v1609, 7
        %v1611 = vsub.s32 4, %v1610
        %v1612 = vrot.slane %v508, %v1611
        %v1614 = vsel %vm510, %v1607, 0
        %v1617 = vsel %vm510, %v1608, 0
        %1619 = vmatprep.subr.mxu0 0.0
        %1620 = vmatpush1.msra.mxu0 %v493
        %1621 = vmatprep.subr.mxu0 0.0
        %1622 = vmatpush1.msra.mxu0 %v495
        %1623 = vmatprep.subr.mxu0 0.0
        %1624 = vmatpush1.msra.mxu0 %v497
        %1625 = vmatprep.subr.mxu0 0.0
        %1626 = vmatpush1.msra.mxu0 %v499
        %1627 = vmatprep.subr.mxu0 0.0
        %1628 = vmatpush1.msra.mxu0 0.0
        %1629 = vmatprep.subr.mxu0 0.0
        %1630 = vmatpush1.msra.mxu0 0.0
        %1631 = vmatprep.subr.mxu0 0.0
        %1632 = vmatpush1.msra.mxu0 0.0
        %1633 = vmatprep.subr.mxu0 0.0
        %1634 = vmatpush1.msra.mxu0 0.0
        %1635 = vmatprep.subr.mxu0 0.0
        %1636 = vmatpush1.msra.mxu0 0.0
        %1637 = vmatprep.subr.mxu0 0.0
        %1638 = vmatpush1.msra.mxu0 0.0
        %1639 = vmatprep.subr.mxu0 0.0
        %1640 = vmatpush1.msra.mxu0 0.0
        %1641 = vmatprep.subr.mxu0 0.0
        %1642 = vmatpush1.msra.mxu0 0.0
        %1643 = vmatprep.subr.mxu0 0.0
        %1644 = vmatpush1.msra.mxu0 0.0
        %1645 = vmatprep.subr.mxu0 0.0
        %1646 = vmatpush1.msra.mxu0 0.0
        %1647 = vmatprep.subr.mxu0 0.0
        %1648 = vmatpush1.msra.mxu0 0.0
        %1649 = vmatprep.subr.mxu0 0.0
        %1650 = vmatpush1.msra.mxu0 0.0
        %1651 = vmatprep.subr.mxu0 0.0
        %1652 = vmatpush1.msra.mxu0 0.0
        %1653 = vmatprep.subr.mxu0 0.0
        %1654 = vmatpush1.msra.mxu0 0.0
        %1655 = vmatprep.subr.mxu0 0.0
        %1656 = vmatpush1.msra.mxu0 0.0
        %1657 = vmatprep.subr.mxu0 0.0
        %1658 = vmatpush1.msra.mxu0 0.0
        %1659 = vmatprep.subr.mxu0 0.0
        %1660 = vmatpush1.msra.mxu0 0.0
        %1661 = vmatprep.subr.mxu0 0.0
        %1662 = vmatpush1.msra.mxu0 0.0
        %1663 = vmatprep.subr.mxu0 0.0
        %1664 = vmatpush1.msra.mxu0 0.0
        %1665 = vmatprep.subr.mxu0 0.0
        %1666 = vmatpush1.msra.mxu0 0.0
        %1667 = vmatprep.subr.mxu0 0.0
        %1668 = vmatpush1.msra.mxu0 0.0
        %1669 = vmatprep.subr.mxu0 0.0
        %1670 = vmatpush1.msra.mxu0 0.0
        %1671 = vmatprep.subr.mxu0 0.0
        %1672 = vmatpush1.msra.mxu0 0.0
        %1673 = vmatprep.subr.mxu0 0.0
        %1674 = vmatpush1.msra.mxu0 0.0
        %1675 = vmatprep.subr.mxu0 0.0
        %1676 = vmatpush1.msra.mxu0 0.0
        %1677 = vmatprep.subr.mxu0 0.0
        %1678 = vmatpush1.msra.mxu0 0.0
        %1679 = vmatprep.subr.mxu0 0.0
        %1680 = vmatpush1.msra.mxu0 0.0
        %1681 = vmatprep.subr.mxu0 0.0
        %1682 = vmatpush1.msra.mxu0 0.0
        %1683 = vmatprep.mubr.f32.mxu0 0.0
        %1684 = vmatmul.mubr.f32.gmra.mrb[0].mxu0 %v1614
        %v1685 = vpop.f32.mrb[0].mxu0
        %v1686 = vadd.f32 %v1612, %v1685
        %v1687 = vpop.f32.mrb[0].mxu0
        %1688 = vmatprep.mubr.f32.mxu0 0.0
        %1689 = vmatmul.mubr.f32.gmra.mrb[0].mxu0 %v1617
        %v1690 = vpop.f32.mrb[0].mxu0
        %v1691 = vadd.f32 %v1612, %v1690
        %v1692 = vpop.f32.mrb[0].mxu0
        %1693 = vdwg.mxu0
        %v1694 = vadd.f32 %v484, %v1686
        %v1695 = vadd.f32 %v489, %v1691
        %v1696 = vsel %vm510, %v1694, 0.0
        %1697 = vadd.xlane.f32.xlu0 %v1696
        %v1698 = vpop.xlane.xlu0 %1697
        %v1699 = vsel %vm510, %v1695, 0.0
        %1700 = vadd.xlane.f32.xlu0 %v1699
        %v1701 = vpop.xlane.xlu0 %1700
        %v1702 = vmul.f32 %v1698, %v716
        %v1703 = vmul.f32 %v1701, %v716
        %v1704 = vsub.f32 %v1694, %v1702
        %v1705 = vsub.f32 %v1695, %v1703
        %v1706 = vmul.f32 %v1704, %v1704
        %v1707 = vmul.f32 %v1705, %v1705
        %v1708 = vsel %vm510, %v1706, 0.0
        %1709 = vadd.xlane.f32.xlu0 %v1708
        %v1710 = vpop.xlane.xlu0 %1709
        %v1711 = vsel %vm510, %v1707, 0.0
        %1712 = vadd.xlane.f32.xlu0 %v1711
        %v1713 = vpop.xlane.xlu0 %1712
        %v1714 = vmul.f32 %v1710, %v716
        %v1715 = vmul.f32 %v1713, %v716
        %v1716 = vadd.f32 %v1714, 1e-05
        %v1717 = vadd.f32 %v1715, 1e-05
        %v1718 = vrsqrt.pop %v1716
        %v1719 = vrsqrt.pop %v1717
        %v1720 = vmul.f32 %v1704, %v1718
        %v1721 = vmul.f32 %v1705, %v1719
        %v1722 = vlaneseq
        %v1723 = vshrl.u32 %v1722, 7
        %v1724 = vsub.s32 2, %v1723
        %v1725 = vrot.slane %v509, %v1724
        %v1726 = vmul.f32 %v1720, %v1725
        %v1727 = vmul.f32 %v1721, %v1725
        %v1728 = vlaneseq
        %v1729 = vshrl.u32 %v1728, 7
        %v1730 = vsub.s32 3, %v1729
        %v1731 = vrot.slane %v509, %v1730
        %v1732 = vadd.f32 %v1726, %v1731
        %v1733 = vadd.f32 %v1727, %v1731
        %v1734 = vadd.f32 %v747, %v1732
        %v1735 = vadd.f32 %v748, %v1733
        %v1737 = vrot.slane %v508, 1
        %1738 = vrot.lane.b32.xlu0 %v1737, 32
        %v1739 = vpop.permute.xlu0 %1738
        %v1741 = vsel %vm510, %v508, %v1739
        %v1742 = vlaneseq
        %v1743 = vshrl.u32 %v1742, 7
        %v1744 = vsub.s32 6, %v1743
        %v1745 = vrot.slane %v1741, %v1744
        %1750 = vrot.lane.b32.xlu0 %v493, 96
        %v1751 = vpop.permute.xlu0 %1750
        %1752 = vrot.lane.b32.xlu0 %v495, 96
        %v1753 = vpop.permute.xlu0 %1752
        %1754 = vrot.lane.b32.xlu0 %v497, 96
        %v1755 = vpop.permute.xlu0 %1754
        %1756 = vrot.lane.b32.xlu0 %v499, 96
        %v1757 = vpop.permute.xlu0 %1756
        %v1763 = vsel %vm510, %v1734, 0
        %v1766 = vsel %vm510, %v1735, 0
        %1768 = vmatprep.subr.mxu0 0.0
        %1769 = vmatpush1.msra.mxu0 %v1751
        %1770 = vmatprep.subr.mxu0 0.0
        %1771 = vmatpush1.msra.mxu0 %v1753
        %1772 = vmatprep.subr.mxu0 0.0
        %1773 = vmatpush1.msra.mxu0 %v1755
        %1774 = vmatprep.subr.mxu0 0.0
        %1775 = vmatpush1.msra.mxu0 %v1757
        %1776 = vmatprep.subr.mxu0 0.0
        %1777 = vmatpush1.msra.mxu0 0.0
        %1778 = vmatprep.subr.mxu0 0.0
        %1779 = vmatpush1.msra.mxu0 0.0
        %1780 = vmatprep.subr.mxu0 0.0
        %1781 = vmatpush1.msra.mxu0 0.0
        %1782 = vmatprep.subr.mxu0 0.0
        %1783 = vmatpush1.msra.mxu0 0.0
        %1784 = vmatprep.subr.mxu0 0.0
        %1785 = vmatpush1.msra.mxu0 0.0
        %1786 = vmatprep.subr.mxu0 0.0
        %1787 = vmatpush1.msra.mxu0 0.0
        %1788 = vmatprep.subr.mxu0 0.0
        %1789 = vmatpush1.msra.mxu0 0.0
        %1790 = vmatprep.subr.mxu0 0.0
        %1791 = vmatpush1.msra.mxu0 0.0
        %1792 = vmatprep.subr.mxu0 0.0
        %1793 = vmatpush1.msra.mxu0 0.0
        %1794 = vmatprep.subr.mxu0 0.0
        %1795 = vmatpush1.msra.mxu0 0.0
        %1796 = vmatprep.subr.mxu0 0.0
        %1797 = vmatpush1.msra.mxu0 0.0
        %1798 = vmatprep.subr.mxu0 0.0
        %1799 = vmatpush1.msra.mxu0 0.0
        %1800 = vmatprep.subr.mxu0 0.0
        %1801 = vmatpush1.msra.mxu0 0.0
        %1802 = vmatprep.subr.mxu0 0.0
        %1803 = vmatpush1.msra.mxu0 0.0
        %1804 = vmatprep.subr.mxu0 0.0
        %1805 = vmatpush1.msra.mxu0 0.0
        %1806 = vmatprep.subr.mxu0 0.0
        %1807 = vmatpush1.msra.mxu0 0.0
        %1808 = vmatprep.subr.mxu0 0.0
        %1809 = vmatpush1.msra.mxu0 0.0
        %1810 = vmatprep.subr.mxu0 0.0
        %1811 = vmatpush1.msra.mxu0 0.0
        %1812 = vmatprep.subr.mxu0 0.0
        %1813 = vmatpush1.msra.mxu0 0.0
        %1814 = vmatprep.subr.mxu0 0.0
        %1815 = vmatpush1.msra.mxu0 0.0
        %1816 = vmatprep.subr.mxu0 0.0
        %1817 = vmatpush1.msra.mxu0 0.0
        %1818 = vmatprep.subr.mxu0 0.0
        %1819 = vmatpush1.msra.mxu0 0.0
        %1820 = vmatprep.subr.mxu0 0.0
        %1821 = vmatpush1.msra.mxu0 0.0
        %1822 = vmatprep.subr.mxu0 0.0
        %1823 = vmatpush1.msra.mxu0 0.0
        %1824 = vmatprep.subr.mxu0 0.0
        %1825 = vmatpush1.msra.mxu0 0.0
        %1826 = vmatprep.subr.mxu0 0.0
        %1827 = vmatpush1.msra.mxu0 0.0
        %1828 = vmatprep.subr.mxu0 0.0
        %1829 = vmatpush1.msra.mxu0 0.0
        %1830 = vmatprep.subr.mxu0 0.0
        %1831 = vmatpush1.msra.mxu0 0.0
        %1832 = vmatprep.mubr.f32.mxu0 0.0
        %1833 = vmatmul.mubr.f32.gmra.mrb[0].mxu0 %v1763
        %v1834 = vpop.f32.mrb[0].mxu0
        %v1835 = vadd.f32 %v1745, %v1834
        %v1836 = vpop.f32.mrb[0].mxu0
        %1837 = vmatprep.mubr.f32.mxu0 0.0
        %1838 = vmatmul.mubr.f32.gmra.mrb[0].mxu0 %v1766
        %v1839 = vpop.f32.mrb[0].mxu0
        %v1840 = vadd.f32 %v1745, %v1839
        %v1841 = vpop.f32.mrb[0].mxu0
        %1842 = vdwg.mxu0
        %v1843 = vmax.f32 %v1835, 0.0
        %v1844 = vmax.f32 %v1840, 0.0
        %v1845 = vlaneseq
        %v1846 = vshrl.u32 %v1845, 7
        %v1847 = vsub.s32 5, %v1846
        %v1848 = vrot.slane %v508, %v1847
        %vm1849 = vcmask 523264
        %v1851 = vsel %vm1849, %v1843, 0
        %v1854 = vsel %vm1849, %v1844, 0
        %1856 = vmatprep.subr.mxu0 0.0
        %1857 = vmatpush1.msra.mxu0 %v500
        %1858 = vmatprep.subr.mxu0 0.0
        %1859 = vmatpush1.msra.mxu0 %v501
        %1860 = vmatprep.subr.mxu0 0.0
        %1861 = vmatpush1.msra.mxu0 %v502
        %1862 = vmatprep.subr.mxu0 0.0
        %1863 = vmatpush1.msra.mxu0 %v503
        %1864 = vmatprep.subr.mxu0 0.0
        %1865 = vmatpush1.msra.mxu0 %v504
        %1866 = vmatprep.subr.mxu0 0.0
        %1867 = vmatpush1.msra.mxu0 %v505
        %1868 = vmatprep.subr.mxu0 0.0
        %1869 = vmatpush1.msra.mxu0 %v506
        %1870 = vmatprep.subr.mxu0 0.0
        %1871 = vmatpush1.msra.mxu0 %v507
        %1872 = vmatprep.subr.mxu0 0.0
        %1873 = vmatpush1.msra.mxu0 0.0
        %1874 = vmatprep.subr.mxu0 0.0
        %1875 = vmatpush1.msra.mxu0 0.0
        %1876 = vmatprep.subr.mxu0 0.0
        %1877 = vmatpush1.msra.mxu0 0.0
        %1878 = vmatprep.subr.mxu0 0.0
        %1879 = vmatpush1.msra.mxu0 0.0
        %1880 = vmatprep.subr.mxu0 0.0
        %1881 = vmatpush1.msra.mxu0 0.0
        %1882 = vmatprep.subr.mxu0 0.0
        %1883 = vmatpush1.msra.mxu0 0.0
        %1884 = vmatprep.subr.mxu0 0.0
        %1885 = vmatpush1.msra.mxu0 0.0
        %1886 = vmatprep.subr.mxu0 0.0
        %1887 = vmatpush1.msra.mxu0 0.0
        %1888 = vmatprep.subr.mxu0 0.0
        %1889 = vmatpush1.msra.mxu0 0.0
        %1890 = vmatprep.subr.mxu0 0.0
        %1891 = vmatpush1.msra.mxu0 0.0
        %1892 = vmatprep.subr.mxu0 0.0
        %1893 = vmatpush1.msra.mxu0 0.0
        %1894 = vmatprep.subr.mxu0 0.0
        %1895 = vmatpush1.msra.mxu0 0.0
        %1896 = vmatprep.subr.mxu0 0.0
        %1897 = vmatpush1.msra.mxu0 0.0
        %1898 = vmatprep.subr.mxu0 0.0
        %1899 = vmatpush1.msra.mxu0 0.0
        %1900 = vmatprep.subr.mxu0 0.0
        %1901 = vmatpush1.msra.mxu0 0.0
        %1902 = vmatprep.subr.mxu0 0.0
        %1903 = vmatpush1.msra.mxu0 0.0
        %1904 = vmatprep.subr.mxu0 0.0
        %1905 = vmatpush1.msra.mxu0 0.0
        %1906 = vmatprep.subr.mxu0 0.0
        %1907 = vmatpush1.msra.mxu0 0.0
        %1908 = vmatprep.subr.mxu0 0.0
        %1909 = vmatpush1.msra.mxu0 0.0
        %1910 = vmatprep.subr.mxu0 0.0
        %1911 = vmatpush1.msra.mxu0 0.0
        %1912 = vmatprep.subr.mxu0 0.0
        %1913 = vmatpush1.msra.mxu0 0.0
        %1914 = vmatprep.subr.mxu0 0.0
        %1915 = vmatpush1.msra.mxu0 0.0
        %1916 = vmatprep.subr.mxu0 0.0
        %1917 = vmatpush1.msra.mxu0 0.0
        %1918 = vmatprep.subr.mxu0 0.0
        %1919 = vmatpush1.msra.mxu0 0.0
        %1920 = vmatprep.mubr.f32.mxu0 0.0
        %1921 = vmatmul.mubr.f32.gmra.mrb[0].mxu0 %v1851
        %v1922 = vpop.f32.mrb[0].mxu0
        %v1923 = vadd.f32 %v1848, %v1922
        %v1924 = vpop.f32.mrb[0].mxu0
        %1925 = vmatprep.mubr.f32.mxu0 0.0
        %1926 = vmatmul.mubr.f32.gmra.mrb[0].mxu0 %v1854
        %v1927 = vpop.f32.mrb[0].mxu0
        %v1928 = vadd.f32 %v1848, %v1927
        %v1929 = vpop.f32.mrb[0].mxu0
        %1930 = vdwg.mxu0
        %v1931 = vadd.f32 %v1734, %v1923
        %v1932 = vadd.f32 %v1735, %v1928
        %v1933 = vsel %vm510, %v1931, 0.0
        %1934 = vadd.xlane.f32.xlu0 %v1933
        %v1935 = vpop.xlane.xlu0 %1934
        %v1936 = vsel %vm510, %v1932, 0.0
        %1937 = vadd.xlane.f32.xlu0 %v1936
        %v1938 = vpop.xlane.xlu0 %1937
        %v1939 = vmul.f32 %v1935, %v716
        %v1940 = vmul.f32 %v1938, %v716
        %v1941 = vsub.f32 %v1931, %v1939
        %v1942 = vsub.f32 %v1932, %v1940
        %v1943 = vmul.f32 %v1941, %v1941
        %v1944 = vmul.f32 %v1942, %v1942
        %v1945 = vsel %vm510, %v1943, 0.0
        %1946 = vadd.xlane.f32.xlu0 %v1945
        %v1947 = vpop.xlane.xlu0 %1946
        %v1948 = vsel %vm510, %v1944, 0.0
        %1949 = vadd.xlane.f32.xlu0 %v1948
        %v1950 = vpop.xlane.xlu0 %1949
        %v1951 = vmul.f32 %v1947, %v716
        %v1952 = vmul.f32 %v1950, %v716
        %v1953 = vadd.f32 %v1951, 1e-05
        %v1954 = vadd.f32 %v1952, 1e-05
        %v1955 = vrsqrt.pop %v1953
        %v1956 = vrsqrt.pop %v1954
        %v1957 = vmul.f32 %v1941, %v1955
        %v1958 = vmul.f32 %v1942, %v1956
        %v1959 = vlaneseq
        %v1960 = vshrl.u32 %v1959, 7
        %v1961 = vsub.s32 4, %v1960
        %v1962 = vrot.slane %v509, %v1961
        %v1963 = vmul.f32 %v1957, %v1962
        %v1964 = vmul.f32 %v1958, %v1962
        %v1965 = vlaneseq
        %v1966 = vshrl.u32 %v1965, 7
        %v1967 = vsub.s32 5, %v1966
        %v1968 = vrot.slane %v509, %v1967
        %v1969 = vadd.f32 %v1963, %v1968
        %v1970 = vadd.f32 %v1964, %v1968
        %s1971 = scalar_lea.vmem %s5, 64
        %v1972 = vld [vmem:[%s1971] sm:$0xff]
        %v1973 = vld [vmem:[%s1971 + $0x8] sm:$0xff]
        %v1974 = vld [vmem:[%s1971 + $0x10] sm:$0xff]
        %v1975 = vld [vmem:[%s1971 + $0x18] sm:$0xff]
        %v1976 = vld [vmem:[%s1971 + $0x20] sm:$0xff]
        %v1977 = vld [vmem:[%s1971 + $0x28] sm:$0xff]
        %v1978 = vld [vmem:[%s1971 + $0x30] sm:$0xff]
        %v1979 = vld [vmem:[%s1971 + $0x38] sm:$0xff]
        %s1980 = scalar_lea.vmem %s6, 64
        %v1981 = vld [vmem:[%s1980] sm:$0xff]
        %v1982 = vld [vmem:[%s1980 + $0x8] sm:$0xff]
        %v1983 = vld [vmem:[%s1980 + $0x10] sm:$0xff]
        %v1984 = vld [vmem:[%s1980 + $0x18] sm:$0xff]
        %v1985 = vld [vmem:[%s1980 + $0x20] sm:$0xff]
        %v1986 = vld [vmem:[%s1980 + $0x28] sm:$0xff]
        %v1987 = vld [vmem:[%s1980 + $0x30] sm:$0xff]
        %v1988 = vld [vmem:[%s1980 + $0x38] sm:$0xff]
        %s1989 = scalar_lea.vmem %s7, 16
        %v1990 = vld [vmem:[%s1989] sm:$0xff]
        %v1991 = vld [vmem:[%s1989 + $0x8] sm:$0x3f]
        %v1993 = vsel %vm510, %v1969, 0
        %v1996 = vsel %vm510, %v1970, 0
        %1998 = vmatprep.subr.mxu0 0.0
        %1999 = vmatpush1.msra.mxu0 %v1972
        %2000 = vmatprep.subr.mxu0 0.0
        %2001 = vmatpush1.msra.mxu0 %v1974
        %2002 = vmatprep.subr.mxu0 0.0
        %2003 = vmatpush1.msra.mxu0 %v1976
        %2004 = vmatprep.subr.mxu0 0.0
        %2005 = vmatpush1.msra.mxu0 %v1978
        %2006 = vmatprep.subr.mxu0 0.0
        %2007 = vmatpush1.msra.mxu0 0.0
        %2008 = vmatprep.subr.mxu0 0.0
        %2009 = vmatpush1.msra.mxu0 0.0
        %2010 = vmatprep.subr.mxu0 0.0
        %2011 = vmatpush1.msra.mxu0 0.0
        %2012 = vmatprep.subr.mxu0 0.0
        %2013 = vmatpush1.msra.mxu0 0.0
        %2014 = vmatprep.subr.mxu0 0.0
        %2015 = vmatpush1.msra.mxu0 0.0
        %2016 = vmatprep.subr.mxu0 0.0
        %2017 = vmatpush1.msra.mxu0 0.0
        %2018 = vmatprep.subr.mxu0 0.0
        %2019 = vmatpush1.msra.mxu0 0.0
        %2020 = vmatprep.subr.mxu0 0.0
        %2021 = vmatpush1.msra.mxu0 0.0
        %2022 = vmatprep.subr.mxu0 0.0
        %2023 = vmatpush1.msra.mxu0 0.0
        %2024 = vmatprep.subr.mxu0 0.0
        %2025 = vmatpush1.msra.mxu0 0.0
        %2026 = vmatprep.subr.mxu0 0.0
        %2027 = vmatpush1.msra.mxu0 0.0
        %2028 = vmatprep.subr.mxu0 0.0
        %2029 = vmatpush1.msra.mxu0 0.0
        %2030 = vmatprep.subr.mxu0 0.0
        %2031 = vmatpush1.msra.mxu0 0.0
        %2032 = vmatprep.subr.mxu0 0.0
        %2033 = vmatpush1.msra.mxu0 0.0
        %2034 = vmatprep.subr.mxu0 0.0
        %2035 = vmatpush1.msra.mxu0 0.0
        %2036 = vmatprep.subr.mxu0 0.0
        %2037 = vmatpush1.msra.mxu0 0.0
        %2038 = vmatprep.subr.mxu0 0.0
        %2039 = vmatpush1.msra.mxu0 0.0
        %2040 = vmatprep.subr.mxu0 0.0
        %2041 = vmatpush1.msra.mxu0 0.0
        %2042 = vmatprep.subr.mxu0 0.0
        %2043 = vmatpush1.msra.mxu0 0.0
        %2044 = vmatprep.subr.mxu0 0.0
        %2045 = vmatpush1.msra.mxu0 0.0
        %2046 = vmatprep.subr.mxu0 0.0
        %2047 = vmatpush1.msra.mxu0 0.0
        %2048 = vmatprep.subr.mxu0 0.0
        %2049 = vmatpush1.msra.mxu0 0.0
        %2050 = vmatprep.subr.mxu0 0.0
        %2051 = vmatpush1.msra.mxu0 0.0
        %2052 = vmatprep.subr.mxu0 0.0
        %2053 = vmatpush1.msra.mxu0 0.0
        %2054 = vmatprep.subr.mxu0 0.0
        %2055 = vmatpush1.msra.mxu0 0.0
        %2056 = vmatprep.subr.mxu0 0.0
        %2057 = vmatpush1.msra.mxu0 0.0
        %2058 = vmatprep.subr.mxu0 0.0
        %2059 = vmatpush1.msra.mxu0 0.0
        %2060 = vmatprep.subr.mxu0 0.0
        %2061 = vmatpush1.msra.mxu0 0.0
        %2062 = vmatprep.mubr.f32.mxu0 0.0
        %2063 = vmatmul.mubr.f32.gmra.mrb[0].mxu0 %v1993
        %v2064 = vpop.f32.mrb[0].mxu0
        %v2065 = vadd.f32 0.0, %v2064
        %v2066 = vpop.f32.mrb[0].mxu0
        %2067 = vmatprep.mubr.f32.mxu0 0.0
        %2068 = vmatmul.mubr.f32.gmra.mrb[0].mxu0 %v1996
        %v2069 = vpop.f32.mrb[0].mxu0
        %v2070 = vadd.f32 0.0, %v2069
        %v2071 = vpop.f32.mrb[0].mxu0
        %2072 = vdwg.mxu0
        %v2073 = vlaneseq
        %v2074 = vshrl.u32 %v2073, 7
        %v2075 = vsub.s32 1, %v2074
        %v2076 = vrot.slane %v1990, %v2075
        %2078 = vrot.lane.b32.xlu0 %v2076, 32
        %v2079 = vpop.permute.xlu0 %2078
        %v2081 = vadd.f32 %v2065, %v2079
        %v2082 = vadd.f32 %v2070, %v2079
        %v2083 = vlaneseq
        %v2084 = vshrl.u32 %v2083, 7
        %v2085 = vsub.s32 2, %v2084
        %v2086 = vrot.slane %v1990, %v2085
        %2088 = vrot.lane.b32.xlu0 %v2086, 64
        %v2089 = vpop.permute.xlu0 %2088
        %v2091 = vadd.f32 %v2065, %v2089
        %v2092 = vadd.f32 %v2070, %v2089
        %v2093 = vlaneseq
        %v2094 = vshrl.u32 %v2093, 7
        %v2095 = vsub.s32 3, %v2094
        %v2096 = vrot.slane %v1990, %v2095
        %2098 = vrot.lane.b32.xlu0 %v2096, 96
        %v2099 = vpop.permute.xlu0 %2098
        %v2101 = vadd.f32 %v2065, %v2099
        %v2102 = vadd.f32 %v2070, %v2099
        %v2103 = vlaneseq
        %v2104 = vshrl.u32 %v2103, 7
        %v2105 = vsub.s32 0, %v2104
        %v2106 = vrot.slane %v1990, %v2105
        %2107 = vmatprep.subr.mxu0 0.0
        %2108 = vmatpush1.msra.mxu0 %v2065
        %2109 = vmatprep.subr.mxu0 0.0
        %2110 = vmatpush1.msra.mxu0 %v2070
        %2111 = vmatprep.subr.mxu0 0.0
        %2112 = vmatpush1.msra.mxu0 0.0
        %2113 = vmatprep.subr.mxu0 0.0
        %2114 = vmatpush1.msra.mxu0 0.0
        %2115 = vmatprep.subr.mxu0 0.0
        %2116 = vmatpush1.msra.mxu0 0.0
        %2117 = vmatprep.subr.mxu0 0.0
        %2118 = vmatpush1.msra.mxu0 0.0
        %2119 = vmatprep.subr.mxu0 0.0
        %2120 = vmatpush1.msra.mxu0 0.0
        %2121 = vmatprep.subr.mxu0 0.0
        %2122 = vmatpush1.msra.mxu0 0.0
        %2123 = vmatprep.subr.mxu0 0.0
        %2124 = vmatpush1.msra.mxu0 0.0
        %2125 = vmatprep.subr.mxu0 0.0
        %2126 = vmatpush1.msra.mxu0 0.0
        %2127 = vmatprep.subr.mxu0 0.0
        %2128 = vmatpush1.msra.mxu0 0.0
        %2129 = vmatprep.subr.mxu0 0.0
        %2130 = vmatpush1.msra.mxu0 0.0
        %2131 = vmatprep.subr.mxu0 0.0
        %2132 = vmatpush1.msra.mxu0 0.0
        %2133 = vmatprep.subr.mxu0 0.0
        %2134 = vmatpush1.msra.mxu0 0.0
        %2135 = vmatprep.subr.mxu0 0.0
        %2136 = vmatpush1.msra.mxu0 0.0
        %2137 = vmatprep.subr.mxu0 0.0
        %2138 = vmatpush1.msra.mxu0 0.0
        %2139 = vmatprep.subr.mxu0 0.0
        %2140 = vmatpush1.msra.mxu0 0.0
        %2141 = vmatprep.subr.mxu0 0.0
        %2142 = vmatpush1.msra.mxu0 0.0
        %2143 = vmatprep.subr.mxu0 0.0
        %2144 = vmatpush1.msra.mxu0 0.0
        %2145 = vmatprep.subr.mxu0 0.0
        %2146 = vmatpush1.msra.mxu0 0.0
        %2147 = vmatprep.subr.mxu0 0.0
        %2148 = vmatpush1.msra.mxu0 0.0
        %2149 = vmatprep.subr.mxu0 0.0
        %2150 = vmatpush1.msra.mxu0 0.0
        %2151 = vmatprep.subr.mxu0 0.0
        %2152 = vmatpush1.msra.mxu0 0.0
        %2153 = vmatprep.subr.mxu0 0.0
        %2154 = vmatpush1.msra.mxu0 0.0
        %2155 = vmatprep.subr.mxu0 0.0
        %2156 = vmatpush1.msra.mxu0 0.0
        %2157 = vmatprep.subr.mxu0 0.0
        %2158 = vmatpush1.msra.mxu0 0.0
        %2159 = vmatprep.subr.mxu0 0.0
        %2160 = vmatpush1.msra.mxu0 0.0
        %2161 = vmatprep.subr.mxu0 0.0
        %2162 = vmatpush1.msra.mxu0 0.0
        %2163 = vmatprep.subr.mxu0 0.0
        %2164 = vmatpush1.msra.mxu0 0.0
        %2165 = vmatprep.subr.mxu0 0.0
        %2166 = vmatpush1.msra.mxu0 0.0
        %2167 = vmatprep.subr.mxu0 0.0
        %2168 = vmatpush1.msra.mxu0 0.0
        %2169 = vmatprep.subr.mxu0 0.0
        %2170 = vmatpush1.msra.mxu0 0.0
        %2171 = vmatprep.mubr.f32.mxu0 0.0
        %2172 = vmatmul.mubr.f32.gmra.mrb[0].mxu0 %v628
        %v2173 = vpop.f32.mrb[0].mxu0
        %v2174 = vadd.f32 %v2106, %v2173
        %v2175 = vpop.f32.mrb[0].mxu0
        %2176 = vmatprep.mubr.f32.mxu0 0.0
        %2177 = vmatmul.mubr.f32.gmra.mrb[0].mxu0 %v631
        %v2178 = vpop.f32.mrb[0].mxu0
        %v2179 = vadd.f32 %v2106, %v2178
        %v2180 = vpop.f32.mrb[0].mxu0
        %2181 = vdwg.mxu0
        %v2182 = vadd.f32 %v1969, %v2174
        %v2183 = vadd.f32 %v1970, %v2179
        %v2184 = vsel %vm510, %v2182, 0.0
        %2185 = vadd.xlane.f32.xlu0 %v2184
        %v2186 = vpop.xlane.xlu0 %2185
        %v2187 = vsel %vm510, %v2183, 0.0
        %2188 = vadd.xlane.f32.xlu0 %v2187
        %v2189 = vpop.xlane.xlu0 %2188
        %v2190 = vmul.f32 %v2186, %v716
        %v2191 = vmul.f32 %v2189, %v716
        %v2192 = vsub.f32 %v2182, %v2190
        %v2193 = vsub.f32 %v2183, %v2191
        %v2194 = vmul.f32 %v2192, %v2192
        %v2195 = vmul.f32 %v2193, %v2193
        %v2196 = vsel %vm510, %v2194, 0.0
        %2197 = vadd.xlane.f32.xlu0 %v2196
        %v2198 = vpop.xlane.xlu0 %2197
        %v2199 = vsel %vm510, %v2195, 0.0
        %2200 = vadd.xlane.f32.xlu0 %v2199
        %v2201 = vpop.xlane.xlu0 %2200
        %v2202 = vmul.f32 %v2198, %v716
        %v2203 = vmul.f32 %v2201, %v716
        %v2204 = vadd.f32 %v2202, 1e-05
        %v2205 = vadd.f32 %v2203, 1e-05
        %v2206 = vrsqrt.pop %v2204
        %v2207 = vrsqrt.pop %v2205
        %v2208 = vmul.f32 %v2192, %v2206
        %v2209 = vmul.f32 %v2193, %v2207
        %v2210 = vlaneseq
        %v2211 = vshrl.u32 %v2210, 7
        %v2212 = vsub.s32 0, %v2211
        %v2213 = vrot.slane %v1991, %v2212
        %v2214 = vmul.f32 %v2208, %v2213
        %v2215 = vmul.f32 %v2209, %v2213
        %v2216 = vlaneseq
        %v2217 = vshrl.u32 %v2216, 7
        %v2218 = vsub.s32 1, %v2217
        %v2219 = vrot.slane %v1991, %v2218
        %v2220 = vadd.f32 %v2214, %v2219
        %v2221 = vadd.f32 %v2215, %v2219
        %2224 = vrot.lane.b32.xlu0 %v2081, 96
        %v2225 = vpop.permute.xlu0 %2224
        %2226 = vrot.lane.b32.xlu0 %v2082, 96
        %v2227 = vpop.permute.xlu0 %2226
        %2230 = vrot.lane.b32.xlu0 %v2091, 64
        %v2231 = vpop.permute.xlu0 %2230
        %2232 = vrot.lane.b32.xlu0 %v2092, 64
        %v2233 = vpop.permute.xlu0 %2232
        %v2234 = vsel %vm761, %v2225, 0
        %v2236 = vsel %vm761, %v2227, 0
        %v2238 = vsel %vm761, %v2231, 0
        %v2240 = vsel %vm761, %v2233, 0
        %2242 = vmatprep.subr.mxu0 0.0
        %2243 = vmatpush1.xpose.msra.mxu0 %v2238
        %2244 = vmatprep.subr.mxu0 0.0
        %2245 = vmatpush1.xpose.msra.mxu0 %v2240
        %2246 = vmatprep.subr.mxu0 0.0
        %2247 = vmatpush1.xpose.msra.mxu0 0.0
        %2248 = vmatprep.subr.mxu0 0.0
        %2249 = vmatpush1.xpose.msra.mxu0 0.0
        %2250 = vmatprep.subr.mxu0 0.0
        %2251 = vmatpush1.xpose.msra.mxu0 0.0
        %2252 = vmatprep.subr.mxu0 0.0
        %2253 = vmatpush1.xpose.msra.mxu0 0.0
        %2254 = vmatprep.subr.mxu0 0.0
        %2255 = vmatpush1.xpose.msra.mxu0 0.0
        %2256 = vmatprep.subr.mxu0 0.0
        %2257 = vmatpush1.xpose.msra.mxu0 0.0
        %2258 = vmatprep.subr.mxu0 0.0
        %2259 = vmatpush1.xpose.msra.mxu0 0.0
        %2260 = vmatprep.subr.mxu0 0.0
        %2261 = vmatpush1.xpose.msra.mxu0 0.0
        %2262 = vmatprep.subr.mxu0 0.0
        %2263 = vmatpush1.xpose.msra.mxu0 0.0
        %2264 = vmatprep.subr.mxu0 0.0
        %2265 = vmatpush1.xpose.msra.mxu0 0.0
        %2266 = vmatprep.subr.mxu0 0.0
        %2267 = vmatpush1.xpose.msra.mxu0 0.0
        %2268 = vmatprep.subr.mxu0 0.0
        %2269 = vmatpush1.xpose.msra.mxu0 0.0
        %2270 = vmatprep.subr.mxu0 0.0
        %2271 = vmatpush1.xpose.msra.mxu0 0.0
        %2272 = vmatprep.subr.mxu0 0.0
        %2273 = vmatpush1.xpose.msra.mxu0 0.0
        %2274 = vmatprep.subr.mxu0 0.0
        %2275 = vmatpush1.xpose.msra.mxu0 0.0
        %2276 = vmatprep.subr.mxu0 0.0
        %2277 = vmatpush1.xpose.msra.mxu0 0.0
        %2278 = vmatprep.subr.mxu0 0.0
        %2279 = vmatpush1.xpose.msra.mxu0 0.0
        %2280 = vmatprep.subr.mxu0 0.0
        %2281 = vmatpush1.xpose.msra.mxu0 0.0
        %2282 = vmatprep.subr.mxu0 0.0
        %2283 = vmatpush1.xpose.msra.mxu0 0.0
        %2284 = vmatprep.subr.mxu0 0.0
        %2285 = vmatpush1.xpose.msra.mxu0 0.0
        %2286 = vmatprep.subr.mxu0 0.0
        %2287 = vmatpush1.xpose.msra.mxu0 0.0
        %2288 = vmatprep.subr.mxu0 0.0
        %2289 = vmatpush1.xpose.msra.mxu0 0.0
        %2290 = vmatprep.subr.mxu0 0.0
        %2291 = vmatpush1.xpose.msra.mxu0 0.0
        %2292 = vmatprep.subr.mxu0 0.0
        %2293 = vmatpush1.xpose.msra.mxu0 0.0
        %2294 = vmatprep.subr.mxu0 0.0
        %2295 = vmatpush1.xpose.msra.mxu0 0.0
        %2296 = vmatprep.subr.mxu0 0.0
        %2297 = vmatpush1.xpose.msra.mxu0 0.0
        %2298 = vmatprep.subr.mxu0 0.0
        %2299 = vmatpush1.xpose.msra.mxu0 0.0
        %2300 = vmatprep.subr.mxu0 0.0
        %2301 = vmatpush1.xpose.msra.mxu0 0.0
        %2302 = vmatprep.subr.mxu0 0.0
        %2303 = vmatpush1.xpose.msra.mxu0 0.0
        %2304 = vmatprep.subr.mxu0 0.0
        %2305 = vmatpush1.xpose.msra.mxu0 0.0
        %2306 = vmatprep.mubr.f32.mxu0 0.0
        %2307 = vmatmul.mubr.f32.gmra.mrb[0].mxu0 %v2234
        %v2308 = vpop.f32.mrb[0].mxu0
        %v2309 = vadd.f32 0.0, %v2308
        %v2310 = vpop.f32.mrb[0].mxu0
        %2311 = vmatprep.mubr.f32.mxu0 0.0
        %2312 = vmatmul.mubr.f32.gmra.mrb[0].mxu0 %v2236
        %v2313 = vpop.f32.mrb[0].mxu0
        %v2314 = vadd.f32 0.0, %v2313
        %v2315 = vpop.f32.mrb[0].mxu0
        %2316 = vdwg.mxu0
        %v2317 = vmul.f32 %v2309, 0.35355338
        %v2318 = vmul.f32 %v2314, 0.35355338
        %v2319 = vadd.f32 %v2317, %v851
        %v2320 = vadd.f32 %v2318, %v851
        %v2321 = vsel %vm626, %v2319, -inf
        %2322 = vmax.xlane.f32.xlu0 %v2321
        %v2323 = vpop.xlane.xlu0 %2322
        %v2324 = vsel %vm626, %v2320, -inf
        %2325 = vmax.xlane.f32.xlu0 %v2324
        %v2326 = vpop.xlane.xlu0 %2325
        %v2327 = vsub.f32 %v2319, %v2323
        %v2328 = vsub.f32 %v2320, %v2326
        %v2329 = vmul.f32 %v2327, 1.442695
        %v2330 = vpow.pop %v2329
        %v2331 = vmul.f32 %v2328, 1.442695
        %v2332 = vpow.pop %v2331
        %v2333 = vsel %vm626, %v2330, 0.0
        %2334 = vadd.xlane.f32.xlu0 %v2333
        %v2335 = vpop.xlane.xlu0 %2334
        %v2336 = vsel %vm626, %v2332, 0.0
        %2337 = vadd.xlane.f32.xlu0 %v2336
        %v2338 = vpop.xlane.xlu0 %2337
        %v2339 = vrcp.pop %v2335
        %v2340 = vmul.f32 %v2330, %v2339
        %v2341 = vrcp.pop %v2338
        %v2342 = vmul.f32 %v2332, %v2341
        %2345 = vrot.lane.b32.xlu0 %v2101, 32
        %v2346 = vpop.permute.xlu0 %2345
        %2347 = vrot.lane.b32.xlu0 %v2102, 32
        %v2348 = vpop.permute.xlu0 %2347
        %v2352 = vsel %vm626, %v2340, 0
        %v2355 = vsel %vm626, %v2342, 0
        %2357 = vmatprep.subr.mxu0 0.0
        %2358 = vmatpush1.msra.mxu0 %v2346
        %2359 = vmatprep.subr.mxu0 0.0
        %2360 = vmatpush1.msra.mxu0 %v2348
        %2361 = vmatprep.subr.mxu0 0.0
        %2362 = vmatpush1.msra.mxu0 0.0
        %2363 = vmatprep.subr.mxu0 0.0
        %2364 = vmatpush1.msra.mxu0 0.0
        %2365 = vmatprep.subr.mxu0 0.0
        %2366 = vmatpush1.msra.mxu0 0.0
        %2367 = vmatprep.subr.mxu0 0.0
        %2368 = vmatpush1.msra.mxu0 0.0
        %2369 = vmatprep.subr.mxu0 0.0
        %2370 = vmatpush1.msra.mxu0 0.0
        %2371 = vmatprep.subr.mxu0 0.0
        %2372 = vmatpush1.msra.mxu0 0.0
        %2373 = vmatprep.subr.mxu0 0.0
        %2374 = vmatpush1.msra.mxu0 0.0
        %2375 = vmatprep.subr.mxu0 0.0
        %2376 = vmatpush1.msra.mxu0 0.0
        %2377 = vmatprep.subr.mxu0 0.0
        %2378 = vmatpush1.msra.mxu0 0.0
        %2379 = vmatprep.subr.mxu0 0.0
        %2380 = vmatpush1.msra.mxu0 0.0
        %2381 = vmatprep.subr.mxu0 0.0
        %2382 = vmatpush1.msra.mxu0 0.0
        %2383 = vmatprep.subr.mxu0 0.0
        %2384 = vmatpush1.msra.mxu0 0.0
        %2385 = vmatprep.subr.mxu0 0.0
        %2386 = vmatpush1.msra.mxu0 0.0
        %2387 = vmatprep.subr.mxu0 0.0
        %2388 = vmatpush1.msra.mxu0 0.0
        %2389 = vmatprep.subr.mxu0 0.0
        %2390 = vmatpush1.msra.mxu0 0.0
        %2391 = vmatprep.subr.mxu0 0.0
        %2392 = vmatpush1.msra.mxu0 0.0
        %2393 = vmatprep.subr.mxu0 0.0
        %2394 = vmatpush1.msra.mxu0 0.0
        %2395 = vmatprep.subr.mxu0 0.0
        %2396 = vmatpush1.msra.mxu0 0.0
        %2397 = vmatprep.subr.mxu0 0.0
        %2398 = vmatpush1.msra.mxu0 0.0
        %2399 = vmatprep.subr.mxu0 0.0
        %2400 = vmatpush1.msra.mxu0 0.0
        %2401 = vmatprep.subr.mxu0 0.0
        %2402 = vmatpush1.msra.mxu0 0.0
        %2403 = vmatprep.subr.mxu0 0.0
        %2404 = vmatpush1.msra.mxu0 0.0
        %2405 = vmatprep.subr.mxu0 0.0
        %2406 = vmatpush1.msra.mxu0 0.0
        %2407 = vmatprep.subr.mxu0 0.0
        %2408 = vmatpush1.msra.mxu0 0.0
        %2409 = vmatprep.subr.mxu0 0.0
        %2410 = vmatpush1.msra.mxu0 0.0
        %2411 = vmatprep.subr.mxu0 0.0
        %2412 = vmatpush1.msra.mxu0 0.0
        %2413 = vmatprep.subr.mxu0 0.0
        %2414 = vmatpush1.msra.mxu0 0.0
        %2415 = vmatprep.subr.mxu0 0.0
        %2416 = vmatpush1.msra.mxu0 0.0
        %2417 = vmatprep.subr.mxu0 0.0
        %2418 = vmatpush1.msra.mxu0 0.0
        %2419 = vmatprep.subr.mxu0 0.0
        %2420 = vmatpush1.msra.mxu0 0.0
        %2421 = vmatprep.mubr.f32.mxu0 0.0
        %2422 = vmatmul.mubr.f32.gmra.mrb[0].mxu0 %v2352
        %v2423 = vpop.f32.mrb[0].mxu0
        %v2424 = vadd.f32 0.0, %v2423
        %v2425 = vpop.f32.mrb[0].mxu0
        %2426 = vmatprep.mubr.f32.mxu0 0.0
        %2427 = vmatmul.mubr.f32.gmra.mrb[0].mxu0 %v2355
        %v2428 = vpop.f32.mrb[0].mxu0
        %v2429 = vadd.f32 0.0, %v2428
        %v2430 = vpop.f32.mrb[0].mxu0
        %2431 = vdwg.mxu0
        %2432 = vrot.lane.b32.xlu0 %v2081, 88
        %v2433 = vpop.permute.xlu0 %2432
        %2434 = vrot.lane.b32.xlu0 %v2082, 88
        %v2435 = vpop.permute.xlu0 %2434
        %2436 = vrot.lane.b32.xlu0 %v2091, 56
        %v2437 = vpop.permute.xlu0 %2436
        %2438 = vrot.lane.b32.xlu0 %v2092, 56
        %v2439 = vpop.permute.xlu0 %2438
        %v2440 = vsel %vm761, %v2433, 0
        %v2442 = vsel %vm761, %v2435, 0
        %v2444 = vsel %vm761, %v2437, 0
        %v2446 = vsel %vm761, %v2439, 0
        %2448 = vmatprep.subr.mxu0 0.0
        %2449 = vmatpush1.xpose.msra.mxu0 %v2444
        %2450 = vmatprep.subr.mxu0 0.0
        %2451 = vmatpush1.xpose.msra.mxu0 %v2446
        %2452 = vmatprep.subr.mxu0 0.0
        %2453 = vmatpush1.xpose.msra.mxu0 0.0
        %2454 = vmatprep.subr.mxu0 0.0
        %2455 = vmatpush1.xpose.msra.mxu0 0.0
        %2456 = vmatprep.subr.mxu0 0.0
        %2457 = vmatpush1.xpose.msra.mxu0 0.0
        %2458 = vmatprep.subr.mxu0 0.0
        %2459 = vmatpush1.xpose.msra.mxu0 0.0
        %2460 = vmatprep.subr.mxu0 0.0
        %2461 = vmatpush1.xpose.msra.mxu0 0.0
        %2462 = vmatprep.subr.mxu0 0.0
        %2463 = vmatpush1.xpose.msra.mxu0 0.0
        %2464 = vmatprep.subr.mxu0 0.0
        %2465 = vmatpush1.xpose.msra.mxu0 0.0
        %2466 = vmatprep.subr.mxu0 0.0
        %2467 = vmatpush1.xpose.msra.mxu0 0.0
        %2468 = vmatprep.subr.mxu0 0.0
        %2469 = vmatpush1.xpose.msra.mxu0 0.0
        %2470 = vmatprep.subr.mxu0 0.0
        %2471 = vmatpush1.xpose.msra.mxu0 0.0
        %2472 = vmatprep.subr.mxu0 0.0
        %2473 = vmatpush1.xpose.msra.mxu0 0.0
        %2474 = vmatprep.subr.mxu0 0.0
        %2475 = vmatpush1.xpose.msra.mxu0 0.0
        %2476 = vmatprep.subr.mxu0 0.0
        %2477 = vmatpush1.xpose.msra.mxu0 0.0
        %2478 = vmatprep.subr.mxu0 0.0
        %2479 = vmatpush1.xpose.msra.mxu0 0.0
        %2480 = vmatprep.subr.mxu0 0.0
        %2481 = vmatpush1.xpose.msra.mxu0 0.0
        %2482 = vmatprep.subr.mxu0 0.0
        %2483 = vmatpush1.xpose.msra.mxu0 0.0
        %2484 = vmatprep.subr.mxu0 0.0
        %2485 = vmatpush1.xpose.msra.mxu0 0.0
        %2486 = vmatprep.subr.mxu0 0.0
        %2487 = vmatpush1.xpose.msra.mxu0 0.0
        %2488 = vmatprep.subr.mxu0 0.0
        %2489 = vmatpush1.xpose.msra.mxu0 0.0
        %2490 = vmatprep.subr.mxu0 0.0
        %2491 = vmatpush1.xpose.msra.mxu0 0.0
        %2492 = vmatprep.subr.mxu0 0.0
        %2493 = vmatpush1.xpose.msra.mxu0 0.0
        %2494 = vmatprep.subr.mxu0 0.0
        %2495 = vmatpush1.xpose.msra.mxu0 0.0
        %2496 = vmatprep.subr.mxu0 0.0
        %2497 = vmatpush1.xpose.msra.mxu0 0.0
        %2498 = vmatprep.subr.mxu0 0.0
        %2499 = vmatpush1.xpose.msra.mxu0 0.0
        %2500 = vmatprep.subr.mxu0 0.0
        %2501 = vmatpush1.xpose.msra.mxu0 0.0
        %2502 = vmatprep.subr.mxu0 0.0
        %2503 = vmatpush1.xpose.msra.mxu0 0.0
        %2504 = vmatprep.subr.mxu0 0.0
        %2505 = vmatpush1.xpose.msra.mxu0 0.0
        %2506 = vmatprep.subr.mxu0 0.0
        %2507 = vmatpush1.xpose.msra.mxu0 0.0
        %2508 = vmatprep.subr.mxu0 0.0
        %2509 = vmatpush1.xpose.msra.mxu0 0.0
        %2510 = vmatprep.subr.mxu0 0.0
        %2511 = vmatpush1.xpose.msra.mxu0 0.0
        %2512 = vmatprep.mubr.f32.mxu0 0.0
        %2513 = vmatmul.mubr.f32.gmra.mrb[0].mxu0 %v2440
        %v2514 = vpop.f32.mrb[0].mxu0
        %v2515 = vadd.f32 0.0, %v2514
        %v2516 = vpop.f32.mrb[0].mxu0
        %2517 = vmatprep.mubr.f32.mxu0 0.0
        %2518 = vmatmul.mubr.f32.gmra.mrb[0].mxu0 %v2442
        %v2519 = vpop.f32.mrb[0].mxu0
        %v2520 = vadd.f32 0.0, %v2519
        %v2521 = vpop.f32.mrb[0].mxu0
        %2522 = vdwg.mxu0
        %v2523 = vmul.f32 %v2515, 0.35355338
        %v2524 = vmul.f32 %v2520, 0.35355338
        %v2525 = vadd.f32 %v2523, %v851
        %v2526 = vadd.f32 %v2524, %v851
        %v2527 = vsel %vm626, %v2525, -inf
        %2528 = vmax.xlane.f32.xlu0 %v2527
        %v2529 = vpop.xlane.xlu0 %2528
        %v2530 = vsel %vm626, %v2526, -inf
        %2531 = vmax.xlane.f32.xlu0 %v2530
        %v2532 = vpop.xlane.xlu0 %2531
        %v2533 = vsub.f32 %v2525, %v2529
        %v2534 = vsub.f32 %v2526, %v2532
        %v2535 = vmul.f32 %v2533, 1.442695
        %v2536 = vpow.pop %v2535
        %v2537 = vmul.f32 %v2534, 1.442695
        %v2538 = vpow.pop %v2537
        %v2539 = vsel %vm626, %v2536, 0.0
        %2540 = vadd.xlane.f32.xlu0 %v2539
        %v2541 = vpop.xlane.xlu0 %2540
        %v2542 = vsel %vm626, %v2538, 0.0
        %2543 = vadd.xlane.f32.xlu0 %v2542
        %v2544 = vpop.xlane.xlu0 %2543
        %v2545 = vrcp.pop %v2541
        %v2546 = vmul.f32 %v2536, %v2545
        %v2547 = vrcp.pop %v2544
        %v2548 = vmul.f32 %v2538, %v2547
        %2549 = vrot.lane.b32.xlu0 %v2101, 24
        %v2550 = vpop.permute.xlu0 %2549
        %2551 = vrot.lane.b32.xlu0 %v2102, 24
        %v2552 = vpop.permute.xlu0 %2551
        %v2556 = vsel %vm626, %v2546, 0
        %v2559 = vsel %vm626, %v2548, 0
        %2561 = vmatprep.subr.mxu0 0.0
        %2562 = vmatpush1.msra.mxu0 %v2550
        %2563 = vmatprep.subr.mxu0 0.0
        %2564 = vmatpush1.msra.mxu0 %v2552
        %2565 = vmatprep.subr.mxu0 0.0
        %2566 = vmatpush1.msra.mxu0 0.0
        %2567 = vmatprep.subr.mxu0 0.0
        %2568 = vmatpush1.msra.mxu0 0.0
        %2569 = vmatprep.subr.mxu0 0.0
        %2570 = vmatpush1.msra.mxu0 0.0
        %2571 = vmatprep.subr.mxu0 0.0
        %2572 = vmatpush1.msra.mxu0 0.0
        %2573 = vmatprep.subr.mxu0 0.0
        %2574 = vmatpush1.msra.mxu0 0.0
        %2575 = vmatprep.subr.mxu0 0.0
        %2576 = vmatpush1.msra.mxu0 0.0
        %2577 = vmatprep.subr.mxu0 0.0
        %2578 = vmatpush1.msra.mxu0 0.0
        %2579 = vmatprep.subr.mxu0 0.0
        %2580 = vmatpush1.msra.mxu0 0.0
        %2581 = vmatprep.subr.mxu0 0.0
        %2582 = vmatpush1.msra.mxu0 0.0
        %2583 = vmatprep.subr.mxu0 0.0
        %2584 = vmatpush1.msra.mxu0 0.0
        %2585 = vmatprep.subr.mxu0 0.0
        %2586 = vmatpush1.msra.mxu0 0.0
        %2587 = vmatprep.subr.mxu0 0.0
        %2588 = vmatpush1.msra.mxu0 0.0
        %2589 = vmatprep.subr.mxu0 0.0
        %2590 = vmatpush1.msra.mxu0 0.0
        %2591 = vmatprep.subr.mxu0 0.0
        %2592 = vmatpush1.msra.mxu0 0.0
        %2593 = vmatprep.subr.mxu0 0.0
        %2594 = vmatpush1.msra.mxu0 0.0
        %2595 = vmatprep.subr.mxu0 0.0
        %2596 = vmatpush1.msra.mxu0 0.0
        %2597 = vmatprep.subr.mxu0 0.0
        %2598 = vmatpush1.msra.mxu0 0.0
        %2599 = vmatprep.subr.mxu0 0.0
        %2600 = vmatpush1.msra.mxu0 0.0
        %2601 = vmatprep.subr.mxu0 0.0
        %2602 = vmatpush1.msra.mxu0 0.0
        %2603 = vmatprep.subr.mxu0 0.0
        %2604 = vmatpush1.msra.mxu0 0.0
        %2605 = vmatprep.subr.mxu0 0.0
        %2606 = vmatpush1.msra.mxu0 0.0
        %2607 = vmatprep.subr.mxu0 0.0
        %2608 = vmatpush1.msra.mxu0 0.0
        %2609 = vmatprep.subr.mxu0 0.0
        %2610 = vmatpush1.msra.mxu0 0.0
        %2611 = vmatprep.subr.mxu0 0.0
        %2612 = vmatpush1.msra.mxu0 0.0
        %2613 = vmatprep.subr.mxu0 0.0
        %2614 = vmatpush1.msra.mxu0 0.0
        %2615 = vmatprep.subr.mxu0 0.0
        %2616 = vmatpush1.msra.mxu0 0.0
        %2617 = vmatprep.subr.mxu0 0.0
        %2618 = vmatpush1.msra.mxu0 0.0
        %2619 = vmatprep.subr.mxu0 0.0
        %2620 = vmatpush1.msra.mxu0 0.0
        %2621 = vmatprep.subr.mxu0 0.0
        %2622 = vmatpush1.msra.mxu0 0.0
        %2623 = vmatprep.subr.mxu0 0.0
        %2624 = vmatpush1.msra.mxu0 0.0
        %2625 = vmatprep.mubr.f32.mxu0 0.0
        %2626 = vmatmul.mubr.f32.gmra.mrb[0].mxu0 %v2556
        %v2627 = vpop.f32.mrb[0].mxu0
        %v2628 = vadd.f32 0.0, %v2627
        %v2629 = vpop.f32.mrb[0].mxu0
        %2630 = vmatprep.mubr.f32.mxu0 0.0
        %2631 = vmatmul.mubr.f32.gmra.mrb[0].mxu0 %v2559
        %v2632 = vpop.f32.mrb[0].mxu0
        %v2633 = vadd.f32 0.0, %v2632
        %v2634 = vpop.f32.mrb[0].mxu0
        %2635 = vdwg.mxu0
        %2636 = vrot.lane.b32.xlu0 %v2081, 80
        %v2637 = vpop.permute.xlu0 %2636
        %2638 = vrot.lane.b32.xlu0 %v2082, 80
        %v2639 = vpop.permute.xlu0 %2638
        %2640 = vrot.lane.b32.xlu0 %v2091, 48
        %v2641 = vpop.permute.xlu0 %2640
        %2642 = vrot.lane.b32.xlu0 %v2092, 48
        %v2643 = vpop.permute.xlu0 %2642
        %v2644 = vsel %vm761, %v2637, 0
        %v2646 = vsel %vm761, %v2639, 0
        %v2648 = vsel %vm761, %v2641, 0
        %v2650 = vsel %vm761, %v2643, 0
        %2652 = vmatprep.subr.mxu0 0.0
        %2653 = vmatpush1.xpose.msra.mxu0 %v2648
        %2654 = vmatprep.subr.mxu0 0.0
        %2655 = vmatpush1.xpose.msra.mxu0 %v2650
        %2656 = vmatprep.subr.mxu0 0.0
        %2657 = vmatpush1.xpose.msra.mxu0 0.0
        %2658 = vmatprep.subr.mxu0 0.0
        %2659 = vmatpush1.xpose.msra.mxu0 0.0
        %2660 = vmatprep.subr.mxu0 0.0
        %2661 = vmatpush1.xpose.msra.mxu0 0.0
        %2662 = vmatprep.subr.mxu0 0.0
        %2663 = vmatpush1.xpose.msra.mxu0 0.0
        %2664 = vmatprep.subr.mxu0 0.0
        %2665 = vmatpush1.xpose.msra.mxu0 0.0
        %2666 = vmatprep.subr.mxu0 0.0
        %2667 = vmatpush1.xpose.msra.mxu0 0.0
        %2668 = vmatprep.subr.mxu0 0.0
        %2669 = vmatpush1.xpose.msra.mxu0 0.0
        %2670 = vmatprep.subr.mxu0 0.0
        %2671 = vmatpush1.xpose.msra.mxu0 0.0
        %2672 = vmatprep.subr.mxu0 0.0
        %2673 = vmatpush1.xpose.msra.mxu0 0.0
        %2674 = vmatprep.subr.mxu0 0.0
        %2675 = vmatpush1.xpose.msra.mxu0 0.0
        %2676 = vmatprep.subr.mxu0 0.0
        %2677 = vmatpush1.xpose.msra.mxu0 0.0
        %2678 = vmatprep.subr.mxu0 0.0
        %2679 = vmatpush1.xpose.msra.mxu0 0.0
        %2680 = vmatprep.subr.mxu0 0.0
        %2681 = vmatpush1.xpose.msra.mxu0 0.0
        %2682 = vmatprep.subr.mxu0 0.0
        %2683 = vmatpush1.xpose.msra.mxu0 0.0
        %2684 = vmatprep.subr.mxu0 0.0
        %2685 = vmatpush1.xpose.msra.mxu0 0.0
        %2686 = vmatprep.subr.mxu0 0.0
        %2687 = vmatpush1.xpose.msra.mxu0 0.0
        %2688 = vmatprep.subr.mxu0 0.0
        %2689 = vmatpush1.xpose.msra.mxu0 0.0
        %2690 = vmatprep.subr.mxu0 0.0
        %2691 = vmatpush1.xpose.msra.mxu0 0.0
        %2692 = vmatprep.subr.mxu0 0.0
        %2693 = vmatpush1.xpose.msra.mxu0 0.0
        %2694 = vmatprep.subr.mxu0 0.0
        %2695 = vmatpush1.xpose.msra.mxu0 0.0
        %2696 = vmatprep.subr.mxu0 0.0
        %2697 = vmatpush1.xpose.msra.mxu0 0.0
        %2698 = vmatprep.subr.mxu0 0.0
        %2699 = vmatpush1.xpose.msra.mxu0 0.0
        %2700 = vmatprep.subr.mxu0 0.0
        %2701 = vmatpush1.xpose.msra.mxu0 0.0
        %2702 = vmatprep.subr.mxu0 0.0
        %2703 = vmatpush1.xpose.msra.mxu0 0.0
        %2704 = vmatprep.subr.mxu0 0.0
        %2705 = vmatpush1.xpose.msra.mxu0 0.0
        %2706 = vmatprep.subr.mxu0 0.0
        %2707 = vmatpush1.xpose.msra.mxu0 0.0
        %2708 = vmatprep.subr.mxu0 0.0
        %2709 = vmatpush1.xpose.msra.mxu0 0.0
        %2710 = vmatprep.subr.mxu0 0.0
        %2711 = vmatpush1.xpose.msra.mxu0 0.0
        %2712 = vmatprep.subr.mxu0 0.0
        %2713 = vmatpush1.xpose.msra.mxu0 0.0
        %2714 = vmatprep.subr.mxu0 0.0
        %2715 = vmatpush1.xpose.msra.mxu0 0.0
        %2716 = vmatprep.mubr.f32.mxu0 0.0
        %2717 = vmatmul.mubr.f32.gmra.mrb[0].mxu0 %v2644
        %v2718 = vpop.f32.mrb[0].mxu0
        %v2719 = vadd.f32 0.0, %v2718
        %v2720 = vpop.f32.mrb[0].mxu0
        %2721 = vmatprep.mubr.f32.mxu0 0.0
        %2722 = vmatmul.mubr.f32.gmra.mrb[0].mxu0 %v2646
        %v2723 = vpop.f32.mrb[0].mxu0
        %v2724 = vadd.f32 0.0, %v2723
        %v2725 = vpop.f32.mrb[0].mxu0
        %2726 = vdwg.mxu0
        %v2727 = vmul.f32 %v2719, 0.35355338
        %v2728 = vmul.f32 %v2724, 0.35355338
        %v2729 = vadd.f32 %v2727, %v851
        %v2730 = vadd.f32 %v2728, %v851
        %v2731 = vsel %vm626, %v2729, -inf
        %2732 = vmax.xlane.f32.xlu0 %v2731
        %v2733 = vpop.xlane.xlu0 %2732
        %v2734 = vsel %vm626, %v2730, -inf
        %2735 = vmax.xlane.f32.xlu0 %v2734
        %v2736 = vpop.xlane.xlu0 %2735
        %v2737 = vsub.f32 %v2729, %v2733
        %v2738 = vsub.f32 %v2730, %v2736
        %v2739 = vmul.f32 %v2737, 1.442695
        %v2740 = vpow.pop %v2739
        %v2741 = vmul.f32 %v2738, 1.442695
        %v2742 = vpow.pop %v2741
        %v2743 = vsel %vm626, %v2740, 0.0
        %2744 = vadd.xlane.f32.xlu0 %v2743
        %v2745 = vpop.xlane.xlu0 %2744
        %v2746 = vsel %vm626, %v2742, 0.0
        %2747 = vadd.xlane.f32.xlu0 %v2746
        %v2748 = vpop.xlane.xlu0 %2747
        %v2749 = vrcp.pop %v2745
        %v2750 = vmul.f32 %v2740, %v2749
        %v2751 = vrcp.pop %v2748
        %v2752 = vmul.f32 %v2742, %v2751
        %2753 = vrot.lane.b32.xlu0 %v2101, 16
        %v2754 = vpop.permute.xlu0 %2753
        %2755 = vrot.lane.b32.xlu0 %v2102, 16
        %v2756 = vpop.permute.xlu0 %2755
        %v2760 = vsel %vm626, %v2750, 0
        %v2763 = vsel %vm626, %v2752, 0
        %2765 = vmatprep.subr.mxu0 0.0
        %2766 = vmatpush1.msra.mxu0 %v2754
        %2767 = vmatprep.subr.mxu0 0.0
        %2768 = vmatpush1.msra.mxu0 %v2756
        %2769 = vmatprep.subr.mxu0 0.0
        %2770 = vmatpush1.msra.mxu0 0.0
        %2771 = vmatprep.subr.mxu0 0.0
        %2772 = vmatpush1.msra.mxu0 0.0
        %2773 = vmatprep.subr.mxu0 0.0
        %2774 = vmatpush1.msra.mxu0 0.0
        %2775 = vmatprep.subr.mxu0 0.0
        %2776 = vmatpush1.msra.mxu0 0.0
        %2777 = vmatprep.subr.mxu0 0.0
        %2778 = vmatpush1.msra.mxu0 0.0
        %2779 = vmatprep.subr.mxu0 0.0
        %2780 = vmatpush1.msra.mxu0 0.0
        %2781 = vmatprep.subr.mxu0 0.0
        %2782 = vmatpush1.msra.mxu0 0.0
        %2783 = vmatprep.subr.mxu0 0.0
        %2784 = vmatpush1.msra.mxu0 0.0
        %2785 = vmatprep.subr.mxu0 0.0
        %2786 = vmatpush1.msra.mxu0 0.0
        %2787 = vmatprep.subr.mxu0 0.0
        %2788 = vmatpush1.msra.mxu0 0.0
        %2789 = vmatprep.subr.mxu0 0.0
        %2790 = vmatpush1.msra.mxu0 0.0
        %2791 = vmatprep.subr.mxu0 0.0
        %2792 = vmatpush1.msra.mxu0 0.0
        %2793 = vmatprep.subr.mxu0 0.0
        %2794 = vmatpush1.msra.mxu0 0.0
        %2795 = vmatprep.subr.mxu0 0.0
        %2796 = vmatpush1.msra.mxu0 0.0
        %2797 = vmatprep.subr.mxu0 0.0
        %2798 = vmatpush1.msra.mxu0 0.0
        %2799 = vmatprep.subr.mxu0 0.0
        %2800 = vmatpush1.msra.mxu0 0.0
        %2801 = vmatprep.subr.mxu0 0.0
        %2802 = vmatpush1.msra.mxu0 0.0
        %2803 = vmatprep.subr.mxu0 0.0
        %2804 = vmatpush1.msra.mxu0 0.0
        %2805 = vmatprep.subr.mxu0 0.0
        %2806 = vmatpush1.msra.mxu0 0.0
        %2807 = vmatprep.subr.mxu0 0.0
        %2808 = vmatpush1.msra.mxu0 0.0
        %2809 = vmatprep.subr.mxu0 0.0
        %2810 = vmatpush1.msra.mxu0 0.0
        %2811 = vmatprep.subr.mxu0 0.0
        %2812 = vmatpush1.msra.mxu0 0.0
        %2813 = vmatprep.subr.mxu0 0.0
        %2814 = vmatpush1.msra.mxu0 0.0
        %2815 = vmatprep.subr.mxu0 0.0
        %2816 = vmatpush1.msra.mxu0 0.0
        %2817 = vmatprep.subr.mxu0 0.0
        %2818 = vmatpush1.msra.mxu0 0.0
        %2819 = vmatprep.subr.mxu0 0.0
        %2820 = vmatpush1.msra.mxu0 0.0
        %2821 = vmatprep.subr.mxu0 0.0
        %2822 = vmatpush1.msra.mxu0 0.0
        %2823 = vmatprep.subr.mxu0 0.0
        %2824 = vmatpush1.msra.mxu0 0.0
        %2825 = vmatprep.subr.mxu0 0.0
        %2826 = vmatpush1.msra.mxu0 0.0
        %2827 = vmatprep.subr.mxu0 0.0
        %2828 = vmatpush1.msra.mxu0 0.0
        %2829 = vmatprep.mubr.f32.mxu0 0.0
        %2830 = vmatmul.mubr.f32.gmra.mrb[0].mxu0 %v2760
        %v2831 = vpop.f32.mrb[0].mxu0
        %v2832 = vadd.f32 0.0, %v2831
        %v2833 = vpop.f32.mrb[0].mxu0
        %2834 = vmatprep.mubr.f32.mxu0 0.0
        %2835 = vmatmul.mubr.f32.gmra.mrb[0].mxu0 %v2763
        %v2836 = vpop.f32.mrb[0].mxu0
        %v2837 = vadd.f32 0.0, %v2836
        %v2838 = vpop.f32.mrb[0].mxu0
        %2839 = vdwg.mxu0
        %2840 = vrot.lane.b32.xlu0 %v2081, 72
        %v2841 = vpop.permute.xlu0 %2840
        %2842 = vrot.lane.b32.xlu0 %v2082, 72
        %v2843 = vpop.permute.xlu0 %2842
        %2844 = vrot.lane.b32.xlu0 %v2091, 40
        %v2845 = vpop.permute.xlu0 %2844
        %2846 = vrot.lane.b32.xlu0 %v2092, 40
        %v2847 = vpop.permute.xlu0 %2846
        %v2848 = vsel %vm761, %v2841, 0
        %v2850 = vsel %vm761, %v2843, 0
        %v2852 = vsel %vm761, %v2845, 0
        %v2854 = vsel %vm761, %v2847, 0
        %2856 = vmatprep.subr.mxu0 0.0
        %2857 = vmatpush1.xpose.msra.mxu0 %v2852
        %2858 = vmatprep.subr.mxu0 0.0
        %2859 = vmatpush1.xpose.msra.mxu0 %v2854
        %2860 = vmatprep.subr.mxu0 0.0
        %2861 = vmatpush1.xpose.msra.mxu0 0.0
        %2862 = vmatprep.subr.mxu0 0.0
        %2863 = vmatpush1.xpose.msra.mxu0 0.0
        %2864 = vmatprep.subr.mxu0 0.0
        %2865 = vmatpush1.xpose.msra.mxu0 0.0
        %2866 = vmatprep.subr.mxu0 0.0
        %2867 = vmatpush1.xpose.msra.mxu0 0.0
        %2868 = vmatprep.subr.mxu0 0.0
        %2869 = vmatpush1.xpose.msra.mxu0 0.0
        %2870 = vmatprep.subr.mxu0 0.0
        %2871 = vmatpush1.xpose.msra.mxu0 0.0
        %2872 = vmatprep.subr.mxu0 0.0
        %2873 = vmatpush1.xpose.msra.mxu0 0.0
        %2874 = vmatprep.subr.mxu0 0.0
        %2875 = vmatpush1.xpose.msra.mxu0 0.0
        %2876 = vmatprep.subr.mxu0 0.0
        %2877 = vmatpush1.xpose.msra.mxu0 0.0
        %2878 = vmatprep.subr.mxu0 0.0
        %2879 = vmatpush1.xpose.msra.mxu0 0.0
        %2880 = vmatprep.subr.mxu0 0.0
        %2881 = vmatpush1.xpose.msra.mxu0 0.0
        %2882 = vmatprep.subr.mxu0 0.0
        %2883 = vmatpush1.xpose.msra.mxu0 0.0
        %2884 = vmatprep.subr.mxu0 0.0
        %2885 = vmatpush1.xpose.msra.mxu0 0.0
        %2886 = vmatprep.subr.mxu0 0.0
        %2887 = vmatpush1.xpose.msra.mxu0 0.0
        %2888 = vmatprep.subr.mxu0 0.0
        %2889 = vmatpush1.xpose.msra.mxu0 0.0
        %2890 = vmatprep.subr.mxu0 0.0
        %2891 = vmatpush1.xpose.msra.mxu0 0.0
        %2892 = vmatprep.subr.mxu0 0.0
        %2893 = vmatpush1.xpose.msra.mxu0 0.0
        %2894 = vmatprep.subr.mxu0 0.0
        %2895 = vmatpush1.xpose.msra.mxu0 0.0
        %2896 = vmatprep.subr.mxu0 0.0
        %2897 = vmatpush1.xpose.msra.mxu0 0.0
        %2898 = vmatprep.subr.mxu0 0.0
        %2899 = vmatpush1.xpose.msra.mxu0 0.0
        %2900 = vmatprep.subr.mxu0 0.0
        %2901 = vmatpush1.xpose.msra.mxu0 0.0
        %2902 = vmatprep.subr.mxu0 0.0
        %2903 = vmatpush1.xpose.msra.mxu0 0.0
        %2904 = vmatprep.subr.mxu0 0.0
        %2905 = vmatpush1.xpose.msra.mxu0 0.0
        %2906 = vmatprep.subr.mxu0 0.0
        %2907 = vmatpush1.xpose.msra.mxu0 0.0
        %2908 = vmatprep.subr.mxu0 0.0
        %2909 = vmatpush1.xpose.msra.mxu0 0.0
        %2910 = vmatprep.subr.mxu0 0.0
        %2911 = vmatpush1.xpose.msra.mxu0 0.0
        %2912 = vmatprep.subr.mxu0 0.0
        %2913 = vmatpush1.xpose.msra.mxu0 0.0
        %2914 = vmatprep.subr.mxu0 0.0
        %2915 = vmatpush1.xpose.msra.mxu0 0.0
        %2916 = vmatprep.subr.mxu0 0.0
        %2917 = vmatpush1.xpose.msra.mxu0 0.0
        %2918 = vmatprep.subr.mxu0 0.0
        %2919 = vmatpush1.xpose.msra.mxu0 0.0
        %2920 = vmatprep.mubr.f32.mxu0 0.0
        %2921 = vmatmul.mubr.f32.gmra.mrb[0].mxu0 %v2848
        %v2922 = vpop.f32.mrb[0].mxu0
        %v2923 = vadd.f32 0.0, %v2922
        %v2924 = vpop.f32.mrb[0].mxu0
        %2925 = vmatprep.mubr.f32.mxu0 0.0
        %2926 = vmatmul.mubr.f32.gmra.mrb[0].mxu0 %v2850
        %v2927 = vpop.f32.mrb[0].mxu0
        %v2928 = vadd.f32 0.0, %v2927
        %v2929 = vpop.f32.mrb[0].mxu0
        %2930 = vdwg.mxu0
        %v2931 = vmul.f32 %v2923, 0.35355338
        %v2932 = vmul.f32 %v2928, 0.35355338
        %v2933 = vadd.f32 %v2931, %v851
        %v2934 = vadd.f32 %v2932, %v851
        %v2935 = vsel %vm626, %v2933, -inf
        %2936 = vmax.xlane.f32.xlu0 %v2935
        %v2937 = vpop.xlane.xlu0 %2936
        %v2938 = vsel %vm626, %v2934, -inf
        %2939 = vmax.xlane.f32.xlu0 %v2938
        %v2940 = vpop.xlane.xlu0 %2939
        %v2941 = vsub.f32 %v2933, %v2937
        %v2942 = vsub.f32 %v2934, %v2940
        %v2943 = vmul.f32 %v2941, 1.442695
        %v2944 = vpow.pop %v2943
        %v2945 = vmul.f32 %v2942, 1.442695
        %v2946 = vpow.pop %v2945
        %v2947 = vsel %vm626, %v2944, 0.0
        %2948 = vadd.xlane.f32.xlu0 %v2947
        %v2949 = vpop.xlane.xlu0 %2948
        %v2950 = vsel %vm626, %v2946, 0.0
        %2951 = vadd.xlane.f32.xlu0 %v2950
        %v2952 = vpop.xlane.xlu0 %2951
        %v2953 = vrcp.pop %v2949
        %v2954 = vmul.f32 %v2944, %v2953
        %v2955 = vrcp.pop %v2952
        %v2956 = vmul.f32 %v2946, %v2955
        %2957 = vrot.lane.b32.xlu0 %v2101, 8
        %v2958 = vpop.permute.xlu0 %2957
        %2959 = vrot.lane.b32.xlu0 %v2102, 8
        %v2960 = vpop.permute.xlu0 %2959
        %v2964 = vsel %vm626, %v2954, 0
        %v2967 = vsel %vm626, %v2956, 0
        %2969 = vmatprep.subr.mxu0 0.0
        %2970 = vmatpush1.msra.mxu0 %v2958
        %2971 = vmatprep.subr.mxu0 0.0
        %2972 = vmatpush1.msra.mxu0 %v2960
        %2973 = vmatprep.subr.mxu0 0.0
        %2974 = vmatpush1.msra.mxu0 0.0
        %2975 = vmatprep.subr.mxu0 0.0
        %2976 = vmatpush1.msra.mxu0 0.0
        %2977 = vmatprep.subr.mxu0 0.0
        %2978 = vmatpush1.msra.mxu0 0.0
        %2979 = vmatprep.subr.mxu0 0.0
        %2980 = vmatpush1.msra.mxu0 0.0
        %2981 = vmatprep.subr.mxu0 0.0
        %2982 = vmatpush1.msra.mxu0 0.0
        %2983 = vmatprep.subr.mxu0 0.0
        %2984 = vmatpush1.msra.mxu0 0.0
        %2985 = vmatprep.subr.mxu0 0.0
        %2986 = vmatpush1.msra.mxu0 0.0
        %2987 = vmatprep.subr.mxu0 0.0
        %2988 = vmatpush1.msra.mxu0 0.0
        %2989 = vmatprep.subr.mxu0 0.0
        %2990 = vmatpush1.msra.mxu0 0.0
        %2991 = vmatprep.subr.mxu0 0.0
        %2992 = vmatpush1.msra.mxu0 0.0
        %2993 = vmatprep.subr.mxu0 0.0
        %2994 = vmatpush1.msra.mxu0 0.0
        %2995 = vmatprep.subr.mxu0 0.0
        %2996 = vmatpush1.msra.mxu0 0.0
        %2997 = vmatprep.subr.mxu0 0.0
        %2998 = vmatpush1.msra.mxu0 0.0
        %2999 = vmatprep.subr.mxu0 0.0
        %3000 = vmatpush1.msra.mxu0 0.0
        %3001 = vmatprep.subr.mxu0 0.0
        %3002 = vmatpush1.msra.mxu0 0.0
        %3003 = vmatprep.subr.mxu0 0.0
        %3004 = vmatpush1.msra.mxu0 0.0
        %3005 = vmatprep.subr.mxu0 0.0
        %3006 = vmatpush1.msra.mxu0 0.0
        %3007 = vmatprep.subr.mxu0 0.0
        %3008 = vmatpush1.msra.mxu0 0.0
        %3009 = vmatprep.subr.mxu0 0.0
        %3010 = vmatpush1.msra.mxu0 0.0
        %3011 = vmatprep.subr.mxu0 0.0
        %3012 = vmatpush1.msra.mxu0 0.0
        %3013 = vmatprep.subr.mxu0 0.0
        %3014 = vmatpush1.msra.mxu0 0.0
        %3015 = vmatprep.subr.mxu0 0.0
        %3016 = vmatpush1.msra.mxu0 0.0
        %3017 = vmatprep.subr.mxu0 0.0
        %3018 = vmatpush1.msra.mxu0 0.0
        %3019 = vmatprep.subr.mxu0 0.0
        %3020 = vmatpush1.msra.mxu0 0.0
        %3021 = vmatprep.subr.mxu0 0.0
        %3022 = vmatpush1.msra.mxu0 0.0
        %3023 = vmatprep.subr.mxu0 0.0
        %3024 = vmatpush1.msra.mxu0 0.0
        %3025 = vmatprep.subr.mxu0 0.0
        %3026 = vmatpush1.msra.mxu0 0.0
        %3027 = vmatprep.subr.mxu0 0.0
        %3028 = vmatpush1.msra.mxu0 0.0
        %3029 = vmatprep.subr.mxu0 0.0
        %3030 = vmatpush1.msra.mxu0 0.0
        %3031 = vmatprep.subr.mxu0 0.0
        %3032 = vmatpush1.msra.mxu0 0.0
        %3033 = vmatprep.mubr.f32.mxu0 0.0
        %3034 = vmatmul.mubr.f32.gmra.mrb[0].mxu0 %v2964
        %v3035 = vpop.f32.mrb[0].mxu0
        %v3036 = vadd.f32 0.0, %v3035
        %v3037 = vpop.f32.mrb[0].mxu0
        %3038 = vmatprep.mubr.f32.mxu0 0.0
        %3039 = vmatmul.mubr.f32.gmra.mrb[0].mxu0 %v2967
        %v3040 = vpop.f32.mrb[0].mxu0
        %v3041 = vadd.f32 0.0, %v3040
        %v3042 = vpop.f32.mrb[0].mxu0
        %3043 = vdwg.mxu0
        %3046 = vrot.lane.b32.xlu0 %v2628, 8
        %v3047 = vpop.permute.xlu0 %3046
        %3048 = vrot.lane.b32.xlu0 %v2633, 8
        %v3049 = vpop.permute.xlu0 %3048
        %3054 = vrot.lane.b32.xlu0 %v2832, 16
        %v3055 = vpop.permute.xlu0 %3054
        %3056 = vrot.lane.b32.xlu0 %v2837, 16
        %v3057 = vpop.permute.xlu0 %3056
        %3062 = vrot.lane.b32.xlu0 %v3036, 24
        %v3063 = vpop.permute.xlu0 %3062
        %3064 = vrot.lane.b32.xlu0 %v3041, 24
        %v3065 = vpop.permute.xlu0 %3064
        %v3068 = vsel %vm761, %v2424, %v3047
        %v3069 = vsel %vm761, %v2429, %v3049
        %v3070 = vsel %vm626, %v3068, %v3055
        %v3071 = vsel %vm626, %v3069, %v3057
        %v3072 = vsel %vm1606, %v3070, %v3063
        %v3073 = vsel %vm1606, %v3071, %v3065
        %v3074 = vlaneseq
        %v3075 = vshrl.u32 %v3074, 7
        %v3076 = vsub.s32 4, %v3075
        %v3077 = vrot.slane %v1990, %v3076
        %v3079 = vsel %vm510, %v3072, 0
        %v3082 = vsel %vm510, %v3073, 0
        %3084 = vmatprep.subr.mxu0 0.0
        %3085 = vmatpush1.msra.mxu0 %v1973
        %3086 = vmatprep.subr.mxu0 0.0
        %3087 = vmatpush1.msra.mxu0 %v1975
        %3088 = vmatprep.subr.mxu0 0.0
        %3089 = vmatpush1.msra.mxu0 %v1977
        %3090 = vmatprep.subr.mxu0 0.0
        %3091 = vmatpush1.msra.mxu0 %v1979
        %3092 = vmatprep.subr.mxu0 0.0
        %3093 = vmatpush1.msra.mxu0 0.0
        %3094 = vmatprep.subr.mxu0 0.0
        %3095 = vmatpush1.msra.mxu0 0.0
        %3096 = vmatprep.subr.mxu0 0.0
        %3097 = vmatpush1.msra.mxu0 0.0
        %3098 = vmatprep.subr.mxu0 0.0
        %3099 = vmatpush1.msra.mxu0 0.0
        %3100 = vmatprep.subr.mxu0 0.0
        %3101 = vmatpush1.msra.mxu0 0.0
        %3102 = vmatprep.subr.mxu0 0.0
        %3103 = vmatpush1.msra.mxu0 0.0
        %3104 = vmatprep.subr.mxu0 0.0
        %3105 = vmatpush1.msra.mxu0 0.0
        %3106 = vmatprep.subr.mxu0 0.0
        %3107 = vmatpush1.msra.mxu0 0.0
        %3108 = vmatprep.subr.mxu0 0.0
        %3109 = vmatpush1.msra.mxu0 0.0
        %3110 = vmatprep.subr.mxu0 0.0
        %3111 = vmatpush1.msra.mxu0 0.0
        %3112 = vmatprep.subr.mxu0 0.0
        %3113 = vmatpush1.msra.mxu0 0.0
        %3114 = vmatprep.subr.mxu0 0.0
        %3115 = vmatpush1.msra.mxu0 0.0
        %3116 = vmatprep.subr.mxu0 0.0
        %3117 = vmatpush1.msra.mxu0 0.0
        %3118 = vmatprep.subr.mxu0 0.0
        %3119 = vmatpush1.msra.mxu0 0.0
        %3120 = vmatprep.subr.mxu0 0.0
        %3121 = vmatpush1.msra.mxu0 0.0
        %3122 = vmatprep.subr.mxu0 0.0
        %3123 = vmatpush1.msra.mxu0 0.0
        %3124 = vmatprep.subr.mxu0 0.0
        %3125 = vmatpush1.msra.mxu0 0.0
        %3126 = vmatprep.subr.mxu0 0.0
        %3127 = vmatpush1.msra.mxu0 0.0
        %3128 = vmatprep.subr.mxu0 0.0
        %3129 = vmatpush1.msra.mxu0 0.0
        %3130 = vmatprep.subr.mxu0 0.0
        %3131 = vmatpush1.msra.mxu0 0.0
        %3132 = vmatprep.subr.mxu0 0.0
        %3133 = vmatpush1.msra.mxu0 0.0
        %3134 = vmatprep.subr.mxu0 0.0
        %3135 = vmatpush1.msra.mxu0 0.0
        %3136 = vmatprep.subr.mxu0 0.0
        %3137 = vmatpush1.msra.mxu0 0.0
        %3138 = vmatprep.subr.mxu0 0.0
        %3139 = vmatpush1.msra.mxu0 0.0
        %3140 = vmatprep.subr.mxu0 0.0
        %3141 = vmatpush1.msra.mxu0 0.0
        %3142 = vmatprep.subr.mxu0 0.0
        %3143 = vmatpush1.msra.mxu0 0.0
        %3144 = vmatprep.subr.mxu0 0.0
        %3145 = vmatpush1.msra.mxu0 0.0
        %3146 = vmatprep.subr.mxu0 0.0
        %3147 = vmatpush1.msra.mxu0 0.0
        %3148 = vmatprep.mubr.f32.mxu0 0.0
        %3149 = vmatmul.mubr.f32.gmra.mrb[0].mxu0 %v3079
        %v3150 = vpop.f32.mrb[0].mxu0
        %v3151 = vadd.f32 %v3077, %v3150
        %v3152 = vpop.f32.mrb[0].mxu0
        %3153 = vmatprep.mubr.f32.mxu0 0.0
        %3154 = vmatmul.mubr.f32.gmra.mrb[0].mxu0 %v3082
        %v3155 = vpop.f32.mrb[0].mxu0
        %v3156 = vadd.f32 %v3077, %v3155
        %v3157 = vpop.f32.mrb[0].mxu0
        %3158 = vdwg.mxu0
        %v3159 = vadd.f32 %v1969, %v3151
        %v3160 = vadd.f32 %v1970, %v3156
        %v3161 = vsel %vm510, %v3159, 0.0
        %3162 = vadd.xlane.f32.xlu0 %v3161
        %v3163 = vpop.xlane.xlu0 %3162
        %v3164 = vsel %vm510, %v3160, 0.0
        %3165 = vadd.xlane.f32.xlu0 %v3164
        %v3166 = vpop.xlane.xlu0 %3165
        %v3167 = vmul.f32 %v3163, %v716
        %v3168 = vmul.f32 %v3166, %v716
        %v3169 = vsub.f32 %v3159, %v3167
        %v3170 = vsub.f32 %v3160, %v3168
        %v3171 = vmul.f32 %v3169, %v3169
        %v3172 = vmul.f32 %v3170, %v3170
        %v3173 = vsel %vm510, %v3171, 0.0
        %3174 = vadd.xlane.f32.xlu0 %v3173
        %v3175 = vpop.xlane.xlu0 %3174
        %v3176 = vsel %vm510, %v3172, 0.0
        %3177 = vadd.xlane.f32.xlu0 %v3176
        %v3178 = vpop.xlane.xlu0 %3177
        %v3179 = vmul.f32 %v3175, %v716
        %v3180 = vmul.f32 %v3178, %v716
        %v3181 = vadd.f32 %v3179, 1e-05
        %v3182 = vadd.f32 %v3180, 1e-05
        %v3183 = vrsqrt.pop %v3181
        %v3184 = vrsqrt.pop %v3182
        %v3185 = vmul.f32 %v3169, %v3183
        %v3186 = vmul.f32 %v3170, %v3184
        %v3187 = vlaneseq
        %v3188 = vshrl.u32 %v3187, 7
        %v3189 = vsub.s32 2, %v3188
        %v3190 = vrot.slane %v1991, %v3189
        %v3191 = vmul.f32 %v3185, %v3190
        %v3192 = vmul.f32 %v3186, %v3190
        %v3193 = vlaneseq
        %v3194 = vshrl.u32 %v3193, 7
        %v3195 = vsub.s32 3, %v3194
        %v3196 = vrot.slane %v1991, %v3195
        %v3197 = vadd.f32 %v3191, %v3196
        %v3198 = vadd.f32 %v3192, %v3196
        %v3199 = vadd.f32 %v2220, %v3197
        %v3200 = vadd.f32 %v2221, %v3198
        %v3202 = vrot.slane %v1990, 1
        %3203 = vrot.lane.b32.xlu0 %v3202, 32
        %v3204 = vpop.permute.xlu0 %3203
        %v3206 = vsel %vm510, %v1990, %v3204
        %v3207 = vlaneseq
        %v3208 = vshrl.u32 %v3207, 7
        %v3209 = vsub.s32 6, %v3208
        %v3210 = vrot.slane %v3206, %v3209
        %3215 = vrot.lane.b32.xlu0 %v1973, 96
        %v3216 = vpop.permute.xlu0 %3215
        %3217 = vrot.lane.b32.xlu0 %v1975, 96
        %v3218 = vpop.permute.xlu0 %3217
        %3219 = vrot.lane.b32.xlu0 %v1977, 96
        %v3220 = vpop.permute.xlu0 %3219
        %3221 = vrot.lane.b32.xlu0 %v1979, 96
        %v3222 = vpop.permute.xlu0 %3221
        %v3228 = vsel %vm510, %v3199, 0
        %v3231 = vsel %vm510, %v3200, 0
        %3233 = vmatprep.subr.mxu0 0.0
        %3234 = vmatpush1.msra.mxu0 %v3216
        %3235 = vmatprep.subr.mxu0 0.0
        %3236 = vmatpush1.msra.mxu0 %v3218
        %3237 = vmatprep.subr.mxu0 0.0
        %3238 = vmatpush1.msra.mxu0 %v3220
        %3239 = vmatprep.subr.mxu0 0.0
        %3240 = vmatpush1.msra.mxu0 %v3222
        %3241 = vmatprep.subr.mxu0 0.0
        %3242 = vmatpush1.msra.mxu0 0.0
        %3243 = vmatprep.subr.mxu0 0.0
        %3244 = vmatpush1.msra.mxu0 0.0
        %3245 = vmatprep.subr.mxu0 0.0
        %3246 = vmatpush1.msra.mxu0 0.0
        %3247 = vmatprep.subr.mxu0 0.0
        %3248 = vmatpush1.msra.mxu0 0.0
        %3249 = vmatprep.subr.mxu0 0.0
        %3250 = vmatpush1.msra.mxu0 0.0
        %3251 = vmatprep.subr.mxu0 0.0
        %3252 = vmatpush1.msra.mxu0 0.0
        %3253 = vmatprep.subr.mxu0 0.0
        %3254 = vmatpush1.msra.mxu0 0.0
        %3255 = vmatprep.subr.mxu0 0.0
        %3256 = vmatpush1.msra.mxu0 0.0
        %3257 = vmatprep.subr.mxu0 0.0
        %3258 = vmatpush1.msra.mxu0 0.0
        %3259 = vmatprep.subr.mxu0 0.0
        %3260 = vmatpush1.msra.mxu0 0.0
        %3261 = vmatprep.subr.mxu0 0.0
        %3262 = vmatpush1.msra.mxu0 0.0
        %3263 = vmatprep.subr.mxu0 0.0
        %3264 = vmatpush1.msra.mxu0 0.0
        %3265 = vmatprep.subr.mxu0 0.0
        %3266 = vmatpush1.msra.mxu0 0.0
        %3267 = vmatprep.subr.mxu0 0.0
        %3268 = vmatpush1.msra.mxu0 0.0
        %3269 = vmatprep.subr.mxu0 0.0
        %3270 = vmatpush1.msra.mxu0 0.0
        %3271 = vmatprep.subr.mxu0 0.0
        %3272 = vmatpush1.msra.mxu0 0.0
        %3273 = vmatprep.subr.mxu0 0.0
        %3274 = vmatpush1.msra.mxu0 0.0
        %3275 = vmatprep.subr.mxu0 0.0
        %3276 = vmatpush1.msra.mxu0 0.0
        %3277 = vmatprep.subr.mxu0 0.0
        %3278 = vmatpush1.msra.mxu0 0.0
        %3279 = vmatprep.subr.mxu0 0.0
        %3280 = vmatpush1.msra.mxu0 0.0
        %3281 = vmatprep.subr.mxu0 0.0
        %3282 = vmatpush1.msra.mxu0 0.0
        %3283 = vmatprep.subr.mxu0 0.0
        %3284 = vmatpush1.msra.mxu0 0.0
        %3285 = vmatprep.subr.mxu0 0.0
        %3286 = vmatpush1.msra.mxu0 0.0
        %3287 = vmatprep.subr.mxu0 0.0
        %3288 = vmatpush1.msra.mxu0 0.0
        %3289 = vmatprep.subr.mxu0 0.0
        %3290 = vmatpush1.msra.mxu0 0.0
        %3291 = vmatprep.subr.mxu0 0.0
        %3292 = vmatpush1.msra.mxu0 0.0
        %3293 = vmatprep.subr.mxu0 0.0
        %3294 = vmatpush1.msra.mxu0 0.0
        %3295 = vmatprep.subr.mxu0 0.0
        %3296 = vmatpush1.msra.mxu0 0.0
        %3297 = vmatprep.mubr.f32.mxu0 0.0
        %3298 = vmatmul.mubr.f32.gmra.mrb[0].mxu0 %v3228
        %v3299 = vpop.f32.mrb[0].mxu0
        %v3300 = vadd.f32 %v3210, %v3299
        %v3301 = vpop.f32.mrb[0].mxu0
        %3302 = vmatprep.mubr.f32.mxu0 0.0
        %3303 = vmatmul.mubr.f32.gmra.mrb[0].mxu0 %v3231
        %v3304 = vpop.f32.mrb[0].mxu0
        %v3305 = vadd.f32 %v3210, %v3304
        %v3306 = vpop.f32.mrb[0].mxu0
        %3307 = vdwg.mxu0
        %v3308 = vmax.f32 %v3300, 0.0
        %v3309 = vmax.f32 %v3305, 0.0
        %v3310 = vlaneseq
        %v3311 = vshrl.u32 %v3310, 7
        %v3312 = vsub.s32 5, %v3311
        %v3313 = vrot.slane %v1990, %v3312
        %v3315 = vsel %vm1849, %v3308, 0
        %v3318 = vsel %vm1849, %v3309, 0
        %3320 = vmatprep.subr.mxu0 0.0
        %3321 = vmatpush1.msra.mxu0 %v1981
        %3322 = vmatprep.subr.mxu0 0.0
        %3323 = vmatpush1.msra.mxu0 %v1982
        %3324 = vmatprep.subr.mxu0 0.0
        %3325 = vmatpush1.msra.mxu0 %v1983
        %3326 = vmatprep.subr.mxu0 0.0
        %3327 = vmatpush1.msra.mxu0 %v1984
        %3328 = vmatprep.subr.mxu0 0.0
        %3329 = vmatpush1.msra.mxu0 %v1985
        %3330 = vmatprep.subr.mxu0 0.0
        %3331 = vmatpush1.msra.mxu0 %v1986
        %3332 = vmatprep.subr.mxu0 0.0
        %3333 = vmatpush1.msra.mxu0 %v1987
        %3334 = vmatprep.subr.mxu0 0.0
        %3335 = vmatpush1.msra.mxu0 %v1988
        %3336 = vmatprep.subr.mxu0 0.0
        %3337 = vmatpush1.msra.mxu0 0.0
        %3338 = vmatprep.subr.mxu0 0.0
        %3339 = vmatpush1.msra.mxu0 0.0
        %3340 = vmatprep.subr.mxu0 0.0
        %3341 = vmatpush1.msra.mxu0 0.0
        %3342 = vmatprep.subr.mxu0 0.0
        %3343 = vmatpush1.msra.mxu0 0.0
        %3344 = vmatprep.subr.mxu0 0.0
        %3345 = vmatpush1.msra.mxu0 0.0
        %3346 = vmatprep.subr.mxu0 0.0
        %3347 = vmatpush1.msra.mxu0 0.0
        %3348 = vmatprep.subr.mxu0 0.0
        %3349 = vmatpush1.msra.mxu0 0.0
        %3350 = vmatprep.subr.mxu0 0.0
        %3351 = vmatpush1.msra.mxu0 0.0
        %3352 = vmatprep.subr.mxu0 0.0
        %3353 = vmatpush1.msra.mxu0 0.0
        %3354 = vmatprep.subr.mxu0 0.0
        %3355 = vmatpush1.msra.mxu0 0.0
        %3356 = vmatprep.subr.mxu0 0.0
        %3357 = vmatpush1.msra.mxu0 0.0
        %3358 = vmatprep.subr.mxu0 0.0
        %3359 = vmatpush1.msra.mxu0 0.0
        %3360 = vmatprep.subr.mxu0 0.0
        %3361 = vmatpush1.msra.mxu0 0.0
        %3362 = vmatprep.subr.mxu0 0.0
        %3363 = vmatpush1.msra.mxu0 0.0
        %3364 = vmatprep.subr.mxu0 0.0
        %3365 = vmatpush1.msra.mxu0 0.0
        %3366 = vmatprep.subr.mxu0 0.0
        %3367 = vmatpush1.msra.mxu0 0.0
        %3368 = vmatprep.subr.mxu0 0.0
        %3369 = vmatpush1.msra.mxu0 0.0
        %3370 = vmatprep.subr.mxu0 0.0
        %3371 = vmatpush1.msra.mxu0 0.0
        %3372 = vmatprep.subr.mxu0 0.0
        %3373 = vmatpush1.msra.mxu0 0.0
        %3374 = vmatprep.subr.mxu0 0.0
        %3375 = vmatpush1.msra.mxu0 0.0
        %3376 = vmatprep.subr.mxu0 0.0
        %3377 = vmatpush1.msra.mxu0 0.0
        %3378 = vmatprep.subr.mxu0 0.0
        %3379 = vmatpush1.msra.mxu0 0.0
        %3380 = vmatprep.subr.mxu0 0.0
        %3381 = vmatpush1.msra.mxu0 0.0
        %3382 = vmatprep.subr.mxu0 0.0
        %3383 = vmatpush1.msra.mxu0 0.0
        %3384 = vmatprep.mubr.f32.mxu0 0.0
        %3385 = vmatmul.mubr.f32.gmra.mrb[0].mxu0 %v3315
        %v3386 = vpop.f32.mrb[0].mxu0
        %v3387 = vadd.f32 %v3313, %v3386
        %v3388 = vpop.f32.mrb[0].mxu0
        %3389 = vmatprep.mubr.f32.mxu0 0.0
        %3390 = vmatmul.mubr.f32.gmra.mrb[0].mxu0 %v3318
        %v3391 = vpop.f32.mrb[0].mxu0
        %v3392 = vadd.f32 %v3313, %v3391
        %v3393 = vpop.f32.mrb[0].mxu0
        %3394 = vdwg.mxu0
        %v3395 = vadd.f32 %v3199, %v3387
        %v3396 = vadd.f32 %v3200, %v3392
        %v3397 = vsel %vm510, %v3395, 0.0
        %3398 = vadd.xlane.f32.xlu0 %v3397
        %v3399 = vpop.xlane.xlu0 %3398
        %v3400 = vsel %vm510, %v3396, 0.0
        %3401 = vadd.xlane.f32.xlu0 %v3400
        %v3402 = vpop.xlane.xlu0 %3401
        %v3403 = vmul.f32 %v3399, %v716
        %v3404 = vmul.f32 %v3402, %v716
        %v3405 = vsub.f32 %v3395, %v3403
        %v3406 = vsub.f32 %v3396, %v3404
        %v3407 = vmul.f32 %v3405, %v3405
        %v3408 = vmul.f32 %v3406, %v3406
        %v3409 = vsel %vm510, %v3407, 0.0
        %3410 = vadd.xlane.f32.xlu0 %v3409
        %v3411 = vpop.xlane.xlu0 %3410
        %v3412 = vsel %vm510, %v3408, 0.0
        %3413 = vadd.xlane.f32.xlu0 %v3412
        %v3414 = vpop.xlane.xlu0 %3413
        %v3415 = vmul.f32 %v3411, %v716
        %v3416 = vmul.f32 %v3414, %v716
        %v3417 = vadd.f32 %v3415, 1e-05
        %v3418 = vadd.f32 %v3416, 1e-05
        %v3419 = vrsqrt.pop %v3417
        %v3420 = vrsqrt.pop %v3418
        %v3421 = vmul.f32 %v3405, %v3419
        %v3422 = vmul.f32 %v3406, %v3420
        %v3423 = vlaneseq
        %v3424 = vshrl.u32 %v3423, 7
        %v3425 = vsub.s32 4, %v3424
        %v3426 = vrot.slane %v1991, %v3425
        %v3427 = vmul.f32 %v3421, %v3426
        %v3428 = vmul.f32 %v3422, %v3426
        %v3429 = vlaneseq
        %v3430 = vshrl.u32 %v3429, 7
        %v3431 = vsub.s32 5, %v3430
        %v3432 = vrot.slane %v1991, %v3431
        %v3433 = vadd.f32 %v3427, %v3432
        %v3434 = vadd.f32 %v3428, %v3432
        %3435 = vxpose.xlu0.b32.start [1/16] %v393, 128
        %3436 = vxpose.xlu0.b32.cont [2/16] 0.0, 128
        %3437 = vxpose.xlu0.b32.cont [3/16] 0.0, 128
        %3438 = vxpose.xlu0.b32.cont [4/16] 0.0, 128
        %3439 = vxpose.xlu0.b32.cont [5/16] 0.0, 128
        %3440 = vxpose.xlu0.b32.cont [6/16] 0.0, 128
        %3441 = vxpose.xlu0.b32.cont [7/16] 0.0, 128
        %3442 = vxpose.xlu0.b32.cont [8/16] 0.0, 128
        %3443 = vxpose.xlu0.b32.cont [9/16] 0.0, 128
        %3444 = vxpose.xlu0.b32.cont [10/16] 0.0, 128
        %3445 = vxpose.xlu0.b32.cont [11/16] 0.0, 128
        %3446 = vxpose.xlu0.b32.cont [12/16] 0.0, 128
        %3447 = vxpose.xlu0.b32.cont [13/16] 0.0, 128
        %3448 = vxpose.xlu0.b32.cont [14/16] 0.0, 128
        %3449 = vxpose.xlu0.b32.cont [15/16] 0.0, 128
        %3450 = vxpose.xlu0.b32.end [16/16] 0.0, 128
        %v3451 = vpop.trf.xlu0
        %v3452 = vpop.trf.xlu0
        %v3453 = vpop.trf.xlu0
        %v3454 = vpop.trf.xlu0
        %v3455 = vpop.trf.xlu0
        %v3456 = vpop.trf.xlu0
        %v3457 = vpop.trf.xlu0
        %v3458 = vpop.trf.xlu0
        %v3459 = vpop.trf.xlu0
        %v3460 = vpop.trf.xlu0
        %v3461 = vpop.trf.xlu0
        %v3462 = vpop.trf.xlu0
        %v3463 = vpop.trf.xlu0
        %v3464 = vpop.trf.xlu0
        %v3465 = vpop.trf.xlu0
        %v3466 = vpop.trf.xlu0
        %vm3467 = vcmask 7168
        %v3468 = vsel %vm3467, %v3451, 0.0
        %v3469 = vsel %vm3467, %v3452, 0.0
        %v3470 = vadd.f32 %v3468, %v3469
        %v3471 = vrot.slane %v3470, 4
        %v3472 = vadd.f32 %v3470, %v3471
        %v3473 = vrot.slane %v3472, 2
        %v3474 = vadd.f32 %v3472, %v3473
        %v3475 = vrot.slane %v3474, 1
        %v3476 = vadd.f32 %v3474, %v3475
        %v3477 = vmax.f32 %v3476, 1.0
        %3479 = vset.pattern.permute.xlu0 0
        %3480 = vperm.xlu0 %3479, %v3451
        %v3481 = vpop.permute.xlu0 %3480
        %3484 = vset.pattern.permute.xlu0 0
        %3485 = vperm.xlu0 %3484, %v3452
        %v3486 = vpop.permute.xlu0 %3485
        %v3488 = vmul.f32 %v3433, %v3481
        %v3489 = vmul.f32 %v3434, %v3486
        %v3490 = vsel %vm510, %v3488, 0.0
        %v3491 = vsel %vm510, %v3489, 0.0
        %v3492 = vadd.f32 %v3490, %v3491
        %v3493 = vrot.slane %v3492, 4
        %v3494 = vadd.f32 %v3492, %v3493
        %v3495 = vrot.slane %v3494, 2
        %v3496 = vadd.f32 %v3494, %v3495
        %v3497 = vrot.slane %v3496, 1
        %v3498 = vadd.f32 %v3496, %v3497
        %3500 = vset.pattern.permute.xlu0 0
        %3501 = vperm.xlu0 %3500, %v3477
        %v3502 = vpop.permute.xlu0 %3501
        %v3504 = vrcp.pop %v3502
        %v3505 = vmul.f32 %v3498, %v3504
        %v3506 = vld [vmem:[%s8] sm:$0xff]
        %v3507 = vld [vmem:[%s8 + $0x8] sm:$0xff]
        %v3508 = vld [vmem:[%s8 + $0x10] sm:$0xff]
        %v3509 = vld [vmem:[%s8 + $0x18] sm:$0xff]
        %v3510 = vld [vmem:[%s9] sm:$0x1]
        %v3512 = vsel %vm510, %v3505, 0
        %3514 = vmatprep.subr.mxu0 0.0
        %3515 = vmatpush1.msra.mxu0 %v3506
        %3516 = vmatprep.subr.mxu0 0.0
        %3517 = vmatpush1.msra.mxu0 %v3507
        %3518 = vmatprep.subr.mxu0 0.0
        %3519 = vmatpush1.msra.mxu0 %v3508
        %3520 = vmatprep.subr.mxu0 0.0
        %3521 = vmatpush1.msra.mxu0 %v3509
        %3522 = vmatprep.subr.mxu0 0.0
        %3523 = vmatpush1.msra.mxu0 0.0
        %3524 = vmatprep.subr.mxu0 0.0
        %3525 = vmatpush1.msra.mxu0 0.0
        %3526 = vmatprep.subr.mxu0 0.0
        %3527 = vmatpush1.msra.mxu0 0.0
        %3528 = vmatprep.subr.mxu0 0.0
        %3529 = vmatpush1.msra.mxu0 0.0
        %3530 = vmatprep.subr.mxu0 0.0
        %3531 = vmatpush1.msra.mxu0 0.0
        %3532 = vmatprep.subr.mxu0 0.0
        %3533 = vmatpush1.msra.mxu0 0.0
        %3534 = vmatprep.subr.mxu0 0.0
        %3535 = vmatpush1.msra.mxu0 0.0
        %3536 = vmatprep.subr.mxu0 0.0
        %3537 = vmatpush1.msra.mxu0 0.0
        %3538 = vmatprep.subr.mxu0 0.0
        %3539 = vmatpush1.msra.mxu0 0.0
        %3540 = vmatprep.subr.mxu0 0.0
        %3541 = vmatpush1.msra.mxu0 0.0
        %3542 = vmatprep.subr.mxu0 0.0
        %3543 = vmatpush1.msra.mxu0 0.0
        %3544 = vmatprep.subr.mxu0 0.0
        %3545 = vmatpush1.msra.mxu0 0.0
        %3546 = vmatprep.subr.mxu0 0.0
        %3547 = vmatpush1.msra.mxu0 0.0
        %3548 = vmatprep.subr.mxu0 0.0
        %3549 = vmatpush1.msra.mxu0 0.0
        %3550 = vmatprep.subr.mxu0 0.0
        %3551 = vmatpush1.msra.mxu0 0.0
        %3552 = vmatprep.subr.mxu0 0.0
        %3553 = vmatpush1.msra.mxu0 0.0
        %3554 = vmatprep.subr.mxu0 0.0
        %3555 = vmatpush1.msra.mxu0 0.0
        %3556 = vmatprep.subr.mxu0 0.0
        %3557 = vmatpush1.msra.mxu0 0.0
        %3558 = vmatprep.subr.mxu0 0.0
        %3559 = vmatpush1.msra.mxu0 0.0
        %3560 = vmatprep.subr.mxu0 0.0
        %3561 = vmatpush1.msra.mxu0 0.0
        %3562 = vmatprep.subr.mxu0 0.0
        %3563 = vmatpush1.msra.mxu0 0.0
        %3564 = vmatprep.subr.mxu0 0.0
        %3565 = vmatpush1.msra.mxu0 0.0
        %3566 = vmatprep.subr.mxu0 0.0
        %3567 = vmatpush1.msra.mxu0 0.0
        %3568 = vmatprep.subr.mxu0 0.0
        %3569 = vmatpush1.msra.mxu0 0.0
        %3570 = vmatprep.subr.mxu0 0.0
        %3571 = vmatpush1.msra.mxu0 0.0
        %3572 = vmatprep.subr.mxu0 0.0
        %3573 = vmatpush1.msra.mxu0 0.0
        %3574 = vmatprep.subr.mxu0 0.0
        %3575 = vmatpush1.msra.mxu0 0.0
        %3576 = vmatprep.subr.mxu0 0.0
        %3577 = vmatpush1.msra.mxu0 0.0
        %3578 = vmatprep.mubr.f32.mxu0 0.0
        %3579 = vmatmul.mubr.f32.gmra.mrb[0].mxu0 %v3512
        %v3580 = vpop.f32.mrb[0].mxu0
        %v3581 = vadd.f32 %v3510, %v3580
        %v3582 = vpop.f32.mrb[0].mxu0
        %3583 = vdwg.mxu0
        %vm3584 = vcmask 16384
        %3585 = vst.msk [vmem:[%s377] sm:$0x1] %vm3584, %v3581
        %s3586 = sand.u32 %s257, 1
        %s3587 = scalar_lea.sflag [#allocation3], %s3586
        %s3588 = sand.u32 %s257, 1
        %s3589 = scalar_lea.vmem [#allocation2], %s3588
        // Predicated region
        $region61: #{tpu_custom_call.1} parent=59 // pred_check
          %p3590 = pneg %p267
        $region62: #{tpu_custom_call.1} parent=59 // pred_check_branch
          %3592 = sbr.rel (%p3590) target = $region64
        $region63: #{tpu_custom_call.1} parent=59 // pred_region
          %s3594 = ssub.s32 16, 16
          %3595 = vsyncadd %s3587, %s3594
          %s3596 = smul.addr %s24, 16
          %s3597 = scalar_lea.hbm %s10, %s3596
          %s3599 = sshll.u32 %s3589, 4
          %s3600 = int_to_ptr.vmem [resolvable:$true] %s3599
          %3602 = dma.vmem_to_hbm [thread:$0]  %s3600, 16, %s3597, %s3587
        $region64: #{tpu_custom_call.1} parent=59 // pred_fallthru
          _
      $region60: #{tpu_custom_call.1} parent=5 // pred_fallthru
        _
      %p3603 = scmp.le.s32.totalorder 2, %s19
      // Predicated region
      $region65: #{tpu_custom_call.1} parent=5 // pred_check
        %p3604 = pneg %p3603
      $region66: #{tpu_custom_call.1} parent=5 // pred_check_branch
        %3606 = sbr.rel (%p3604) target = $region68
      $region67: #{tpu_custom_call.1} parent=5 // pred_region
        %s3607 = ssub.s32 %s19, 2
        // Predicated region
        $region69: #{tpu_custom_call.1} parent=67 // pred_check
          %p3608 = pneg %p273
        $region70: #{tpu_custom_call.1} parent=67 // pred_check_branch
          %3610 = sbr.rel (%p3608) target = $region72
        $region71: #{tpu_custom_call.1} parent=67 // pred_region
          %s3611 = sand.u32 %s258, 1
          %s3612 = scalar_lea.sflag [#allocation3], %s3611
          %s3613 = sand.u32 %s258, 1
          %s3614 = scalar_lea.vmem [#allocation2], %s3613
          %3615 = dma.done %s3612, 16
        $region72: #{tpu_custom_call.1} parent=67 // pred_fallthru
          _
      $region68: #{tpu_custom_call.1} parent=5 // pred_fallthru
        _
    $region6: #{tpu_custom_call.1} parent=1 // loop_footer
      %s23 = sadd.s32 1, %s19
    $region7: #{tpu_custom_call.1} parent=1 // loop_footer_branch
      %18 = sbr.rel target = $region3
    $region8: #{tpu_custom_call.1} parent=1 // loop_exit
      _
    %3616 = vsyncpa [#allocation3], 1
    %s3617 = scalar_lea.sflag [#allocation3], 1
    %3618 = vsyncpa %s3617, 1

</llo_original>
